<compile_context>
chip_gen: v7x
topology: tpu7x:2x2x1
jax: 0.10.0
libtpu: 0.0.40
codegen_flags: <defaults>
</compile_context>

<pallas_src>
import numpy as np

import jax
import jax.numpy as jnp
from jax.experimental import pallas as pl
from jax.experimental.pallas import tpu as pltpu


# ---------------------------------------------------------------------------
# Host-side (numpy) shape-only preprocessing: conv tap-selection matrices and the
# bilinear interpolation matrix.  These encode static index patterns only and are
# baked into the program as constants; all pixel arithmetic runs inside the kernel.
# ---------------------------------------------------------------------------
def _conv_selection_matrices(hi, wi, kh, kw, stride, pad):
    """Per-tap gather matrices S_k^T: (K, Hi*Wi, Ho*Wo), 0/1 entries, padding = zero rows."""
    ho = (hi + 2 * pad - kh) // stride + 1
    wo = (wi + 2 * pad - kw) // stride + 1
    oy, ox = np.meshgrid(np.arange(ho), np.arange(wo), indexing="ij")
    mats = []
    for dh in range(kh):
        for dw in range(kw):
            r = (oy * stride + dh - pad).reshape(-1)
            c = (ox * stride + dw - pad).reshape(-1)
            valid = (r >= 0) & (r < hi) & (c >= 0) & (c < wi)
            q = np.where(valid, r * wi + c, 0)
            sel = np.zeros((ho * wo, hi * wi), np.float32)        # (Ho*Wo, Hi*Wi)
            rows = np.arange(ho * wo)[valid]
            sel[rows, q[valid]] = 1.0
            mats.append(sel.T)                                    # (Hi*Wi, Ho*Wo)
    return np.stack(mats), ho, wo


def _interp_matrix(out_size, in_size):
    # PyTorch bilinear, align_corners=False (half-pixel centers, clamp src >= 0)
    scale = in_size / out_size
    dst = np.arange(out_size, dtype=np.float64)
    src = np.maximum((dst + 0.5) * scale - 0.5, 0.0)
    i0 = np.minimum(np.floor(src).astype(np.int64), in_size - 1)
    i1 = np.minimum(i0 + 1, in_size - 1)
    frac = (src - i0).astype(np.float32)
    m = np.zeros((out_size, in_size), np.float32)
    m[np.arange(out_size), i0] += (1.0 - frac)
    m[np.arange(out_size), i1] += frac
    return m                                                      # (out, in)


def _bilinear_matrix(out_hw, in_hw):
    uh = _interp_matrix(out_hw[0], in_hw[0])                      # (Ho, Hf)
    uw = _interp_matrix(out_hw[1], in_hw[1])                      # (Wo, Wf)
    return np.kron(uh, uw).T.astype(np.float32)                   # (Hf*Wf, Ho*Wo)


# ---------------------------------------------------------------------------
# Fused kernel: one image per grid step, everything resident in VMEM.
# ---------------------------------------------------------------------------
def _segmodel_kernel(x_ref,
                     s1_ref, w1_ref, b1_ref,
                     s2_ref, w2_ref, b2_ref,
                     s3_ref, w3_ref, b3_ref,
                     wc_ref, bc_ref, up_ref,
                     o_ref):
    def conv(a, s_ref, w_ref, b_ref, relu):
        # a: (Cin, HiWi); s_ref: (K, HiWi, HoWo); w_ref: (K, Cout, Cin); b_ref: (Cout, 1)
        num_taps = s_ref.shape[0]
        cout = w_ref.shape[1]
        howo = s_ref.shape[2]
        acc = jnp.zeros((cout, howo), jnp.float32)
        for t in range(num_taps):                                 # unrolled, K = 9
            g = jnp.dot(a, s_ref[t], preferred_element_type=jnp.float32)          # (Cin, HoWo)
            acc = acc + jnp.dot(w_ref[t], g, preferred_element_type=jnp.float32)  # (Cout, HoWo)
        acc = acc + b_ref[...]
        if relu:
            acc = jnp.maximum(acc, 0.0)
        return acc

    a = x_ref[0]                                                  # (Cin, H*W)
    a = conv(a, s1_ref, w1_ref, b1_ref, relu=True)                # (8, 64)
    a = conv(a, s2_ref, w2_ref, b2_ref, relu=True)                # (16, 16)
    a = conv(a, s3_ref, w3_ref, b3_ref, relu=True)                # (32, 16)  'block3'
    z = jnp.dot(wc_ref[...], a, preferred_element_type=jnp.float32) + bc_ref[...]  # (5, 16)
    # bilinear upsample as one matmul; (num_classes, H*W) store is lane-dense (256 lanes)
    o_ref[0] = jnp.dot(z, up_ref[...],
                       preferred_element_type=jnp.float32).astype(o_ref.dtype)


# ---------------------------------------------------------------------------
# Parameters + forward
# ---------------------------------------------------------------------------
def init_params(key, in_ch=3, num_classes=5):
    ks = jax.random.split(key, 5)

    def conv_w(k, kh, kw, ci, co):
        return jax.random.normal(k, (kh, kw, ci, co), jnp.float32) * 0.1

    return {
        "b1_w": conv_w(ks[0], 3, 3, in_ch, 8),
        "b1_b": jnp.zeros((8,), jnp.float32),
        "b2_w": conv_w(ks[1], 3, 3, 8, 16),
        "b2_b": jnp.zeros((16,), jnp.float32),
        "b3_w": conv_w(ks[2], 3, 3, 16, 32),
        "b3_b": jnp.zeros((32,), jnp.float32),
        "cls_w": conv_w(ks[3], 1, 1, 32, num_classes),
        "cls_b": jax.random.normal(ks[4], (num_classes,), jnp.float32) * 0.01,
    }


@jax.jit
def seg_model_forward(params, inputs_nchw):
    n, cin, in_h, in_w = inputs_nchw.shape
    x = inputs_nchw.reshape(n, cin, in_h * in_w)                  # NCHW -> (N, C, H*W), free

    # static, shape-derived gather / interpolation matrices (numpy -> XLA constants)
    s1, fh1, fw1 = _conv_selection_matrices(in_h, in_w, 3, 3, 2, 1)
    s2, fh2, fw2 = _conv_selection_matrices(fh1, fw1, 3, 3, 2, 1)
    s3, fh3, fw3 = _conv_selection_matrices(fh2, fw2, 3, 3, 1, 1)
    up = _bilinear_matrix((in_h, in_w), (fh3, fw3))               # (fh3*fw3, H*W)

    def taps_t(w):                                                # (kh,kw,ci,co) -> (K, co, ci)
        kh, kw, ci, co = w.shape
        return jnp.transpose(w.reshape(kh * kw, ci, co), (0, 2, 1))

    w1t, b1 = taps_t(params["b1_w"]), params["b1_b"].reshape(-1, 1)
    w2t, b2 = taps_t(params["b2_w"]), params["b2_b"].reshape(-1, 1)
    w3t, b3 = taps_t(params["b3_w"]), params["b3_b"].reshape(-1, 1)
    wct = jnp.transpose(params["cls_w"][0, 0])                    # (num_classes, 32)
    bct = params["cls_b"].reshape(-1, 1)
    num_classes = wct.shape[0]

    def full(arr):
        nd = arr.ndim
        return pl.BlockSpec(arr.shape, lambda i, _nd=nd: (0,) * _nd)

    # rough per-call cost (advisory, helps XLA schedule around the custom call)
    flops = 0
    for (ci, co, hiwi, howo) in ((cin, 8, in_h * in_w, fh1 * fw1),
                                 (8, 16, fh1 * fw1, fh2 * fw2),
                                 (16, 32, fh2 * fw2, fh3 * fw3)):
        flops += 9 * (2 * ci * hiwi * howo + 2 * co * ci * howo)
    flops += 2 * num_classes * 32 * (fh3 * fw3) + 2 * num_classes * (fh3 * fw3) * (in_h * in_w)
    flops *= n
    const_bytes = 4 * (s1.size + s2.size + s3.size + up.size)
    io_bytes = 4 * (x.size + n * num_classes * in_h * in_w)

    out = pl.pallas_call(
        _segmodel_kernel,
        out_shape=jax.ShapeDtypeStruct((n, num_classes, in_h * in_w), jnp.float32),
        grid=(n,),
        in_specs=[
            pl.BlockSpec((1, cin, in_h * in_w), lambda i: (i, 0, 0)),
            full(s1), full(w1t), full(b1),
            full(s2), full(w2t), full(b2),
            full(s3), full(w3t), full(b3),
            full(wct), full(bct), full(up),
        ],
        out_specs=pl.BlockSpec((1, num_classes, in_h * in_w), lambda i: (i, 0, 0)),
        compiler_params=pltpu.CompilerParams(
            dimension_semantics=("parallel",)),
        cost_estimate=pl.CostEstimate(flops=int(flops), transcendentals=0,
                                      bytes_accessed=int(const_bytes + io_bytes)),
    )(x, s1, w1t, b1, s2, w2t, b2, s3, w3t, b3, wct, bct, up)

    return out.reshape(n, num_classes, in_h, in_w)                # NCHW, matches F.interpolate


# ---------------------------------------------------------------------------
# Pure-JAX reference (lax.conv) for a numerical sanity check.
# ---------------------------------------------------------------------------
def _reference_forward(params, inputs_nchw):
    def conv(x, w, b, stride, pad, relu):
        w_oihw = jnp.transpose(w, (3, 2, 0, 1))
        y = jax.lax.conv_general_dilated(
            x, w_oihw, window_strides=(stride, stride),
            padding=((pad, pad), (pad, pad)),
            dimension_numbers=("NCHW", "OIHW", "NCHW"))
        y = y + b.reshape(1, -1, 1, 1)
        return jnp.maximum(y, 0.0) if relu else y

    in_h, in_w = inputs_nchw.shape[-2:]
    x = conv(inputs_nchw, params["b1_w"], params["b1_b"], 2, 1, True)
    x = conv(x, params["b2_w"], params["b2_b"], 2, 1, True)
    x = conv(x, params["b3_w"], params["b3_b"], 1, 1, True)
    x = conv(x, params["cls_w"], params["cls_b"], 1, 0, False)
    uh = _interp_matrix(in_h, x.shape[2])
    uw = _interp_matrix(in_w, x.shape[3])
    t = jnp.einsum("oi,ncix->ncox", uh, x)
    return jnp.einsum("px,ncox->ncop", uw, t)


if __name__ == "__main__":
    key = jax.random.PRNGKey(0)
    k_in, k_par = jax.random.split(key)
    inputs = jax.random.normal(k_in, (2, 3, 16, 16), jnp.float32)   # NCHW
    params = init_params(k_par, in_ch=3, num_classes=5)

    out = seg_model_forward(params, inputs)
    out = jax.block_until_ready(out)

    assert out.shape == (2, 5, 16, 16), out.shape
    assert bool(jnp.all(jnp.isfinite(out)))

    ref = _reference_forward(params, inputs)
    assert bool(jnp.allclose(out, ref, atol=1e-4, rtol=1e-4))

    print("KERNEL_OK")
</pallas_src>

<mosaic_0001>
module attributes {stable_mosaic.version = 11 : i64} {
  func.func @_segmodel_kernel(%arg0: i32, %arg1: memref<1x3x256xf32, #tpu.memory_space<vmem>>, %arg2: memref<9x256x64xf32, #tpu.memory_space<vmem>>, %arg3: memref<9x8x3xf32, #tpu.memory_space<vmem>>, %arg4: memref<8x1xf32, #tpu.memory_space<vmem>>, %arg5: memref<9x64x16xf32, #tpu.memory_space<vmem>>, %arg6: memref<9x16x8xf32, #tpu.memory_space<vmem>>, %arg7: memref<16x1xf32, #tpu.memory_space<vmem>>, %arg8: memref<9x16x16xf32, #tpu.memory_space<vmem>>, %arg9: memref<9x32x16xf32, #tpu.memory_space<vmem>>, %arg10: memref<32x1xf32, #tpu.memory_space<vmem>>, %arg11: memref<5x32xf32, #tpu.memory_space<vmem>>, %arg12: memref<5x1xf32, #tpu.memory_space<vmem>>, %arg13: memref<16x256xf32, #tpu.memory_space<vmem>>, %arg14: memref<1x5x256xf32, #tpu.memory_space<vmem>>) attributes {dimension_semantics = [#tpu.dimension_semantics<parallel>], iteration_bounds = array<i64: 2>, scalar_prefetch = 0 : i64, scratch_operands = 0 : i64, tpu.core_type = #tpu.core_type<tc>, window_params = [{transform_indices = @transform_0, window_bounds = array<i64: 1, 3, 256>}, {pipeline_mode = #tpu.pipeline_mode<synchronous>, transform_indices = @transform_1, window_bounds = array<i64: 9, 256, 64>}, {pipeline_mode = #tpu.pipeline_mode<synchronous>, transform_indices = @transform_2, window_bounds = array<i64: 9, 8, 3>}, {pipeline_mode = #tpu.pipeline_mode<synchronous>, transform_indices = @transform_3, window_bounds = array<i64: 8, 1>}, {pipeline_mode = #tpu.pipeline_mode<synchronous>, transform_indices = @transform_4, window_bounds = array<i64: 9, 64, 16>}, {pipeline_mode = #tpu.pipeline_mode<synchronous>, transform_indices = @transform_5, window_bounds = array<i64: 9, 16, 8>}, {pipeline_mode = #tpu.pipeline_mode<synchronous>, transform_indices = @transform_6, window_bounds = array<i64: 16, 1>}, {pipeline_mode = #tpu.pipeline_mode<synchronous>, transform_indices = @transform_7, window_bounds = array<i64: 9, 16, 16>}, {pipeline_mode = #tpu.pipeline_mode<synchronous>, transform_indices = @transform_8, window_bounds = array<i64: 9, 32, 16>}, {pipeline_mode = #tpu.pipeline_mode<synchronous>, transform_indices = @transform_9, window_bounds = array<i64: 32, 1>}, {pipeline_mode = #tpu.pipeline_mode<synchronous>, transform_indices = @transform_10, window_bounds = array<i64: 5, 32>}, {pipeline_mode = #tpu.pipeline_mode<synchronous>, transform_indices = @transform_11, window_bounds = array<i64: 5, 1>}, {pipeline_mode = #tpu.pipeline_mode<synchronous>, transform_indices = @transform_12, window_bounds = array<i64: 16, 256>}, {transform_indices = @transform_13, window_bounds = array<i64: 1, 5, 256>}]} {
    %c0 = arith.constant 0 : index
    %c0_0 = arith.constant 0 : index
    %c0_1 = arith.constant 0 : index
    %0 = vector.load %arg1[%c0, %c0_0, %c0_1] : memref<1x3x256xf32, #tpu.memory_space<vmem>>, vector<1x3x256xf32>
    %1 = vector.shape_cast %0 : vector<1x3x256xf32> to vector<3x256xf32>
    %cst = arith.constant 0.000000e+00 : f32
    %2 = vector.broadcast %cst : f32 to vector<8x64xf32>
    %c0_2 = arith.constant 0 : index
    %c0_3 = arith.constant 0 : index
    %c0_4 = arith.constant 0 : index
    %3 = vector.load %arg2[%c0_2, %c0_3, %c0_4] : memref<9x256x64xf32, #tpu.memory_space<vmem>>, vector<1x256x64xf32>
    %4 = vector.shape_cast %3 : vector<1x256x64xf32> to vector<256x64xf32>
    %cst_5 = arith.constant dense<0.000000e+00> : vector<3x64xf32>
    %5 = tpu.matmul %1, %4, %cst_5 {dimension_numbers = #tpu.dot_dimension_numbers<[1], [0], [0], [1], [0, 0, 1, 1], [], []>} : vector<3x256xf32>, vector<256x64xf32>, vector<3x64xf32> -> vector<3x64xf32>
    %c0_6 = arith.constant 0 : index
    %c0_7 = arith.constant 0 : index
    %c0_8 = arith.constant 0 : index
    %6 = vector.load %arg3[%c0_6, %c0_7, %c0_8] : memref<9x8x3xf32, #tpu.memory_space<vmem>>, vector<1x8x3xf32>
    %7 = vector.shape_cast %6 : vector<1x8x3xf32> to vector<8x3xf32>
    %cst_9 = arith.constant dense<0.000000e+00> : vector<8x64xf32>
    %8 = tpu.matmul %7, %5, %cst_9 {dimension_numbers = #tpu.dot_dimension_numbers<[1], [0], [0], [1], [0, 0, 1, 1], [], []>} : vector<8x3xf32>, vector<3x64xf32>, vector<8x64xf32> -> vector<8x64xf32>
    %9 = arith.addf %2, %8 : vector<8x64xf32>
    %c1 = arith.constant 1 : index
    %c0_10 = arith.constant 0 : index
    %c0_11 = arith.constant 0 : index
    %10 = vector.load %arg2[%c1, %c0_10, %c0_11] : memref<9x256x64xf32, #tpu.memory_space<vmem>>, vector<1x256x64xf32>
    %11 = vector.shape_cast %10 : vector<1x256x64xf32> to vector<256x64xf32>
    %cst_12 = arith.constant dense<0.000000e+00> : vector<3x64xf32>
    %12 = tpu.matmul %1, %11, %cst_12 {dimension_numbers = #tpu.dot_dimension_numbers<[1], [0], [0], [1], [0, 0, 1, 1], [], []>} : vector<3x256xf32>, vector<256x64xf32>, vector<3x64xf32> -> vector<3x64xf32>
    %c1_13 = arith.constant 1 : index
    %c0_14 = arith.constant 0 : index
    %c0_15 = arith.constant 0 : index
    %13 = vector.load %arg3[%c1_13, %c0_14, %c0_15] : memref<9x8x3xf32, #tpu.memory_space<vmem>>, vector<1x8x3xf32>
    %14 = vector.shape_cast %13 : vector<1x8x3xf32> to vector<8x3xf32>
    %cst_16 = arith.constant dense<0.000000e+00> : vector<8x64xf32>
    %15 = tpu.matmul %14, %12, %cst_16 {dimension_numbers = #tpu.dot_dimension_numbers<[1], [0], [0], [1], [0, 0, 1, 1], [], []>} : vector<8x3xf32>, vector<3x64xf32>, vector<8x64xf32> -> vector<8x64xf32>
    %16 = arith.addf %9, %15 : vector<8x64xf32>
    %c2 = arith.constant 2 : index
    %c0_17 = arith.constant 0 : index
    %c0_18 = arith.constant 0 : index
    %17 = vector.load %arg2[%c2, %c0_17, %c0_18] : memref<9x256x64xf32, #tpu.memory_space<vmem>>, vector<1x256x64xf32>
    %18 = vector.shape_cast %17 : vector<1x256x64xf32> to vector<256x64xf32>
    %cst_19 = arith.constant dense<0.000000e+00> : vector<3x64xf32>
    %19 = tpu.matmul %1, %18, %cst_19 {dimension_numbers = #tpu.dot_dimension_numbers<[1], [0], [0], [1], [0, 0, 1, 1], [], []>} : vector<3x256xf32>, vector<256x64xf32>, vector<3x64xf32> -> vector<3x64xf32>
    %c2_20 = arith.constant 2 : index
    %c0_21 = arith.constant 0 : index
    %c0_22 = arith.constant 0 : index
    %20 = vector.load %arg3[%c2_20, %c0_21, %c0_22] : memref<9x8x3xf32, #tpu.memory_space<vmem>>, vector<1x8x3xf32>
    %21 = vector.shape_cast %20 : vector<1x8x3xf32> to vector<8x3xf32>
    %cst_23 = arith.constant dense<0.000000e+00> : vector<8x64xf32>
    %22 = tpu.matmul %21, %19, %cst_23 {dimension_numbers = #tpu.dot_dimension_numbers<[1], [0], [0], [1], [0, 0, 1, 1], [], []>} : vector<8x3xf32>, vector<3x64xf32>, vector<8x64xf32> -> vector<8x64xf32>
    %23 = arith.addf %16, %22 : vector<8x64xf32>
    %c3 = arith.constant 3 : index
    %c0_24 = arith.constant 0 : index
    %c0_25 = arith.constant 0 : index
    %24 = vector.load %arg2[%c3, %c0_24, %c0_25] : memref<9x256x64xf32, #tpu.memory_space<vmem>>, vector<1x256x64xf32>
    %25 = vector.shape_cast %24 : vector<1x256x64xf32> to vector<256x64xf32>
    %cst_26 = arith.constant dense<0.000000e+00> : vector<3x64xf32>
    %26 = tpu.matmul %1, %25, %cst_26 {dimension_numbers = #tpu.dot_dimension_numbers<[1], [0], [0], [1], [0, 0, 1, 1], [], []>} : vector<3x256xf32>, vector<256x64xf32>, vector<3x64xf32> -> vector<3x64xf32>
    %c3_27 = arith.constant 3 : index
    %c0_28 = arith.constant 0 : index
    %c0_29 = arith.constant 0 : index
    %27 = vector.load %arg3[%c3_27, %c0_28, %c0_29] : memref<9x8x3xf32, #tpu.memory_space<vmem>>, vector<1x8x3xf32>
    %28 = vector.shape_cast %27 : vector<1x8x3xf32> to vector<8x3xf32>
    %cst_30 = arith.constant dense<0.000000e+00> : vector<8x64xf32>
    %29 = tpu.matmul %28, %26, %cst_30 {dimension_numbers = #tpu.dot_dimension_numbers<[1], [0], [0], [1], [0, 0, 1, 1], [], []>} : vector<8x3xf32>, vector<3x64xf32>, vector<8x64xf32> -> vector<8x64xf32>
    %30 = arith.addf %23, %29 : vector<8x64xf32>
    %c4 = arith.constant 4 : index
    %c0_31 = arith.constant 0 : index
    %c0_32 = arith.constant 0 : index
    %31 = vector.load %arg2[%c4, %c0_31, %c0_32] : memref<9x256x64xf32, #tpu.memory_space<vmem>>, vector<1x256x64xf32>
    %32 = vector.shape_cast %31 : vector<1x256x64xf32> to vector<256x64xf32>
    %cst_33 = arith.constant dense<0.000000e+00> : vector<3x64xf32>
    %33 = tpu.matmul %1, %32, %cst_33 {dimension_numbers = #tpu.dot_dimension_numbers<[1], [0], [0], [1], [0, 0, 1, 1], [], []>} : vector<3x256xf32>, vector<256x64xf32>, vector<3x64xf32> -> vector<3x64xf32>
    %c4_34 = arith.constant 4 : index
    %c0_35 = arith.constant 0 : index
    %c0_36 = arith.constant 0 : index
    %34 = vector.load %arg3[%c4_34, %c0_35, %c0_36] : memref<9x8x3xf32, #tpu.memory_space<vmem>>, vector<1x8x3xf32>
    %35 = vector.shape_cast %34 : vector<1x8x3xf32> to vector<8x3xf32>
    %cst_37 = arith.constant dense<0.000000e+00> : vector<8x64xf32>
    %36 = tpu.matmul %35, %33, %cst_37 {dimension_numbers = #tpu.dot_dimension_numbers<[1], [0], [0], [1], [0, 0, 1, 1], [], []>} : vector<8x3xf32>, vector<3x64xf32>, vector<8x64xf32> -> vector<8x64xf32>
    %37 = arith.addf %30, %36 : vector<8x64xf32>
    %c5 = arith.constant 5 : index
    %c0_38 = arith.constant 0 : index
    %c0_39 = arith.constant 0 : index
    %38 = vector.load %arg2[%c5, %c0_38, %c0_39] : memref<9x256x64xf32, #tpu.memory_space<vmem>>, vector<1x256x64xf32>
    %39 = vector.shape_cast %38 : vector<1x256x64xf32> to vector<256x64xf32>
    %cst_40 = arith.constant dense<0.000000e+00> : vector<3x64xf32>
    %40 = tpu.matmul %1, %39, %cst_40 {dimension_numbers = #tpu.dot_dimension_numbers<[1], [0], [0], [1], [0, 0, 1, 1], [], []>} : vector<3x256xf32>, vector<256x64xf32>, vector<3x64xf32> -> vector<3x64xf32>
    %c5_41 = arith.constant 5 : index
    %c0_42 = arith.constant 0 : index
    %c0_43 = arith.constant 0 : index
    %41 = vector.load %arg3[%c5_41, %c0_42, %c0_43] : memref<9x8x3xf32, #tpu.memory_space<vmem>>, vector<1x8x3xf32>
    %42 = vector.shape_cast %41 : vector<1x8x3xf32> to vector<8x3xf32>
    %cst_44 = arith.constant dense<0.000000e+00> : vector<8x64xf32>
    %43 = tpu.matmul %42, %40, %cst_44 {dimension_numbers = #tpu.dot_dimension_numbers<[1], [0], [0], [1], [0, 0, 1, 1], [], []>} : vector<8x3xf32>, vector<3x64xf32>, vector<8x64xf32> -> vector<8x64xf32>
    %44 = arith.addf %37, %43 : vector<8x64xf32>
    %c6 = arith.constant 6 : index
    %c0_45 = arith.constant 0 : index
    %c0_46 = arith.constant 0 : index
    %45 = vector.load %arg2[%c6, %c0_45, %c0_46] : memref<9x256x64xf32, #tpu.memory_space<vmem>>, vector<1x256x64xf32>
    %46 = vector.shape_cast %45 : vector<1x256x64xf32> to vector<256x64xf32>
    %cst_47 = arith.constant dense<0.000000e+00> : vector<3x64xf32>
    %47 = tpu.matmul %1, %46, %cst_47 {dimension_numbers = #tpu.dot_dimension_numbers<[1], [0], [0], [1], [0, 0, 1, 1], [], []>} : vector<3x256xf32>, vector<256x64xf32>, vector<3x64xf32> -> vector<3x64xf32>
    %c6_48 = arith.constant 6 : index
    %c0_49 = arith.constant 0 : index
    %c0_50 = arith.constant 0 : index
    %48 = vector.load %arg3[%c6_48, %c0_49, %c0_50] : memref<9x8x3xf32, #tpu.memory_space<vmem>>, vector<1x8x3xf32>
    %49 = vector.shape_cast %48 : vector<1x8x3xf32> to vector<8x3xf32>
    %cst_51 = arith.constant dense<0.000000e+00> : vector<8x64xf32>
    %50 = tpu.matmul %49, %47, %cst_51 {dimension_numbers = #tpu.dot_dimension_numbers<[1], [0], [0], [1], [0, 0, 1, 1], [], []>} : vector<8x3xf32>, vector<3x64xf32>, vector<8x64xf32> -> vector<8x64xf32>
    %51 = arith.addf %44, %50 : vector<8x64xf32>
    %c7 = arith.constant 7 : index
    %c0_52 = arith.constant 0 : index
    %c0_53 = arith.constant 0 : index
    %52 = vector.load %arg2[%c7, %c0_52, %c0_53] : memref<9x256x64xf32, #tpu.memory_space<vmem>>, vector<1x256x64xf32>
    %53 = vector.shape_cast %52 : vector<1x256x64xf32> to vector<256x64xf32>
    %cst_54 = arith.constant dense<0.000000e+00> : vector<3x64xf32>
    %54 = tpu.matmul %1, %53, %cst_54 {dimension_numbers = #tpu.dot_dimension_numbers<[1], [0], [0], [1], [0, 0, 1, 1], [], []>} : vector<3x256xf32>, vector<256x64xf32>, vector<3x64xf32> -> vector<3x64xf32>
    %c7_55 = arith.constant 7 : index
    %c0_56 = arith.constant 0 : index
    %c0_57 = arith.constant 0 : index
    %55 = vector.load %arg3[%c7_55, %c0_56, %c0_57] : memref<9x8x3xf32, #tpu.memory_space<vmem>>, vector<1x8x3xf32>
    %56 = vector.shape_cast %55 : vector<1x8x3xf32> to vector<8x3xf32>
    %cst_58 = arith.constant dense<0.000000e+00> : vector<8x64xf32>
    %57 = tpu.matmul %56, %54, %cst_58 {dimension_numbers = #tpu.dot_dimension_numbers<[1], [0], [0], [1], [0, 0, 1, 1], [], []>} : vector<8x3xf32>, vector<3x64xf32>, vector<8x64xf32> -> vector<8x64xf32>
    %58 = arith.addf %51, %57 : vector<8x64xf32>
    %c8 = arith.constant 8 : index
    %c0_59 = arith.constant 0 : index
    %c0_60 = arith.constant 0 : index
    %59 = vector.load %arg2[%c8, %c0_59, %c0_60] : memref<9x256x64xf32, #tpu.memory_space<vmem>>, vector<1x256x64xf32>
    %60 = vector.shape_cast %59 : vector<1x256x64xf32> to vector<256x64xf32>
    %cst_61 = arith.constant dense<0.000000e+00> : vector<3x64xf32>
    %61 = tpu.matmul %1, %60, %cst_61 {dimension_numbers = #tpu.dot_dimension_numbers<[1], [0], [0], [1], [0, 0, 1, 1], [], []>} : vector<3x256xf32>, vector<256x64xf32>, vector<3x64xf32> -> vector<3x64xf32>
    %c8_62 = arith.constant 8 : index
    %c0_63 = arith.constant 0 : index
    %c0_64 = arith.constant 0 : index
    %62 = vector.load %arg3[%c8_62, %c0_63, %c0_64] : memref<9x8x3xf32, #tpu.memory_space<vmem>>, vector<1x8x3xf32>
    %63 = vector.shape_cast %62 : vector<1x8x3xf32> to vector<8x3xf32>
    %cst_65 = arith.constant dense<0.000000e+00> : vector<8x64xf32>
    %64 = tpu.matmul %63, %61, %cst_65 {dimension_numbers = #tpu.dot_dimension_numbers<[1], [0], [0], [1], [0, 0, 1, 1], [], []>} : vector<8x3xf32>, vector<3x64xf32>, vector<8x64xf32> -> vector<8x64xf32>
    %65 = arith.addf %58, %64 : vector<8x64xf32>
    %c0_66 = arith.constant 0 : index
    %c0_67 = arith.constant 0 : index
    %66 = vector.load %arg4[%c0_66, %c0_67] : memref<8x1xf32, #tpu.memory_space<vmem>>, vector<8x1xf32>
    %67 = vector.broadcast %66 : vector<8x1xf32> to vector<8x64xf32>
    %68 = arith.addf %65, %67 : vector<8x64xf32>
    %cst_68 = arith.constant 0.000000e+00 : f32
    %69 = vector.broadcast %cst_68 : f32 to vector<8x64xf32>
    %70 = arith.maximumf %68, %69 : vector<8x64xf32>
    %cst_69 = arith.constant 0.000000e+00 : f32
    %71 = vector.broadcast %cst_69 : f32 to vector<16x16xf32>
    %c0_70 = arith.constant 0 : index
    %c0_71 = arith.constant 0 : index
    %c0_72 = arith.constant 0 : index
    %72 = vector.load %arg5[%c0_70, %c0_71, %c0_72] : memref<9x64x16xf32, #tpu.memory_space<vmem>>, vector<1x64x16xf32>
    %73 = vector.shape_cast %72 : vector<1x64x16xf32> to vector<64x16xf32>
    %cst_73 = arith.constant dense<0.000000e+00> : vector<8x16xf32>
    %74 = tpu.matmul %70, %73, %cst_73 {dimension_numbers = #tpu.dot_dimension_numbers<[1], [0], [0], [1], [0, 0, 1, 1], [], []>} : vector<8x64xf32>, vector<64x16xf32>, vector<8x16xf32> -> vector<8x16xf32>
    %c0_74 = arith.constant 0 : index
    %c0_75 = arith.constant 0 : index
    %c0_76 = arith.constant 0 : index
    %75 = vector.load %arg6[%c0_74, %c0_75, %c0_76] : memref<9x16x8xf32, #tpu.memory_space<vmem>>, vector<1x16x8xf32>
    %76 = vector.shape_cast %75 : vector<1x16x8xf32> to vector<16x8xf32>
    %cst_77 = arith.constant dense<0.000000e+00> : vector<16x16xf32>
    %77 = tpu.matmul %76, %74, %cst_77 {dimension_numbers = #tpu.dot_dimension_numbers<[1], [0], [0], [1], [0, 0, 1, 1], [], []>} : vector<16x8xf32>, vector<8x16xf32>, vector<16x16xf32> -> vector<16x16xf32>
    %78 = arith.addf %71, %77 : vector<16x16xf32>
    %c1_78 = arith.constant 1 : index
    %c0_79 = arith.constant 0 : index
    %c0_80 = arith.constant 0 : index
    %79 = vector.load %arg5[%c1_78, %c0_79, %c0_80] : memref<9x64x16xf32, #tpu.memory_space<vmem>>, vector<1x64x16xf32>
    %80 = vector.shape_cast %79 : vector<1x64x16xf32> to vector<64x16xf32>
    %cst_81 = arith.constant dense<0.000000e+00> : vector<8x16xf32>
    %81 = tpu.matmul %70, %80, %cst_81 {dimension_numbers = #tpu.dot_dimension_numbers<[1], [0], [0], [1], [0, 0, 1, 1], [], []>} : vector<8x64xf32>, vector<64x16xf32>, vector<8x16xf32> -> vector<8x16xf32>
    %c1_82 = arith.constant 1 : index
    %c0_83 = arith.constant 0 : index
    %c0_84 = arith.constant 0 : index
    %82 = vector.load %arg6[%c1_82, %c0_83, %c0_84] : memref<9x16x8xf32, #tpu.memory_space<vmem>>, vector<1x16x8xf32>
    %83 = vector.shape_cast %82 : vector<1x16x8xf32> to vector<16x8xf32>
    %cst_85 = arith.constant dense<0.000000e+00> : vector<16x16xf32>
    %84 = tpu.matmul %83, %81, %cst_85 {dimension_numbers = #tpu.dot_dimension_numbers<[1], [0], [0], [1], [0, 0, 1, 1], [], []>} : vector<16x8xf32>, vector<8x16xf32>, vector<16x16xf32> -> vector<16x16xf32>
    %85 = arith.addf %78, %84 : vector<16x16xf32>
    %c2_86 = arith.constant 2 : index
    %c0_87 = arith.constant 0 : index
    %c0_88 = arith.constant 0 : index
    %86 = vector.load %arg5[%c2_86, %c0_87, %c0_88] : memref<9x64x16xf32, #tpu.memory_space<vmem>>, vector<1x64x16xf32>
    %87 = vector.shape_cast %86 : vector<1x64x16xf32> to vector<64x16xf32>
    %cst_89 = arith.constant dense<0.000000e+00> : vector<8x16xf32>
    %88 = tpu.matmul %70, %87, %cst_89 {dimension_numbers = #tpu.dot_dimension_numbers<[1], [0], [0], [1], [0, 0, 1, 1], [], []>} : vector<8x64xf32>, vector<64x16xf32>, vector<8x16xf32> -> vector<8x16xf32>
    %c2_90 = arith.constant 2 : index
    %c0_91 = arith.constant 0 : index
    %c0_92 = arith.constant 0 : index
    %89 = vector.load %arg6[%c2_90, %c0_91, %c0_92] : memref<9x16x8xf32, #tpu.memory_space<vmem>>, vector<1x16x8xf32>
    %90 = vector.shape_cast %89 : vector<1x16x8xf32> to vector<16x8xf32>
    %cst_93 = arith.constant dense<0.000000e+00> : vector<16x16xf32>
    %91 = tpu.matmul %90, %88, %cst_93 {dimension_numbers = #tpu.dot_dimension_numbers<[1], [0], [0], [1], [0, 0, 1, 1], [], []>} : vector<16x8xf32>, vector<8x16xf32>, vector<16x16xf32> -> vector<16x16xf32>
    %92 = arith.addf %85, %91 : vector<16x16xf32>
    %c3_94 = arith.constant 3 : index
    %c0_95 = arith.constant 0 : index
    %c0_96 = arith.constant 0 : index
    %93 = vector.load %arg5[%c3_94, %c0_95, %c0_96] : memref<9x64x16xf32, #tpu.memory_space<vmem>>, vector<1x64x16xf32>
    %94 = vector.shape_cast %93 : vector<1x64x16xf32> to vector<64x16xf32>
    %cst_97 = arith.constant dense<0.000000e+00> : vector<8x16xf32>
    %95 = tpu.matmul %70, %94, %cst_97 {dimension_numbers = #tpu.dot_dimension_numbers<[1], [0], [0], [1], [0, 0, 1, 1], [], []>} : vector<8x64xf32>, vector<64x16xf32>, vector<8x16xf32> -> vector<8x16xf32>
    %c3_98 = arith.constant 3 : index
    %c0_99 = arith.constant 0 : index
    %c0_100 = arith.constant 0 : index
    %96 = vector.load %arg6[%c3_98, %c0_99, %c0_100] : memref<9x16x8xf32, #tpu.memory_space<vmem>>, vector<1x16x8xf32>
    %97 = vector.shape_cast %96 : vector<1x16x8xf32> to vector<16x8xf32>
    %cst_101 = arith.constant dense<0.000000e+00> : vector<16x16xf32>
    %98 = tpu.matmul %97, %95, %cst_101 {dimension_numbers = #tpu.dot_dimension_numbers<[1], [0], [0], [1], [0, 0, 1, 1], [], []>} : vector<16x8xf32>, vector<8x16xf32>, vector<16x16xf32> -> vector<16x16xf32>
    %99 = arith.addf %92, %98 : vector<16x16xf32>
    %c4_102 = arith.constant 4 : index
    %c0_103 = arith.constant 0 : index
    %c0_104 = arith.constant 0 : index
    %100 = vector.load %arg5[%c4_102, %c0_103, %c0_104] : memref<9x64x16xf32, #tpu.memory_space<vmem>>, vector<1x64x16xf32>
    %101 = vector.shape_cast %100 : vector<1x64x16xf32> to vector<64x16xf32>
    %cst_105 = arith.constant dense<0.000000e+00> : vector<8x16xf32>
    %102 = tpu.matmul %70, %101, %cst_105 {dimension_numbers = #tpu.dot_dimension_numbers<[1], [0], [0], [1], [0, 0, 1, 1], [], []>} : vector<8x64xf32>, vector<64x16xf32>, vector<8x16xf32> -> vector<8x16xf32>
    %c4_106 = arith.constant 4 : index
    %c0_107 = arith.constant 0 : index
    %c0_108 = arith.constant 0 : index
    %103 = vector.load %arg6[%c4_106, %c0_107, %c0_108] : memref<9x16x8xf32, #tpu.memory_space<vmem>>, vector<1x16x8xf32>
    %104 = vector.shape_cast %103 : vector<1x16x8xf32> to vector<16x8xf32>
    %cst_109 = arith.constant dense<0.000000e+00> : vector<16x16xf32>
    %105 = tpu.matmul %104, %102, %cst_109 {dimension_numbers = #tpu.dot_dimension_numbers<[1], [0], [0], [1], [0, 0, 1, 1], [], []>} : vector<16x8xf32>, vector<8x16xf32>, vector<16x16xf32> -> vector<16x16xf32>
    %106 = arith.addf %99, %105 : vector<16x16xf32>
    %c5_110 = arith.constant 5 : index
    %c0_111 = arith.constant 0 : index
    %c0_112 = arith.constant 0 : index
    %107 = vector.load %arg5[%c5_110, %c0_111, %c0_112] : memref<9x64x16xf32, #tpu.memory_space<vmem>>, vector<1x64x16xf32>
    %108 = vector.shape_cast %107 : vector<1x64x16xf32> to vector<64x16xf32>
    %cst_113 = arith.constant dense<0.000000e+00> : vector<8x16xf32>
    %109 = tpu.matmul %70, %108, %cst_113 {dimension_numbers = #tpu.dot_dimension_numbers<[1], [0], [0], [1], [0, 0, 1, 1], [], []>} : vector<8x64xf32>, vector<64x16xf32>, vector<8x16xf32> -> vector<8x16xf32>
    %c5_114 = arith.constant 5 : index
    %c0_115 = arith.constant 0 : index
    %c0_116 = arith.constant 0 : index
    %110 = vector.load %arg6[%c5_114, %c0_115, %c0_116] : memref<9x16x8xf32, #tpu.memory_space<vmem>>, vector<1x16x8xf32>
    %111 = vector.shape_cast %110 : vector<1x16x8xf32> to vector<16x8xf32>
    %cst_117 = arith.constant dense<0.000000e+00> : vector<16x16xf32>
    %112 = tpu.matmul %111, %109, %cst_117 {dimension_numbers = #tpu.dot_dimension_numbers<[1], [0], [0], [1], [0, 0, 1, 1], [], []>} : vector<16x8xf32>, vector<8x16xf32>, vector<16x16xf32> -> vector<16x16xf32>
    %113 = arith.addf %106, %112 : vector<16x16xf32>
    %c6_118 = arith.constant 6 : index
    %c0_119 = arith.constant 0 : index
    %c0_120 = arith.constant 0 : index
    %114 = vector.load %arg5[%c6_118, %c0_119, %c0_120] : memref<9x64x16xf32, #tpu.memory_space<vmem>>, vector<1x64x16xf32>
    %115 = vector.shape_cast %114 : vector<1x64x16xf32> to vector<64x16xf32>
    %cst_121 = arith.constant dense<0.000000e+00> : vector<8x16xf32>
    %116 = tpu.matmul %70, %115, %cst_121 {dimension_numbers = #tpu.dot_dimension_numbers<[1], [0], [0], [1], [0, 0, 1, 1], [], []>} : vector<8x64xf32>, vector<64x16xf32>, vector<8x16xf32> -> vector<8x16xf32>
    %c6_122 = arith.constant 6 : index
    %c0_123 = arith.constant 0 : index
    %c0_124 = arith.constant 0 : index
    %117 = vector.load %arg6[%c6_122, %c0_123, %c0_124] : memref<9x16x8xf32, #tpu.memory_space<vmem>>, vector<1x16x8xf32>
    %118 = vector.shape_cast %117 : vector<1x16x8xf32> to vector<16x8xf32>
    %cst_125 = arith.constant dense<0.000000e+00> : vector<16x16xf32>
    %119 = tpu.matmul %118, %116, %cst_125 {dimension_numbers = #tpu.dot_dimension_numbers<[1], [0], [0], [1], [0, 0, 1, 1], [], []>} : vector<16x8xf32>, vector<8x16xf32>, vector<16x16xf32> -> vector<16x16xf32>
    %120 = arith.addf %113, %119 : vector<16x16xf32>
    %c7_126 = arith.constant 7 : index
    %c0_127 = arith.constant 0 : index
    %c0_128 = arith.constant 0 : index
    %121 = vector.load %arg5[%c7_126, %c0_127, %c0_128] : memref<9x64x16xf32, #tpu.memory_space<vmem>>, vector<1x64x16xf32>
    %122 = vector.shape_cast %121 : vector<1x64x16xf32> to vector<64x16xf32>
    %cst_129 = arith.constant dense<0.000000e+00> : vector<8x16xf32>
    %123 = tpu.matmul %70, %122, %cst_129 {dimension_numbers = #tpu.dot_dimension_numbers<[1], [0], [0], [1], [0, 0, 1, 1], [], []>} : vector<8x64xf32>, vector<64x16xf32>, vector<8x16xf32> -> vector<8x16xf32>
    %c7_130 = arith.constant 7 : index
    %c0_131 = arith.constant 0 : index
    %c0_132 = arith.constant 0 : index
    %124 = vector.load %arg6[%c7_130, %c0_131, %c0_132] : memref<9x16x8xf32, #tpu.memory_space<vmem>>, vector<1x16x8xf32>
    %125 = vector.shape_cast %124 : vector<1x16x8xf32> to vector<16x8xf32>
    %cst_133 = arith.constant dense<0.000000e+00> : vector<16x16xf32>
    %126 = tpu.matmul %125, %123, %cst_133 {dimension_numbers = #tpu.dot_dimension_numbers<[1], [0], [0], [1], [0, 0, 1, 1], [], []>} : vector<16x8xf32>, vector<8x16xf32>, vector<16x16xf32> -> vector<16x16xf32>
    %127 = arith.addf %120, %126 : vector<16x16xf32>
    %c8_134 = arith.constant 8 : index
    %c0_135 = arith.constant 0 : index
    %c0_136 = arith.constant 0 : index
    %128 = vector.load %arg5[%c8_134, %c0_135, %c0_136] : memref<9x64x16xf32, #tpu.memory_space<vmem>>, vector<1x64x16xf32>
    %129 = vector.shape_cast %128 : vector<1x64x16xf32> to vector<64x16xf32>
    %cst_137 = arith.constant dense<0.000000e+00> : vector<8x16xf32>
    %130 = tpu.matmul %70, %129, %cst_137 {dimension_numbers = #tpu.dot_dimension_numbers<[1], [0], [0], [1], [0, 0, 1, 1], [], []>} : vector<8x64xf32>, vector<64x16xf32>, vector<8x16xf32> -> vector<8x16xf32>
    %c8_138 = arith.constant 8 : index
    %c0_139 = arith.constant 0 : index
    %c0_140 = arith.constant 0 : index
    %131 = vector.load %arg6[%c8_138, %c0_139, %c0_140] : memref<9x16x8xf32, #tpu.memory_space<vmem>>, vector<1x16x8xf32>
    %132 = vector.shape_cast %131 : vector<1x16x8xf32> to vector<16x8xf32>
    %cst_141 = arith.constant dense<0.000000e+00> : vector<16x16xf32>
    %133 = tpu.matmul %132, %130, %cst_141 {dimension_numbers = #tpu.dot_dimension_numbers<[1], [0], [0], [1], [0, 0, 1, 1], [], []>} : vector<16x8xf32>, vector<8x16xf32>, vector<16x16xf32> -> vector<16x16xf32>
    %134 = arith.addf %127, %133 : vector<16x16xf32>
    %c0_142 = arith.constant 0 : index
    %c0_143 = arith.constant 0 : index
    %135 = vector.load %arg7[%c0_142, %c0_143] : memref<16x1xf32, #tpu.memory_space<vmem>>, vector<16x1xf32>
    %136 = vector.broadcast %135 : vector<16x1xf32> to vector<16x16xf32>
    %137 = arith.addf %134, %136 : vector<16x16xf32>
    %cst_144 = arith.constant 0.000000e+00 : f32
    %138 = vector.broadcast %cst_144 : f32 to vector<16x16xf32>
    %139 = arith.maximumf %137, %138 : vector<16x16xf32>
    %cst_145 = arith.constant 0.000000e+00 : f32
    %140 = vector.broadcast %cst_145 : f32 to vector<32x16xf32>
    %c0_146 = arith.constant 0 : index
    %c0_147 = arith.constant 0 : index
    %c0_148 = arith.constant 0 : index
    %141 = vector.load %arg8[%c0_146, %c0_147, %c0_148] : memref<9x16x16xf32, #tpu.memory_space<vmem>>, vector<1x16x16xf32>
    %142 = vector.shape_cast %141 : vector<1x16x16xf32> to vector<16x16xf32>
    %cst_149 = arith.constant dense<0.000000e+00> : vector<16x16xf32>
    %143 = tpu.matmul %139, %142, %cst_149 {dimension_numbers = #tpu.dot_dimension_numbers<[1], [0], [0], [1], [0, 0, 1, 1], [], []>} : vector<16x16xf32>, vector<16x16xf32>, vector<16x16xf32> -> vector<16x16xf32>
    %c0_150 = arith.constant 0 : index
    %c0_151 = arith.constant 0 : index
    %c0_152 = arith.constant 0 : index
    %144 = vector.load %arg9[%c0_150, %c0_151, %c0_152] : memref<9x32x16xf32, #tpu.memory_space<vmem>>, vector<1x32x16xf32>
    %145 = vector.shape_cast %144 : vector<1x32x16xf32> to vector<32x16xf32>
    %cst_153 = arith.constant dense<0.000000e+00> : vector<32x16xf32>
    %146 = tpu.matmul %145, %143, %cst_153 {dimension_numbers = #tpu.dot_dimension_numbers<[1], [0], [0], [1], [0, 0, 1, 1], [], []>} : vector<32x16xf32>, vector<16x16xf32>, vector<32x16xf32> -> vector<32x16xf32>
    %147 = arith.addf %140, %146 : vector<32x16xf32>
    %c1_154 = arith.constant 1 : index
    %c0_155 = arith.constant 0 : index
    %c0_156 = arith.constant 0 : index
    %148 = vector.load %arg8[%c1_154, %c0_155, %c0_156] : memref<9x16x16xf32, #tpu.memory_space<vmem>>, vector<1x16x16xf32>
    %149 = vector.shape_cast %148 : vector<1x16x16xf32> to vector<16x16xf32>
    %cst_157 = arith.constant dense<0.000000e+00> : vector<16x16xf32>
    %150 = tpu.matmul %139, %149, %cst_157 {dimension_numbers = #tpu.dot_dimension_numbers<[1], [0], [0], [1], [0, 0, 1, 1], [], []>} : vector<16x16xf32>, vector<16x16xf32>, vector<16x16xf32> -> vector<16x16xf32>
    %c1_158 = arith.constant 1 : index
    %c0_159 = arith.constant 0 : index
    %c0_160 = arith.constant 0 : index
    %151 = vector.load %arg9[%c1_158, %c0_159, %c0_160] : memref<9x32x16xf32, #tpu.memory_space<vmem>>, vector<1x32x16xf32>
    %152 = vector.shape_cast %151 : vector<1x32x16xf32> to vector<32x16xf32>
    %cst_161 = arith.constant dense<0.000000e+00> : vector<32x16xf32>
    %153 = tpu.matmul %152, %150, %cst_161 {dimension_numbers = #tpu.dot_dimension_numbers<[1], [0], [0], [1], [0, 0, 1, 1], [], []>} : vector<32x16xf32>, vector<16x16xf32>, vector<32x16xf32> -> vector<32x16xf32>
    %154 = arith.addf %147, %153 : vector<32x16xf32>
    %c2_162 = arith.constant 2 : index
    %c0_163 = arith.constant 0 : index
    %c0_164 = arith.constant 0 : index
    %155 = vector.load %arg8[%c2_162, %c0_163, %c0_164] : memref<9x16x16xf32, #tpu.memory_space<vmem>>, vector<1x16x16xf32>
    %156 = vector.shape_cast %155 : vector<1x16x16xf32> to vector<16x16xf32>
    %cst_165 = arith.constant dense<0.000000e+00> : vector<16x16xf32>
    %157 = tpu.matmul %139, %156, %cst_165 {dimension_numbers = #tpu.dot_dimension_numbers<[1], [0], [0], [1], [0, 0, 1, 1], [], []>} : vector<16x16xf32>, vector<16x16xf32>, vector<16x16xf32> -> vector<16x16xf32>
    %c2_166 = arith.constant 2 : index
    %c0_167 = arith.constant 0 : index
    %c0_168 = arith.constant 0 : index
    %158 = vector.load %arg9[%c2_166, %c0_167, %c0_168] : memref<9x32x16xf32, #tpu.memory_space<vmem>>, vector<1x32x16xf32>
    %159 = vector.shape_cast %158 : vector<1x32x16xf32> to vector<32x16xf32>
    %cst_169 = arith.constant dense<0.000000e+00> : vector<32x16xf32>
    %160 = tpu.matmul %159, %157, %cst_169 {dimension_numbers = #tpu.dot_dimension_numbers<[1], [0], [0], [1], [0, 0, 1, 1], [], []>} : vector<32x16xf32>, vector<16x16xf32>, vector<32x16xf32> -> vector<32x16xf32>
    %161 = arith.addf %154, %160 : vector<32x16xf32>
    %c3_170 = arith.constant 3 : index
    %c0_171 = arith.constant 0 : index
    %c0_172 = arith.constant 0 : index
    %162 = vector.load %arg8[%c3_170, %c0_171, %c0_172] : memref<9x16x16xf32, #tpu.memory_space<vmem>>, vector<1x16x16xf32>
    %163 = vector.shape_cast %162 : vector<1x16x16xf32> to vector<16x16xf32>
    %cst_173 = arith.constant dense<0.000000e+00> : vector<16x16xf32>
    %164 = tpu.matmul %139, %163, %cst_173 {dimension_numbers = #tpu.dot_dimension_numbers<[1], [0], [0], [1], [0, 0, 1, 1], [], []>} : vector<16x16xf32>, vector<16x16xf32>, vector<16x16xf32> -> vector<16x16xf32>
    %c3_174 = arith.constant 3 : index
    %c0_175 = arith.constant 0 : index
    %c0_176 = arith.constant 0 : index
    %165 = vector.load %arg9[%c3_174, %c0_175, %c0_176] : memref<9x32x16xf32, #tpu.memory_space<vmem>>, vector<1x32x16xf32>
    %166 = vector.shape_cast %165 : vector<1x32x16xf32> to vector<32x16xf32>
    %cst_177 = arith.constant dense<0.000000e+00> : vector<32x16xf32>
    %167 = tpu.matmul %166, %164, %cst_177 {dimension_numbers = #tpu.dot_dimension_numbers<[1], [0], [0], [1], [0, 0, 1, 1], [], []>} : vector<32x16xf32>, vector<16x16xf32>, vector<32x16xf32> -> vector<32x16xf32>
    %168 = arith.addf %161, %167 : vector<32x16xf32>
    %c4_178 = arith.constant 4 : index
    %c0_179 = arith.constant 0 : index
    %c0_180 = arith.constant 0 : index
    %169 = vector.load %arg8[%c4_178, %c0_179, %c0_180] : memref<9x16x16xf32, #tpu.memory_space<vmem>>, vector<1x16x16xf32>
    %170 = vector.shape_cast %169 : vector<1x16x16xf32> to vector<16x16xf32>
    %cst_181 = arith.constant dense<0.000000e+00> : vector<16x16xf32>
    %171 = tpu.matmul %139, %170, %cst_181 {dimension_numbers = #tpu.dot_dimension_numbers<[1], [0], [0], [1], [0, 0, 1, 1], [], []>} : vector<16x16xf32>, vector<16x16xf32>, vector<16x16xf32> -> vector<16x16xf32>
    %c4_182 = arith.constant 4 : index
    %c0_183 = arith.constant 0 : index
    %c0_184 = arith.constant 0 : index
    %172 = vector.load %arg9[%c4_182, %c0_183, %c0_184] : memref<9x32x16xf32, #tpu.memory_space<vmem>>, vector<1x32x16xf32>
    %173 = vector.shape_cast %172 : vector<1x32x16xf32> to vector<32x16xf32>
    %cst_185 = arith.constant dense<0.000000e+00> : vector<32x16xf32>
    %174 = tpu.matmul %173, %171, %cst_185 {dimension_numbers = #tpu.dot_dimension_numbers<[1], [0], [0], [1], [0, 0, 1, 1], [], []>} : vector<32x16xf32>, vector<16x16xf32>, vector<32x16xf32> -> vector<32x16xf32>
    %175 = arith.addf %168, %174 : vector<32x16xf32>
    %c5_186 = arith.constant 5 : index
    %c0_187 = arith.constant 0 : index
    %c0_188 = arith.constant 0 : index
    %176 = vector.load %arg8[%c5_186, %c0_187, %c0_188] : memref<9x16x16xf32, #tpu.memory_space<vmem>>, vector<1x16x16xf32>
    %177 = vector.shape_cast %176 : vector<1x16x16xf32> to vector<16x16xf32>
    %cst_189 = arith.constant dense<0.000000e+00> : vector<16x16xf32>
    %178 = tpu.matmul %139, %177, %cst_189 {dimension_numbers = #tpu.dot_dimension_numbers<[1], [0], [0], [1], [0, 0, 1, 1], [], []>} : vector<16x16xf32>, vector<16x16xf32>, vector<16x16xf32> -> vector<16x16xf32>
    %c5_190 = arith.constant 5 : index
    %c0_191 = arith.constant 0 : index
    %c0_192 = arith.constant 0 : index
    %179 = vector.load %arg9[%c5_190, %c0_191, %c0_192] : memref<9x32x16xf32, #tpu.memory_space<vmem>>, vector<1x32x16xf32>
    %180 = vector.shape_cast %179 : vector<1x32x16xf32> to vector<32x16xf32>
    %cst_193 = arith.constant dense<0.000000e+00> : vector<32x16xf32>
    %181 = tpu.matmul %180, %178, %cst_193 {dimension_numbers = #tpu.dot_dimension_numbers<[1], [0], [0], [1], [0, 0, 1, 1], [], []>} : vector<32x16xf32>, vector<16x16xf32>, vector<32x16xf32> -> vector<32x16xf32>
    %182 = arith.addf %175, %181 : vector<32x16xf32>
    %c6_194 = arith.constant 6 : index
    %c0_195 = arith.constant 0 : index
    %c0_196 = arith.constant 0 : index
    %183 = vector.load %arg8[%c6_194, %c0_195, %c0_196] : memref<9x16x16xf32, #tpu.memory_space<vmem>>, vector<1x16x16xf32>
    %184 = vector.shape_cast %183 : vector<1x16x16xf32> to vector<16x16xf32>
    %cst_197 = arith.constant dense<0.000000e+00> : vector<16x16xf32>
    %185 = tpu.matmul %139, %184, %cst_197 {dimension_numbers = #tpu.dot_dimension_numbers<[1], [0], [0], [1], [0, 0, 1, 1], [], []>} : vector<16x16xf32>, vector<16x16xf32>, vector<16x16xf32> -> vector<16x16xf32>
    %c6_198 = arith.constant 6 : index
    %c0_199 = arith.constant 0 : index
    %c0_200 = arith.constant 0 : index
    %186 = vector.load %arg9[%c6_198, %c0_199, %c0_200] : memref<9x32x16xf32, #tpu.memory_space<vmem>>, vector<1x32x16xf32>
    %187 = vector.shape_cast %186 : vector<1x32x16xf32> to vector<32x16xf32>
    %cst_201 = arith.constant dense<0.000000e+00> : vector<32x16xf32>
    %188 = tpu.matmul %187, %185, %cst_201 {dimension_numbers = #tpu.dot_dimension_numbers<[1], [0], [0], [1], [0, 0, 1, 1], [], []>} : vector<32x16xf32>, vector<16x16xf32>, vector<32x16xf32> -> vector<32x16xf32>
    %189 = arith.addf %182, %188 : vector<32x16xf32>
    %c7_202 = arith.constant 7 : index
    %c0_203 = arith.constant 0 : index
    %c0_204 = arith.constant 0 : index
    %190 = vector.load %arg8[%c7_202, %c0_203, %c0_204] : memref<9x16x16xf32, #tpu.memory_space<vmem>>, vector<1x16x16xf32>
    %191 = vector.shape_cast %190 : vector<1x16x16xf32> to vector<16x16xf32>
    %cst_205 = arith.constant dense<0.000000e+00> : vector<16x16xf32>
    %192 = tpu.matmul %139, %191, %cst_205 {dimension_numbers = #tpu.dot_dimension_numbers<[1], [0], [0], [1], [0, 0, 1, 1], [], []>} : vector<16x16xf32>, vector<16x16xf32>, vector<16x16xf32> -> vector<16x16xf32>
    %c7_206 = arith.constant 7 : index
    %c0_207 = arith.constant 0 : index
    %c0_208 = arith.constant 0 : index
    %193 = vector.load %arg9[%c7_206, %c0_207, %c0_208] : memref<9x32x16xf32, #tpu.memory_space<vmem>>, vector<1x32x16xf32>
    %194 = vector.shape_cast %193 : vector<1x32x16xf32> to vector<32x16xf32>
    %cst_209 = arith.constant dense<0.000000e+00> : vector<32x16xf32>
    %195 = tpu.matmul %194, %192, %cst_209 {dimension_numbers = #tpu.dot_dimension_numbers<[1], [0], [0], [1], [0, 0, 1, 1], [], []>} : vector<32x16xf32>, vector<16x16xf32>, vector<32x16xf32> -> vector<32x16xf32>
    %196 = arith.addf %189, %195 : vector<32x16xf32>
    %c8_210 = arith.constant 8 : index
    %c0_211 = arith.constant 0 : index
    %c0_212 = arith.constant 0 : index
    %197 = vector.load %arg8[%c8_210, %c0_211, %c0_212] : memref<9x16x16xf32, #tpu.memory_space<vmem>>, vector<1x16x16xf32>
    %198 = vector.shape_cast %197 : vector<1x16x16xf32> to vector<16x16xf32>
    %cst_213 = arith.constant dense<0.000000e+00> : vector<16x16xf32>
    %199 = tpu.matmul %139, %198, %cst_213 {dimension_numbers = #tpu.dot_dimension_numbers<[1], [0], [0], [1], [0, 0, 1, 1], [], []>} : vector<16x16xf32>, vector<16x16xf32>, vector<16x16xf32> -> vector<16x16xf32>
    %c8_214 = arith.constant 8 : index
    %c0_215 = arith.constant 0 : index
    %c0_216 = arith.constant 0 : index
    %200 = vector.load %arg9[%c8_214, %c0_215, %c0_216] : memref<9x32x16xf32, #tpu.memory_space<vmem>>, vector<1x32x16xf32>
    %201 = vector.shape_cast %200 : vector<1x32x16xf32> to vector<32x16xf32>
    %cst_217 = arith.constant dense<0.000000e+00> : vector<32x16xf32>
    %202 = tpu.matmul %201, %199, %cst_217 {dimension_numbers = #tpu.dot_dimension_numbers<[1], [0], [0], [1], [0, 0, 1, 1], [], []>} : vector<32x16xf32>, vector<16x16xf32>, vector<32x16xf32> -> vector<32x16xf32>
    %203 = arith.addf %196, %202 : vector<32x16xf32>
    %c0_218 = arith.constant 0 : index
    %c0_219 = arith.constant 0 : index
    %204 = vector.load %arg10[%c0_218, %c0_219] : memref<32x1xf32, #tpu.memory_space<vmem>>, vector<32x1xf32>
    %205 = vector.broadcast %204 : vector<32x1xf32> to vector<32x16xf32>
    %206 = arith.addf %203, %205 : vector<32x16xf32>
    %cst_220 = arith.constant 0.000000e+00 : f32
    %207 = vector.broadcast %cst_220 : f32 to vector<32x16xf32>
    %208 = arith.maximumf %206, %207 : vector<32x16xf32>
    %c0_221 = arith.constant 0 : index
    %c0_222 = arith.constant 0 : index
    %209 = vector.load %arg11[%c0_221, %c0_222] : memref<5x32xf32, #tpu.memory_space<vmem>>, vector<5x32xf32>
    %cst_223 = arith.constant dense<0.000000e+00> : vector<5x16xf32>
    %210 = tpu.matmul %209, %208, %cst_223 {dimension_numbers = #tpu.dot_dimension_numbers<[1], [0], [0], [1], [0, 0, 1, 1], [], []>} : vector<5x32xf32>, vector<32x16xf32>, vector<5x16xf32> -> vector<5x16xf32>
    %c0_224 = arith.constant 0 : index
    %c0_225 = arith.constant 0 : index
    %211 = vector.load %arg12[%c0_224, %c0_225] : memref<5x1xf32, #tpu.memory_space<vmem>>, vector<5x1xf32>
    %212 = vector.broadcast %211 : vector<5x1xf32> to vector<5x16xf32>
    %213 = arith.addf %210, %212 : vector<5x16xf32>
    %c0_226 = arith.constant 0 : index
    %c0_227 = arith.constant 0 : index
    %214 = vector.load %arg13[%c0_226, %c0_227] : memref<16x256xf32, #tpu.memory_space<vmem>>, vector<16x256xf32>
    %cst_228 = arith.constant dense<0.000000e+00> : vector<5x256xf32>
    %215 = tpu.matmul %213, %214, %cst_228 {dimension_numbers = #tpu.dot_dimension_numbers<[1], [0], [0], [1], [0, 0, 1, 1], [], []>} : vector<5x16xf32>, vector<16x256xf32>, vector<5x256xf32> -> vector<5x256xf32>
    %c0_229 = arith.constant 0 : index
    %c0_230 = arith.constant 0 : index
    %c0_231 = arith.constant 0 : index
    %216 = vector.load %arg14[%c0_229, %c0_230, %c0_231] : memref<1x5x256xf32, #tpu.memory_space<vmem>>, vector<1x5x256xf32>
    %217 = vector.shape_cast %216 : vector<1x5x256xf32> to vector<5x256xf32>
    %218 = vector.shape_cast %215 : vector<5x256xf32> to vector<1x5x256xf32>
    tpu.vector_store %arg14[%c0_229, %c0_230, %c0_231], %218 {strides = array<i32>} : memref<1x5x256xf32, #tpu.memory_space<vmem>>, vector<1x5x256xf32>,
    return
  }
  func.func @transform_0(%arg0: i32) -> (i32, i32, i32) {
    %c0_i32 = arith.constant 0 : i32
    %c0_i32_0 = arith.constant 0 : i32
    %c0_i32_1 = arith.constant 0 : i32
    return %arg0, %c0_i32, %c0_i32_0 : i32, i32, i32
  }
  func.func @transform_1(%arg0: i32) -> (i32, i32, i32) {
    %c0_i32 = arith.constant 0 : i32
    %c0_i32_0 = arith.constant 0 : i32
    %c0_i32_1 = arith.constant 0 : i32
    %c0_i32_2 = arith.constant 0 : i32
    return %c0_i32, %c0_i32_0, %c0_i32_1 : i32, i32, i32
  }
  func.func @transform_2(%arg0: i32) -> (i32, i32, i32) {
    %c0_i32 = arith.constant 0 : i32
    %c0_i32_0 = arith.constant 0 : i32
    %c0_i32_1 = arith.constant 0 : i32
    %c0_i32_2 = arith.constant 0 : i32
    return %c0_i32, %c0_i32_0, %c0_i32_1 : i32, i32, i32
  }
  func.func @transform_3(%arg0: i32) -> (i32, i32) {
    %c0_i32 = arith.constant 0 : i32
    %c0_i32_0 = arith.constant 0 : i32
    %c0_i32_1 = arith.constant 0 : i32
    return %c0_i32, %c0_i32_0 : i32, i32
  }
  func.func @transform_4(%arg0: i32) -> (i32, i32, i32) {
    %c0_i32 = arith.constant 0 : i32
    %c0_i32_0 = arith.constant 0 : i32
    %c0_i32_1 = arith.constant 0 : i32
    %c0_i32_2 = arith.constant 0 : i32
    return %c0_i32, %c0_i32_0, %c0_i32_1 : i32, i32, i32
  }
  func.func @transform_5(%arg0: i32) -> (i32, i32, i32) {
    %c0_i32 = arith.constant 0 : i32
    %c0_i32_0 = arith.constant 0 : i32
    %c0_i32_1 = arith.constant 0 : i32
    %c0_i32_2 = arith.constant 0 : i32
    return %c0_i32, %c0_i32_0, %c0_i32_1 : i32, i32, i32
  }
  func.func @transform_6(%arg0: i32) -> (i32, i32) {
    %c0_i32 = arith.constant 0 : i32
    %c0_i32_0 = arith.constant 0 : i32
    %c0_i32_1 = arith.constant 0 : i32
    return %c0_i32, %c0_i32_0 : i32, i32
  }
  func.func @transform_7(%arg0: i32) -> (i32, i32, i32) {
    %c0_i32 = arith.constant 0 : i32
    %c0_i32_0 = arith.constant 0 : i32
    %c0_i32_1 = arith.constant 0 : i32
    %c0_i32_2 = arith.constant 0 : i32
    return %c0_i32, %c0_i32_0, %c0_i32_1 : i32, i32, i32
  }
  func.func @transform_8(%arg0: i32) -> (i32, i32, i32) {
    %c0_i32 = arith.constant 0 : i32
    %c0_i32_0 = arith.constant 0 : i32
    %c0_i32_1 = arith.constant 0 : i32
    %c0_i32_2 = arith.constant 0 : i32
    return %c0_i32, %c0_i32_0, %c0_i32_1 : i32, i32, i32
  }
  func.func @transform_9(%arg0: i32) -> (i32, i32) {
    %c0_i32 = arith.constant 0 : i32
    %c0_i32_0 = arith.constant 0 : i32
    %c0_i32_1 = arith.constant 0 : i32
    return %c0_i32, %c0_i32_0 : i32, i32
  }
  func.func @transform_10(%arg0: i32) -> (i32, i32) {
    %c0_i32 = arith.constant 0 : i32
    %c0_i32_0 = arith.constant 0 : i32
    %c0_i32_1 = arith.constant 0 : i32
    return %c0_i32, %c0_i32_0 : i32, i32
  }
  func.func @transform_11(%arg0: i32) -> (i32, i32) {
    %c0_i32 = arith.constant 0 : i32
    %c0_i32_0 = arith.constant 0 : i32
    %c0_i32_1 = arith.constant 0 : i32
    return %c0_i32, %c0_i32_0 : i32, i32
  }
  func.func @transform_12(%arg0: i32) -> (i32, i32) {
    %c0_i32 = arith.constant 0 : i32
    %c0_i32_0 = arith.constant 0 : i32
    %c0_i32_1 = arith.constant 0 : i32
    return %c0_i32, %c0_i32_0 : i32, i32
  }
  func.func @transform_13(%arg0: i32) -> (i32, i32, i32) {
    %c0_i32 = arith.constant 0 : i32
    %c0_i32_0 = arith.constant 0 : i32
    %c0_i32_1 = arith.constant 0 : i32
    return %arg0, %c0_i32, %c0_i32_0 : i32, i32, i32
  }
}

</mosaic_0001>

<llo_original>
// kernel: seg_model_forward.1
$region0: #{seg_model_forward.1}
  #allocation0 [shape = 'u32[]', space=smem, size = 0x4, offset = 0x4, fixed_abs, tag = 'smem constant byte address 0x4 - core index']
  #allocation1 [shape = 'u32[144,128]{1,0:T(1,128)}', space=vmem, size = 0x12000, scoped, tag = 'internal scratch']
  %s0 = inlined_call_operand.vmem [shape: f32[2,3,256], index: 0, kind: input, shape index: {}]
  %s1 = inlined_call_operand.hbm [shape: f32[9,256,64], index: 1, kind: input, shape index: {}]
  %s2 = inlined_call_operand.vmem [shape: f32[9,8,3], index: 2, kind: input, shape index: {}]
  %s3 = inlined_call_operand.vmem [shape: f32[8,1], index: 3, kind: input, shape index: {}]
  %s4 = inlined_call_operand.hbm [shape: f32[9,64,16], index: 4, kind: input, shape index: {}]
  %s5 = inlined_call_operand.vmem [shape: f32[9,16,8], index: 5, kind: input, shape index: {}]
  %s6 = inlined_call_operand.vmem [shape: f32[16,1], index: 6, kind: input, shape index: {}]
  %s7 = inlined_call_operand.hbm [shape: f32[9,16,16], index: 7, kind: input, shape index: {}]
  %s8 = inlined_call_operand.vmem [shape: f32[9,32,16], index: 8, kind: input, shape index: {}]
  %s9 = inlined_call_operand.vmem [shape: f32[32,1], index: 9, kind: input, shape index: {}]
  %s10 = inlined_call_operand.vmem [shape: f32[5,32], index: 10, kind: input, shape index: {}]
  %s11 = inlined_call_operand.vmem [shape: f32[5,1], index: 11, kind: input, shape index: {}]
  %s12 = inlined_call_operand.hbm [shape: f32[16,256], index: 12, kind: input, shape index: {}]
  %s13 = inlined_call_operand.vmem [shape: f32[2,5,256], index: 13, kind: output, shape index: {}]
  %s14 = sld [smem:[#allocation0]]
  $region101: #{seg_model_forward.1} parent=0
    _
  %s16 = ssub.s32 1, %s14
  %s17 = scalar_select 0, %s16, %s14
  $region1: #{seg_model_forward.1} parent=0
    #allocation2 [shape = 'u8[1179648]{0}', space=vmem, size = 0x120000, scoped, tag = 'input window, operand 1, single buffered']
    #allocation3 [shape = 's32[2]{0}', space=sflag, size = 0x8, scoped, tag = 'scoped memory for seg_model_forward.1']
    #allocation4 [shape = 'u8[294912]{0}', space=vmem, size = 0x48000, scoped, tag = 'input window, operand 4, single buffered']
    #allocation5 [shape = 's32[1]{0}', space=sflag, size = 0x4, scoped, tag = 'scoped memory for seg_model_forward.1']
    #allocation6 [shape = 'u8[73728]{0}', space=vmem, size = 0x12000, scoped, tag = 'input window, operand 7, single buffered']
    #allocation7 [shape = 'u8[16384]{0}', space=vmem, size = 0x4000, scoped, tag = 'input window, operand 12, single buffered']
    #allocation8 [shape = 's32[1]{0}', space=sflag, size = 0x4, scoped, tag = 'scoped memory for seg_model_forward.1']
    %18 = vsyncpa [#allocation3], 0
    %19 = vsyncpa [#allocation5], 0
    %20 = vsyncpa [#allocation8], 0
    loop: start=0, step=1, limit=4
    $region2: #{seg_model_forward.1} parent=1 // loop_pre_header
      _
    $region3: #{seg_model_forward.1} parent=1 // loop_header
      %s22 = sphi 0, %s26
      %p23 = scmp.ge.s32.totalorder %s22, 4
      %s32 = sphi 0, %s34
      %s35 = sphi 0, %s32
      %s36 = sphi 0, %s35
      %s52 = sphi 0, %s36
      %s56 = sphi 0, %s56
      %s58 = sphi 0, %s56
      %s59 = sphi 0, %s58
      %s73 = sphi 0, %s59
      %s77 = sphi 0, %s77
      %s79 = sphi 0, %s77
      %s80 = sphi 0, %s79
      %s94 = sphi 0, %s80
      %s98 = sphi 0, %s98
      %s100 = sphi 0, %s98
      %s101 = sphi 0, %s100
      %s115 = sphi 0, %s101
      %s119 = sphi 0, %s119
      %s121 = sphi 0, %s119
      %s122 = sphi 0, %s121
      %s136 = sphi 0, %s122
      %s140 = sphi 0, %s140
      %s142 = sphi 0, %s140
      %s143 = sphi 0, %s142
      %s157 = sphi 0, %s143
      %s161 = sphi 0, %s161
      %s163 = sphi 0, %s161
      %s164 = sphi 0, %s163
      %s178 = sphi 0, %s164
      %s182 = sphi 0, %s182
      %s184 = sphi 0, %s182
      %s185 = sphi 0, %s184
      %s199 = sphi 0, %s185
      %s203 = sphi 0, %s203
      %s205 = sphi 0, %s203
      %s206 = sphi 0, %s205
      %s220 = sphi 0, %s206
      %s224 = sphi 0, %s224
      %s226 = sphi 0, %s224
      %s227 = sphi 0, %s226
      %s241 = sphi 0, %s227
      %s245 = sphi 0, %s245
      %s247 = sphi 0, %s245
      %s248 = sphi 0, %s247
      %s262 = sphi 0, %s248
      %s266 = sphi 0, %s266
      %s268 = sphi 0, %s266
      %s269 = sphi 0, %s268
      %s283 = sphi 0, %s269
      %s287 = sphi 0, %s287
      %s289 = sphi 0, %s287
      %s290 = sphi 0, %s289
      %s304 = sphi 0, %s290
      %s310 = sphi 0, %s312
      %s313 = sphi 0, %s310
      %s314 = sphi 0, %s313
      %s330 = sphi 0, %s314
    $region4: #{seg_model_forward.1} parent=1 // loop_header_branch
      %25 = sbr.rel (%p23) target = $region8
    $region5: #{seg_model_forward.1} parent=1 // loop_body
      %s27 = ssub.s32 %s22, 1
      %s28 = ssub.s32 %s22, 2
      %s29 = sadd.s32 %s22, 1
      %s30 = ssub.s32 %s22, %s29
      %p31 = scmp.eq.s32.totalorder %s30, 0
      %s33 = sadd.s32 %s32, 1
      %s34 = scalar_select %p31, %s32, %s33
      %p37 = pneg %p31
      %p38 = scmp.eq.s32.totalorder %s22, 1
      %p39 = por %p37, %p38
      %p40 = scmp.ne.s32.totalorder %s32, %s35
      %p41 = scmp.eq.s32.totalorder %s22, 0
      %p42 = por %p40, %p41
      %p43 = scmp.ne.s32.totalorder %s32, %s35
      %p44 = scmp.eq.s32.totalorder %s27, 1
      %p45 = por %p43, %p44
      %p46 = scmp.ne.s32.totalorder %s35, %s36
      %p47 = scmp.eq.s32.totalorder %s27, 0
      %p48 = por %p46, %p47
      %p49 = scmp.ne.s32.totalorder %s35, %s36
      %p50 = scmp.eq.s32.totalorder %s28, 1
      %p51 = por %p49, %p50
      %p53 = scmp.ne.s32.totalorder %s36, %s52
      %p54 = scmp.eq.s32.totalorder %s28, 0
      %p55 = por %p53, %p54
      %s57 = sadd.s32 %s56, 1
      %p60 = scmp.eq.s32.totalorder %s22, 1
      %p61 = scmp.ne.s32.totalorder %s56, %s58
      %p62 = scmp.eq.s32.totalorder %s22, 0
      %p63 = por %p61, %p62
      %p64 = scmp.ne.s32.totalorder %s56, %s58
      %p65 = scmp.eq.s32.totalorder %s27, 1
      %p66 = por %p64, %p65
      %p67 = scmp.ne.s32.totalorder %s58, %s59
      %p68 = scmp.eq.s32.totalorder %s27, 0
      %p69 = por %p67, %p68
      %p70 = scmp.ne.s32.totalorder %s58, %s59
      %p71 = scmp.eq.s32.totalorder %s28, 1
      %p72 = por %p70, %p71
      %p74 = scmp.ne.s32.totalorder %s59, %s73
      %p75 = scmp.eq.s32.totalorder %s28, 0
      %p76 = por %p74, %p75
      %s78 = sadd.s32 %s77, 1
      %p81 = scmp.eq.s32.totalorder %s22, 1
      %p82 = scmp.ne.s32.totalorder %s77, %s79
      %p83 = scmp.eq.s32.totalorder %s22, 0
      %p84 = por %p82, %p83
      %p85 = scmp.ne.s32.totalorder %s77, %s79
      %p86 = scmp.eq.s32.totalorder %s27, 1
      %p87 = por %p85, %p86
      %p88 = scmp.ne.s32.totalorder %s79, %s80
      %p89 = scmp.eq.s32.totalorder %s27, 0
      %p90 = por %p88, %p89
      %p91 = scmp.ne.s32.totalorder %s79, %s80
      %p92 = scmp.eq.s32.totalorder %s28, 1
      %p93 = por %p91, %p92
      %p95 = scmp.ne.s32.totalorder %s80, %s94
      %p96 = scmp.eq.s32.totalorder %s28, 0
      %p97 = por %p95, %p96
      %s99 = sadd.s32 %s98, 1
      %p102 = scmp.eq.s32.totalorder %s22, 1
      %p103 = scmp.ne.s32.totalorder %s98, %s100
      %p104 = scmp.eq.s32.totalorder %s22, 0
      %p105 = por %p103, %p104
      %p106 = scmp.ne.s32.totalorder %s98, %s100
      %p107 = scmp.eq.s32.totalorder %s27, 1
      %p108 = por %p106, %p107
      %p109 = scmp.ne.s32.totalorder %s100, %s101
      %p110 = scmp.eq.s32.totalorder %s27, 0
      %p111 = por %p109, %p110
      %p112 = scmp.ne.s32.totalorder %s100, %s101
      %p113 = scmp.eq.s32.totalorder %s28, 1
      %p114 = por %p112, %p113
      %p116 = scmp.ne.s32.totalorder %s101, %s115
      %p117 = scmp.eq.s32.totalorder %s28, 0
      %p118 = por %p116, %p117
      %s120 = sadd.s32 %s119, 1
      %p123 = scmp.eq.s32.totalorder %s22, 1
      %p124 = scmp.ne.s32.totalorder %s119, %s121
      %p125 = scmp.eq.s32.totalorder %s22, 0
      %p126 = por %p124, %p125
      %p127 = scmp.ne.s32.totalorder %s119, %s121
      %p128 = scmp.eq.s32.totalorder %s27, 1
      %p129 = por %p127, %p128
      %p130 = scmp.ne.s32.totalorder %s121, %s122
      %p131 = scmp.eq.s32.totalorder %s27, 0
      %p132 = por %p130, %p131
      %p133 = scmp.ne.s32.totalorder %s121, %s122
      %p134 = scmp.eq.s32.totalorder %s28, 1
      %p135 = por %p133, %p134
      %p137 = scmp.ne.s32.totalorder %s122, %s136
      %p138 = scmp.eq.s32.totalorder %s28, 0
      %p139 = por %p137, %p138
      %s141 = sadd.s32 %s140, 1
      %p144 = scmp.eq.s32.totalorder %s22, 1
      %p145 = scmp.ne.s32.totalorder %s140, %s142
      %p146 = scmp.eq.s32.totalorder %s22, 0
      %p147 = por %p145, %p146
      %p148 = scmp.ne.s32.totalorder %s140, %s142
      %p149 = scmp.eq.s32.totalorder %s27, 1
      %p150 = por %p148, %p149
      %p151 = scmp.ne.s32.totalorder %s142, %s143
      %p152 = scmp.eq.s32.totalorder %s27, 0
      %p153 = por %p151, %p152
      %p154 = scmp.ne.s32.totalorder %s142, %s143
      %p155 = scmp.eq.s32.totalorder %s28, 1
      %p156 = por %p154, %p155
      %p158 = scmp.ne.s32.totalorder %s143, %s157
      %p159 = scmp.eq.s32.totalorder %s28, 0
      %p160 = por %p158, %p159
      %s162 = sadd.s32 %s161, 1
      %p165 = scmp.eq.s32.totalorder %s22, 1
      %p166 = scmp.ne.s32.totalorder %s161, %s163
      %p167 = scmp.eq.s32.totalorder %s22, 0
      %p168 = por %p166, %p167
      %p169 = scmp.ne.s32.totalorder %s161, %s163
      %p170 = scmp.eq.s32.totalorder %s27, 1
      %p171 = por %p169, %p170
      %p172 = scmp.ne.s32.totalorder %s163, %s164
      %p173 = scmp.eq.s32.totalorder %s27, 0
      %p174 = por %p172, %p173
      %p175 = scmp.ne.s32.totalorder %s163, %s164
      %p176 = scmp.eq.s32.totalorder %s28, 1
      %p177 = por %p175, %p176
      %p179 = scmp.ne.s32.totalorder %s164, %s178
      %p180 = scmp.eq.s32.totalorder %s28, 0
      %p181 = por %p179, %p180
      %s183 = sadd.s32 %s182, 1
      %p186 = scmp.eq.s32.totalorder %s22, 1
      %p187 = scmp.ne.s32.totalorder %s182, %s184
      %p188 = scmp.eq.s32.totalorder %s22, 0
      %p189 = por %p187, %p188
      %p190 = scmp.ne.s32.totalorder %s182, %s184
      %p191 = scmp.eq.s32.totalorder %s27, 1
      %p192 = por %p190, %p191
      %p193 = scmp.ne.s32.totalorder %s184, %s185
      %p194 = scmp.eq.s32.totalorder %s27, 0
      %p195 = por %p193, %p194
      %p196 = scmp.ne.s32.totalorder %s184, %s185
      %p197 = scmp.eq.s32.totalorder %s28, 1
      %p198 = por %p196, %p197
      %p200 = scmp.ne.s32.totalorder %s185, %s199
      %p201 = scmp.eq.s32.totalorder %s28, 0
      %p202 = por %p200, %p201
      %s204 = sadd.s32 %s203, 1
      %p207 = scmp.eq.s32.totalorder %s22, 1
      %p208 = scmp.ne.s32.totalorder %s203, %s205
      %p209 = scmp.eq.s32.totalorder %s22, 0
      %p210 = por %p208, %p209
      %p211 = scmp.ne.s32.totalorder %s203, %s205
      %p212 = scmp.eq.s32.totalorder %s27, 1
      %p213 = por %p211, %p212
      %p214 = scmp.ne.s32.totalorder %s205, %s206
      %p215 = scmp.eq.s32.totalorder %s27, 0
      %p216 = por %p214, %p215
      %p217 = scmp.ne.s32.totalorder %s205, %s206
      %p218 = scmp.eq.s32.totalorder %s28, 1
      %p219 = por %p217, %p218
      %p221 = scmp.ne.s32.totalorder %s206, %s220
      %p222 = scmp.eq.s32.totalorder %s28, 0
      %p223 = por %p221, %p222
      %s225 = sadd.s32 %s224, 1
      %p228 = scmp.eq.s32.totalorder %s22, 1
      %p229 = scmp.ne.s32.totalorder %s224, %s226
      %p230 = scmp.eq.s32.totalorder %s22, 0
      %p231 = por %p229, %p230
      %p232 = scmp.ne.s32.totalorder %s224, %s226
      %p233 = scmp.eq.s32.totalorder %s27, 1
      %p234 = por %p232, %p233
      %p235 = scmp.ne.s32.totalorder %s226, %s227
      %p236 = scmp.eq.s32.totalorder %s27, 0
      %p237 = por %p235, %p236
      %p238 = scmp.ne.s32.totalorder %s226, %s227
      %p239 = scmp.eq.s32.totalorder %s28, 1
      %p240 = por %p238, %p239
      %p242 = scmp.ne.s32.totalorder %s227, %s241
      %p243 = scmp.eq.s32.totalorder %s28, 0
      %p244 = por %p242, %p243
      %s246 = sadd.s32 %s245, 1
      %p249 = scmp.eq.s32.totalorder %s22, 1
      %p250 = scmp.ne.s32.totalorder %s245, %s247
      %p251 = scmp.eq.s32.totalorder %s22, 0
      %p252 = por %p250, %p251
      %p253 = scmp.ne.s32.totalorder %s245, %s247
      %p254 = scmp.eq.s32.totalorder %s27, 1
      %p255 = por %p253, %p254
      %p256 = scmp.ne.s32.totalorder %s247, %s248
      %p257 = scmp.eq.s32.totalorder %s27, 0
      %p258 = por %p256, %p257
      %p259 = scmp.ne.s32.totalorder %s247, %s248
      %p260 = scmp.eq.s32.totalorder %s28, 1
      %p261 = por %p259, %p260
      %p263 = scmp.ne.s32.totalorder %s248, %s262
      %p264 = scmp.eq.s32.totalorder %s28, 0
      %p265 = por %p263, %p264
      %s267 = sadd.s32 %s266, 1
      %p270 = scmp.eq.s32.totalorder %s22, 1
      %p271 = scmp.ne.s32.totalorder %s266, %s268
      %p272 = scmp.eq.s32.totalorder %s22, 0
      %p273 = por %p271, %p272
      %p274 = scmp.ne.s32.totalorder %s266, %s268
      %p275 = scmp.eq.s32.totalorder %s27, 1
      %p276 = por %p274, %p275
      %p277 = scmp.ne.s32.totalorder %s268, %s269
      %p278 = scmp.eq.s32.totalorder %s27, 0
      %p279 = por %p277, %p278
      %p280 = scmp.ne.s32.totalorder %s268, %s269
      %p281 = scmp.eq.s32.totalorder %s28, 1
      %p282 = por %p280, %p281
      %p284 = scmp.ne.s32.totalorder %s269, %s283
      %p285 = scmp.eq.s32.totalorder %s28, 0
      %p286 = por %p284, %p285
      %s288 = sadd.s32 %s287, 1
      %p291 = scmp.eq.s32.totalorder %s22, 1
      %p292 = scmp.ne.s32.totalorder %s287, %s289
      %p293 = scmp.eq.s32.totalorder %s22, 0
      %p294 = por %p292, %p293
      %p295 = scmp.ne.s32.totalorder %s287, %s289
      %p296 = scmp.eq.s32.totalorder %s27, 1
      %p297 = por %p295, %p296
      %p298 = scmp.ne.s32.totalorder %s289, %s290
      %p299 = scmp.eq.s32.totalorder %s27, 0
      %p300 = por %p298, %p299
      %p301 = scmp.ne.s32.totalorder %s289, %s290
      %p302 = scmp.eq.s32.totalorder %s28, 1
      %p303 = por %p301, %p302
      %p305 = scmp.ne.s32.totalorder %s290, %s304
      %p306 = scmp.eq.s32.totalorder %s28, 0
      %p307 = por %p305, %p306
      %s308 = ssub.s32 %s22, %s29
      %p309 = scmp.eq.s32.totalorder %s308, 0
      %s311 = sadd.s32 %s310, 1
      %s312 = scalar_select %p309, %s310, %s311
      %p315 = pneg %p309
      %p316 = scmp.eq.s32.totalorder %s22, 1
      %p317 = por %p315, %p316
      %p318 = scmp.ne.s32.totalorder %s310, %s313
      %p319 = scmp.eq.s32.totalorder %s22, 0
      %p320 = por %p318, %p319
      %p321 = scmp.ne.s32.totalorder %s310, %s313
      %p322 = scmp.eq.s32.totalorder %s27, 1
      %p323 = por %p321, %p322
      %p324 = scmp.ne.s32.totalorder %s313, %s314
      %p325 = scmp.eq.s32.totalorder %s27, 0
      %p326 = por %p324, %p325
      %p327 = scmp.ne.s32.totalorder %s313, %s314
      %p328 = scmp.eq.s32.totalorder %s28, 1
      %p329 = por %p327, %p328
      %p331 = scmp.ne.s32.totalorder %s314, %s330
      %p332 = scmp.eq.s32.totalorder %s28, 0
      %p333 = por %p331, %p332
      %p334 = scmp.le.s32.totalorder 1, %s22
      %p335 = scmp.lt.s32.totalorder %s22, 3
      %p336 = pnand %p334, %p335
      %p337 = pneg %p336
      // Predicated region
      $region9: #{seg_model_forward.1} parent=5 // pred_check
        _
      $region10: #{seg_model_forward.1} parent=5 // pred_check_branch
        %339 = sbr.rel (%p336) target = $region12
      $region11: #{seg_model_forward.1} parent=5 // pred_region
        %s340 = ssub.s32 %s22, 1
        // Predicated region
        $region13: #{seg_model_forward.1} parent=11 // pred_check
          %p341 = pneg %p69
        $region14: #{seg_model_forward.1} parent=11 // pred_check_branch
          %343 = sbr.rel (%p341) target = $region16
        $region15: #{seg_model_forward.1} parent=11 // pred_region
          %s345 = ssub.s32 36864, 36864
          %346 = vsyncadd [#allocation3], %s345
          %s347 = sshll.u32 [#allocation2], 4
          %s348 = int_to_ptr.vmem [resolvable:$true] %s347
          %353 = dma.hbm_to_vmem [thread:$0]  %s1, 36864, %s348, [#allocation3], 128, 128, 8
        $region16: #{seg_model_forward.1} parent=11 // pred_fallthru
          _
        // Predicated region
        $region17: #{seg_model_forward.1} parent=11 // pred_check
          %p354 = pneg %p90
        $region18: #{seg_model_forward.1} parent=11 // pred_check_branch
          %356 = sbr.rel (%p354) target = $region20
        $region19: #{seg_model_forward.1} parent=11 // pred_region
          _
        $region20: #{seg_model_forward.1} parent=11 // pred_fallthru
          _
        // Predicated region
        $region21: #{seg_model_forward.1} parent=11 // pred_check
          %p357 = pneg %p111
        $region22: #{seg_model_forward.1} parent=11 // pred_check_branch
          %359 = sbr.rel (%p357) target = $region24
        $region23: #{seg_model_forward.1} parent=11 // pred_region
          _
        $region24: #{seg_model_forward.1} parent=11 // pred_fallthru
          _
        // Predicated region
        $region25: #{seg_model_forward.1} parent=11 // pred_check
          %p360 = pneg %p132
        $region26: #{seg_model_forward.1} parent=11 // pred_check_branch
          %362 = sbr.rel (%p360) target = $region28
        $region27: #{seg_model_forward.1} parent=11 // pred_region
          %s364 = ssub.s32 9216, 9216
          %365 = vsyncadd [#allocation5], %s364
          %s366 = sshll.u32 [#allocation4], 4
          %s367 = int_to_ptr.vmem [resolvable:$true] %s366
          %372 = dma.hbm_to_vmem [thread:$0]  %s4, 9216, %s367, [#allocation5], 128, 128, 8
        $region28: #{seg_model_forward.1} parent=11 // pred_fallthru
          _
        // Predicated region
        $region29: #{seg_model_forward.1} parent=11 // pred_check
          %p373 = pneg %p153
        $region30: #{seg_model_forward.1} parent=11 // pred_check_branch
          %375 = sbr.rel (%p373) target = $region32
        $region31: #{seg_model_forward.1} parent=11 // pred_region
          _
        $region32: #{seg_model_forward.1} parent=11 // pred_fallthru
          _
        // Predicated region
        $region33: #{seg_model_forward.1} parent=11 // pred_check
          %p376 = pneg %p174
        $region34: #{seg_model_forward.1} parent=11 // pred_check_branch
          %378 = sbr.rel (%p376) target = $region36
        $region35: #{seg_model_forward.1} parent=11 // pred_region
          _
        $region36: #{seg_model_forward.1} parent=11 // pred_fallthru
          _
        // Predicated region
        $region37: #{seg_model_forward.1} parent=11 // pred_check
          %p379 = pneg %p195
        $region38: #{seg_model_forward.1} parent=11 // pred_check_branch
          %381 = sbr.rel (%p379) target = $region40
        $region39: #{seg_model_forward.1} parent=11 // pred_region
          %s383 = ssub.s32 2304, 2304
          %384 = vsyncadd [#allocation5], %s383
          %s385 = sshll.u32 [#allocation6], 4
          %s386 = int_to_ptr.vmem [resolvable:$true] %s385
          %391 = dma.hbm_to_vmem [thread:$0]  %s7, 2304, %s386, [#allocation5], 128, 128, 8
        $region40: #{seg_model_forward.1} parent=11 // pred_fallthru
          _
        // Predicated region
        $region41: #{seg_model_forward.1} parent=11 // pred_check
          %p392 = pneg %p216
        $region42: #{seg_model_forward.1} parent=11 // pred_check_branch
          %394 = sbr.rel (%p392) target = $region44
        $region43: #{seg_model_forward.1} parent=11 // pred_region
          _
        $region44: #{seg_model_forward.1} parent=11 // pred_fallthru
          _
        // Predicated region
        $region45: #{seg_model_forward.1} parent=11 // pred_check
          %p395 = pneg %p237
        $region46: #{seg_model_forward.1} parent=11 // pred_check_branch
          %397 = sbr.rel (%p395) target = $region48
        $region47: #{seg_model_forward.1} parent=11 // pred_region
          _
        $region48: #{seg_model_forward.1} parent=11 // pred_fallthru
          _
        // Predicated region
        $region49: #{seg_model_forward.1} parent=11 // pred_check
          %p398 = pneg %p258
        $region50: #{seg_model_forward.1} parent=11 // pred_check_branch
          %400 = sbr.rel (%p398) target = $region52
        $region51: #{seg_model_forward.1} parent=11 // pred_region
          _
        $region52: #{seg_model_forward.1} parent=11 // pred_fallthru
          _
        // Predicated region
        $region53: #{seg_model_forward.1} parent=11 // pred_check
          %p401 = pneg %p279
        $region54: #{seg_model_forward.1} parent=11 // pred_check_branch
          %403 = sbr.rel (%p401) target = $region56
        $region55: #{seg_model_forward.1} parent=11 // pred_region
          _
        $region56: #{seg_model_forward.1} parent=11 // pred_fallthru
          _
        // Predicated region
        $region57: #{seg_model_forward.1} parent=11 // pred_check
          %p404 = pneg %p300
        $region58: #{seg_model_forward.1} parent=11 // pred_check_branch
          %406 = sbr.rel (%p404) target = $region60
        $region59: #{seg_model_forward.1} parent=11 // pred_region
          %s408 = ssub.s32 512, 512
          %409 = vsyncadd [#allocation8], %s408
          %s410 = sshll.u32 [#allocation7], 4
          %s411 = int_to_ptr.vmem [resolvable:$true] %s410
          %416 = dma.hbm_to_vmem [thread:$0]  %s12, 512, %s411, [#allocation8], 256, 256, 16
        $region60: #{seg_model_forward.1} parent=11 // pred_fallthru
          _
      $region12: #{seg_model_forward.1} parent=5 // pred_fallthru
        _
      %p417 = scmp.lt.s32.totalorder %s22, 2
      // Predicated region
      $region61: #{seg_model_forward.1} parent=5 // pred_check
        %p418 = pneg %p417
      $region62: #{seg_model_forward.1} parent=5 // pred_check_branch
        %420 = sbr.rel (%p418) target = $region64
      $region63: #{seg_model_forward.1} parent=5 // pred_region
        // Predicated region
        $region65: #{seg_model_forward.1} parent=63 // pred_check
          %p421 = pneg %p42
        $region66: #{seg_model_forward.1} parent=63 // pred_check_branch
          %423 = sbr.rel (%p421) target = $region68
        $region67: #{seg_model_forward.1} parent=63 // pred_region
          %p424 = scmp.lt.s32.totalorder %s22, 1
          %s425 = scalar_select %p424, %s22, 1
          %s426 = smul.addr %s425, 2
          %s427 = smul.addr %s426, 4
          %s428 = scalar_lea.vmem %s0, %s427
        $region68: #{seg_model_forward.1} parent=63 // pred_fallthru
          _
      $region64: #{seg_model_forward.1} parent=5 // pred_fallthru
        _
      %p429 = scmp.le.s32.totalorder 1, %s22
      %p430 = scmp.lt.s32.totalorder %s22, 3
      %p431 = pnand %p429, %p430
      %p432 = pneg %p431
      // Predicated region
      $region69: #{seg_model_forward.1} parent=5 // pred_check
        _
      $region70: #{seg_model_forward.1} parent=5 // pred_check_branch
        %434 = sbr.rel (%p431) target = $region72
      $region71: #{seg_model_forward.1} parent=5 // pred_region
        %s435 = ssub.s32 %s22, 1
        // Predicated region
        $region73: #{seg_model_forward.1} parent=71 // pred_check
          %p436 = pneg %p69
        $region74: #{seg_model_forward.1} parent=71 // pred_check_branch
          %438 = sbr.rel (%p436) target = $region76
        $region75: #{seg_model_forward.1} parent=71 // pred_region
          %439 = dma.done [#allocation3], 36864
        $region76: #{seg_model_forward.1} parent=71 // pred_fallthru
          _
        // Predicated region
        $region77: #{seg_model_forward.1} parent=71 // pred_check
          %p440 = pneg %p132
        $region78: #{seg_model_forward.1} parent=71 // pred_check_branch
          %442 = sbr.rel (%p440) target = $region80
        $region79: #{seg_model_forward.1} parent=71 // pred_region
          %443 = dma.done [#allocation5], 9216
        $region80: #{seg_model_forward.1} parent=71 // pred_fallthru
          _
        // Predicated region
        $region81: #{seg_model_forward.1} parent=71 // pred_check
          %p444 = pneg %p195
        $region82: #{seg_model_forward.1} parent=71 // pred_check_branch
          %446 = sbr.rel (%p444) target = $region84
        $region83: #{seg_model_forward.1} parent=71 // pred_region
          %447 = dma.done [#allocation5], 2304
        $region84: #{seg_model_forward.1} parent=71 // pred_fallthru
          _
        // Predicated region
        $region85: #{seg_model_forward.1} parent=71 // pred_check
          %p448 = pneg %p300
        $region86: #{seg_model_forward.1} parent=71 // pred_check_branch
          %450 = sbr.rel (%p448) target = $region88
        $region87: #{seg_model_forward.1} parent=71 // pred_region
          %451 = dma.done [#allocation8], 512
        $region88: #{seg_model_forward.1} parent=71 // pred_fallthru
          _
        %p452 = scmp.lt.s32.totalorder %s27, 1
        %s453 = scalar_select %p452, %s27, 1
        %s454 = smul.addr %s453, 2
        %s455 = smul.addr %s454, 4
        %s456 = scalar_lea.vmem %s0, %s455
        %p457 = pneg %p48
        %p458 = pneg %p45
        %p459 = pneg %p69
        %p460 = pneg %p66
        %p461 = pneg %p90
        %p462 = pneg %p87
        %p463 = pneg %p111
        %p464 = pneg %p108
        %p465 = pneg %p132
        %p466 = pneg %p129
        %p467 = pneg %p153
        %p468 = pneg %p150
        %p469 = pneg %p174
        %p470 = pneg %p171
        %p471 = pneg %p195
        %p472 = pneg %p192
        %p473 = pneg %p216
        %p474 = pneg %p213
        %p475 = pneg %p237
        %p476 = pneg %p234
        %p477 = pneg %p258
        %p478 = pneg %p255
        %p479 = pneg %p279
        %p480 = pneg %p276
        %p481 = pneg %p300
        %p482 = pneg %p297
        %p483 = pneg %p326
        %p484 = pneg %p323
        %p485 = scmp.lt.s32.totalorder %s27, 1
        %s486 = scalar_select %p485, %s27, 1
        %s487 = smul.addr %s486, 2
        %s488 = smul.addr %s487, 8
        %s489 = scalar_lea.vmem %s13, %s488
        %p490 = scmp.lt.s32.totalorder %s27, 1
        %s491 = scalar_select %p490, %s27, 1
        %s492 = smul.addr %s491, 2
        %s493 = smul.addr %s492, 4
        %s494 = scalar_lea.vmem %s0, %s493
        %p495 = scmp.lt.s32.totalorder %s27, 1
        %s496 = scalar_select %p495, %s27, 1
        %s497 = smul.addr %s496, 2
        %s498 = smul.addr %s497, 8
        %s499 = scalar_lea.vmem %s13, %s498
        %v500 = vld [vmem:[%s494] sm:$0x77]
        %v501 = vld [vmem:[#allocation2] sm:$0xff]
        %v502 = vld [vmem:[#allocation2 + $0x8] sm:$0xff]
        %v503 = vld [vmem:[#allocation2 + $0x10] sm:$0xff]
        %v504 = vld [vmem:[#allocation2 + $0x18] sm:$0xff]
        %v505 = vld [vmem:[#allocation2 + $0x20] sm:$0xff]
        %v506 = vld [vmem:[#allocation2 + $0x28] sm:$0xff]
        %v507 = vld [vmem:[#allocation2 + $0x30] sm:$0xff]
        %v508 = vld [vmem:[#allocation2 + $0x38] sm:$0xff]
        %v509 = vld [vmem:[#allocation2 + $0x40] sm:$0xff]
        %v510 = vld [vmem:[#allocation2 + $0x48] sm:$0xff]
        %v511 = vld [vmem:[#allocation2 + $0x50] sm:$0xff]
        %v512 = vld [vmem:[#allocation2 + $0x58] sm:$0xff]
        %v513 = vld [vmem:[#allocation2 + $0x60] sm:$0xff]
        %v514 = vld [vmem:[#allocation2 + $0x68] sm:$0xff]
        %v515 = vld [vmem:[#allocation2 + $0x70] sm:$0xff]
        %v516 = vld [vmem:[#allocation2 + $0x78] sm:$0xff]
        %v517 = vld [vmem:[#allocation2 + $0x80] sm:$0xff]
        %v518 = vld [vmem:[#allocation2 + $0x88] sm:$0xff]
        %v519 = vld [vmem:[#allocation2 + $0x90] sm:$0xff]
        %v520 = vld [vmem:[#allocation2 + $0x98] sm:$0xff]
        %v521 = vld [vmem:[#allocation2 + $0xa0] sm:$0xff]
        %v522 = vld [vmem:[#allocation2 + $0xa8] sm:$0xff]
        %v523 = vld [vmem:[#allocation2 + $0xb0] sm:$0xff]
        %v524 = vld [vmem:[#allocation2 + $0xb8] sm:$0xff]
        %v525 = vld [vmem:[#allocation2 + $0xc0] sm:$0xff]
        %v526 = vld [vmem:[#allocation2 + $0xc8] sm:$0xff]
        %v527 = vld [vmem:[#allocation2 + $0xd0] sm:$0xff]
        %v528 = vld [vmem:[#allocation2 + $0xd8] sm:$0xff]
        %v529 = vld [vmem:[#allocation2 + $0xe0] sm:$0xff]
        %v530 = vld [vmem:[#allocation2 + $0xe8] sm:$0xff]
        %v531 = vld [vmem:[#allocation2 + $0xf0] sm:$0xff]
        %v532 = vld [vmem:[#allocation2 + $0xf8] sm:$0xff]
        %v534 = vcombine.high %v500, %v500
        %536 = vmatprep.subr.mxu0 0.0
        %537 = vmatpush1.msra.mxu0 %v501
        %538 = vmatprep.subr.mxu0 0.0
        %539 = vmatpush1.msra.mxu0 %v502
        %540 = vmatprep.subr.mxu0 0.0
        %541 = vmatpush1.msra.mxu0 %v503
        %542 = vmatprep.subr.mxu0 0.0
        %543 = vmatpush1.msra.mxu0 %v504
        %544 = vmatprep.subr.mxu0 0.0
        %545 = vmatpush1.msra.mxu0 %v505
        %546 = vmatprep.subr.mxu0 0.0
        %547 = vmatpush1.msra.mxu0 %v506
        %548 = vmatprep.subr.mxu0 0.0
        %549 = vmatpush1.msra.mxu0 %v507
        %550 = vmatprep.subr.mxu0 0.0
        %551 = vmatpush1.msra.mxu0 %v508
        %552 = vmatprep.subr.mxu0 0.0
        %553 = vmatpush1.msra.mxu0 %v509
        %554 = vmatprep.subr.mxu0 0.0
        %555 = vmatpush1.msra.mxu0 %v510
        %556 = vmatprep.subr.mxu0 0.0
        %557 = vmatpush1.msra.mxu0 %v511
        %558 = vmatprep.subr.mxu0 0.0
        %559 = vmatpush1.msra.mxu0 %v512
        %560 = vmatprep.subr.mxu0 0.0
        %561 = vmatpush1.msra.mxu0 %v513
        %562 = vmatprep.subr.mxu0 0.0
        %563 = vmatpush1.msra.mxu0 %v514
        %564 = vmatprep.subr.mxu0 0.0
        %565 = vmatpush1.msra.mxu0 %v515
        %566 = vmatprep.subr.mxu0 0.0
        %567 = vmatpush1.msra.mxu0 %v516
        %568 = vmatprep.subr.mxu0 0.0
        %569 = vmatpush1.msra.mxu0 %v517
        %570 = vmatprep.subr.mxu0 0.0
        %571 = vmatpush1.msra.mxu0 %v518
        %572 = vmatprep.subr.mxu0 0.0
        %573 = vmatpush1.msra.mxu0 %v519
        %574 = vmatprep.subr.mxu0 0.0
        %575 = vmatpush1.msra.mxu0 %v520
        %576 = vmatprep.subr.mxu0 0.0
        %577 = vmatpush1.msra.mxu0 %v521
        %578 = vmatprep.subr.mxu0 0.0
        %579 = vmatpush1.msra.mxu0 %v522
        %580 = vmatprep.subr.mxu0 0.0
        %581 = vmatpush1.msra.mxu0 %v523
        %582 = vmatprep.subr.mxu0 0.0
        %583 = vmatpush1.msra.mxu0 %v524
        %584 = vmatprep.subr.mxu0 0.0
        %585 = vmatpush1.msra.mxu0 %v525
        %586 = vmatprep.subr.mxu0 0.0
        %587 = vmatpush1.msra.mxu0 %v526
        %588 = vmatprep.subr.mxu0 0.0
        %589 = vmatpush1.msra.mxu0 %v527
        %590 = vmatprep.subr.mxu0 0.0
        %591 = vmatpush1.msra.mxu0 %v528
        %592 = vmatprep.subr.mxu0 0.0
        %593 = vmatpush1.msra.mxu0 %v529
        %594 = vmatprep.subr.mxu0 0.0
        %595 = vmatpush1.msra.mxu0 %v530
        %596 = vmatprep.subr.mxu0 0.0
        %597 = vmatpush1.msra.mxu0 %v531
        %598 = vmatprep.subr.mxu0 0.0
        %599 = vmatpush1.msra.mxu0 %v532
        %600 = vmatprep.mubr.f32.mxu0 %v534
        %601 = vmatmul.mubr.f32.gmra.mrb[0].mxu0 %v500
        %v602 = vpop.f32.mrb[0].mxu0
        %v603 = vadd.f32 0.0, %v602
        %v604 = vpop.f32.mrb[0].mxu0
        %605 = vdwg.mxu0
        %v606 = vld [vmem:[%s2] sm:$0xff]
        %s607 = scalar_lea.vmem [#allocation2], 256
        %v608 = vld [vmem:[%s607] sm:$0xff]
        %v609 = vld [vmem:[%s607 + $0x8] sm:$0xff]
        %v610 = vld [vmem:[%s607 + $0x10] sm:$0xff]
        %v611 = vld [vmem:[%s607 + $0x18] sm:$0xff]
        %v612 = vld [vmem:[%s607 + $0x20] sm:$0xff]
        %v613 = vld [vmem:[%s607 + $0x28] sm:$0xff]
        %v614 = vld [vmem:[%s607 + $0x30] sm:$0xff]
        %v615 = vld [vmem:[%s607 + $0x38] sm:$0xff]
        %v616 = vld [vmem:[%s607 + $0x40] sm:$0xff]
        %v617 = vld [vmem:[%s607 + $0x48] sm:$0xff]
        %v618 = vld [vmem:[%s607 + $0x50] sm:$0xff]
        %v619 = vld [vmem:[%s607 + $0x58] sm:$0xff]
        %v620 = vld [vmem:[%s607 + $0x60] sm:$0xff]
        %v621 = vld [vmem:[%s607 + $0x68] sm:$0xff]
        %v622 = vld [vmem:[%s607 + $0x70] sm:$0xff]
        %v623 = vld [vmem:[%s607 + $0x78] sm:$0xff]
        %v624 = vld [vmem:[%s607 + $0x80] sm:$0xff]
        %v625 = vld [vmem:[%s607 + $0x88] sm:$0xff]
        %v626 = vld [vmem:[%s607 + $0x90] sm:$0xff]
        %v627 = vld [vmem:[%s607 + $0x98] sm:$0xff]
        %v628 = vld [vmem:[%s607 + $0xa0] sm:$0xff]
        %v629 = vld [vmem:[%s607 + $0xa8] sm:$0xff]
        %v630 = vld [vmem:[%s607 + $0xb0] sm:$0xff]
        %v631 = vld [vmem:[%s607 + $0xb8] sm:$0xff]
        %v632 = vld [vmem:[%s607 + $0xc0] sm:$0xff]
        %v633 = vld [vmem:[%s607 + $0xc8] sm:$0xff]
        %v634 = vld [vmem:[%s607 + $0xd0] sm:$0xff]
        %v635 = vld [vmem:[%s607 + $0xd8] sm:$0xff]
        %v636 = vld [vmem:[%s607 + $0xe0] sm:$0xff]
        %v637 = vld [vmem:[%s607 + $0xe8] sm:$0xff]
        %v638 = vld [vmem:[%s607 + $0xf0] sm:$0xff]
        %v639 = vld [vmem:[%s607 + $0xf8] sm:$0xff]
        %640 = vmatprep.subr.mxu0 0.0
        %641 = vmatpush1.msra.mxu0 %v608
        %642 = vmatprep.subr.mxu0 0.0
        %643 = vmatpush1.msra.mxu0 %v609
        %644 = vmatprep.subr.mxu0 0.0
        %645 = vmatpush1.msra.mxu0 %v610
        %646 = vmatprep.subr.mxu0 0.0
        %647 = vmatpush1.msra.mxu0 %v611
        %648 = vmatprep.subr.mxu0 0.0
        %649 = vmatpush1.msra.mxu0 %v612
        %650 = vmatprep.subr.mxu0 0.0
        %651 = vmatpush1.msra.mxu0 %v613
        %652 = vmatprep.subr.mxu0 0.0
        %653 = vmatpush1.msra.mxu0 %v614
        %654 = vmatprep.subr.mxu0 0.0
        %655 = vmatpush1.msra.mxu0 %v615
        %656 = vmatprep.subr.mxu0 0.0
        %657 = vmatpush1.msra.mxu0 %v616
        %658 = vmatprep.subr.mxu0 0.0
        %659 = vmatpush1.msra.mxu0 %v617
        %660 = vmatprep.subr.mxu0 0.0
        %661 = vmatpush1.msra.mxu0 %v618
        %662 = vmatprep.subr.mxu0 0.0
        %663 = vmatpush1.msra.mxu0 %v619
        %664 = vmatprep.subr.mxu0 0.0
        %665 = vmatpush1.msra.mxu0 %v620
        %666 = vmatprep.subr.mxu0 0.0
        %667 = vmatpush1.msra.mxu0 %v621
        %668 = vmatprep.subr.mxu0 0.0
        %669 = vmatpush1.msra.mxu0 %v622
        %670 = vmatprep.subr.mxu0 0.0
        %671 = vmatpush1.msra.mxu0 %v623
        %672 = vmatprep.subr.mxu0 0.0
        %673 = vmatpush1.msra.mxu0 %v624
        %674 = vmatprep.subr.mxu0 0.0
        %675 = vmatpush1.msra.mxu0 %v625
        %676 = vmatprep.subr.mxu0 0.0
        %677 = vmatpush1.msra.mxu0 %v626
        %678 = vmatprep.subr.mxu0 0.0
        %679 = vmatpush1.msra.mxu0 %v627
        %680 = vmatprep.subr.mxu0 0.0
        %681 = vmatpush1.msra.mxu0 %v628
        %682 = vmatprep.subr.mxu0 0.0
        %683 = vmatpush1.msra.mxu0 %v629
        %684 = vmatprep.subr.mxu0 0.0
        %685 = vmatpush1.msra.mxu0 %v630
        %686 = vmatprep.subr.mxu0 0.0
        %687 = vmatpush1.msra.mxu0 %v631
        %688 = vmatprep.subr.mxu0 0.0
        %689 = vmatpush1.msra.mxu0 %v632
        %690 = vmatprep.subr.mxu0 0.0
        %691 = vmatpush1.msra.mxu0 %v633
        %692 = vmatprep.subr.mxu0 0.0
        %693 = vmatpush1.msra.mxu0 %v634
        %694 = vmatprep.subr.mxu0 0.0
        %695 = vmatpush1.msra.mxu0 %v635
        %696 = vmatprep.subr.mxu0 0.0
        %697 = vmatpush1.msra.mxu0 %v636
        %698 = vmatprep.subr.mxu0 0.0
        %699 = vmatpush1.msra.mxu0 %v637
        %700 = vmatprep.subr.mxu0 0.0
        %701 = vmatpush1.msra.mxu0 %v638
        %702 = vmatprep.subr.mxu0 0.0
        %703 = vmatpush1.msra.mxu0 %v639
        %704 = vmatprep.mubr.f32.mxu0 %v534
        %705 = vmatmul.mubr.f32.gmra.mrb[0].mxu0 %v500
        %v706 = vpop.f32.mrb[0].mxu0
        %v707 = vadd.f32 0.0, %v706
        %v708 = vpop.f32.mrb[0].mxu0
        %709 = vdwg.mxu0
        %s710 = scalar_lea.vmem %s2, 8
        %v711 = vld [vmem:[%s710] sm:$0xff]
        %vm712 = vcmask 23552
        %v714 = vsel %vm712, %v711, 0
        %vm716 = vcmask 1042432
        %v718 = vsel %vm716, %v707, 0
        %720 = vmatprep.subr.mxu0 0.0
        %721 = vmatpush1.msra.mxu0 %v718
        %722 = vmatprep.subr.mxu0 0.0
        %723 = vmatpush1.msra.mxu0 0.0
        %724 = vmatprep.subr.mxu0 0.0
        %725 = vmatpush1.msra.mxu0 0.0
        %726 = vmatprep.subr.mxu0 0.0
        %727 = vmatpush1.msra.mxu0 0.0
        %728 = vmatprep.subr.mxu0 0.0
        %729 = vmatpush1.msra.mxu0 0.0
        %730 = vmatprep.subr.mxu0 0.0
        %731 = vmatpush1.msra.mxu0 0.0
        %732 = vmatprep.subr.mxu0 0.0
        %733 = vmatpush1.msra.mxu0 0.0
        %734 = vmatprep.subr.mxu0 0.0
        %735 = vmatpush1.msra.mxu0 0.0
        %736 = vmatprep.subr.mxu0 0.0
        %737 = vmatpush1.msra.mxu0 0.0
        %738 = vmatprep.subr.mxu0 0.0
        %739 = vmatpush1.msra.mxu0 0.0
        %740 = vmatprep.subr.mxu0 0.0
        %741 = vmatpush1.msra.mxu0 0.0
        %742 = vmatprep.subr.mxu0 0.0
        %743 = vmatpush1.msra.mxu0 0.0
        %744 = vmatprep.subr.mxu0 0.0
        %745 = vmatpush1.msra.mxu0 0.0
        %746 = vmatprep.subr.mxu0 0.0
        %747 = vmatpush1.msra.mxu0 0.0
        %748 = vmatprep.subr.mxu0 0.0
        %749 = vmatpush1.msra.mxu0 0.0
        %750 = vmatprep.subr.mxu0 0.0
        %751 = vmatpush1.msra.mxu0 0.0
        %752 = vmatprep.subr.mxu0 0.0
        %753 = vmatpush1.msra.mxu0 0.0
        %754 = vmatprep.subr.mxu0 0.0
        %755 = vmatpush1.msra.mxu0 0.0
        %756 = vmatprep.subr.mxu0 0.0
        %757 = vmatpush1.msra.mxu0 0.0
        %758 = vmatprep.subr.mxu0 0.0
        %759 = vmatpush1.msra.mxu0 0.0
        %760 = vmatprep.subr.mxu0 0.0
        %761 = vmatpush1.msra.mxu0 0.0
        %762 = vmatprep.subr.mxu0 0.0
        %763 = vmatpush1.msra.mxu0 0.0
        %764 = vmatprep.subr.mxu0 0.0
        %765 = vmatpush1.msra.mxu0 0.0
        %766 = vmatprep.subr.mxu0 0.0
        %767 = vmatpush1.msra.mxu0 0.0
        %768 = vmatprep.subr.mxu0 0.0
        %769 = vmatpush1.msra.mxu0 0.0
        %770 = vmatprep.subr.mxu0 0.0
        %771 = vmatpush1.msra.mxu0 0.0
        %772 = vmatprep.subr.mxu0 0.0
        %773 = vmatpush1.msra.mxu0 0.0
        %774 = vmatprep.subr.mxu0 0.0
        %775 = vmatpush1.msra.mxu0 0.0
        %776 = vmatprep.subr.mxu0 0.0
        %777 = vmatpush1.msra.mxu0 0.0
        %778 = vmatprep.subr.mxu0 0.0
        %779 = vmatpush1.msra.mxu0 0.0
        %780 = vmatprep.subr.mxu0 0.0
        %781 = vmatpush1.msra.mxu0 0.0
        %782 = vmatprep.subr.mxu0 0.0
        %783 = vmatpush1.msra.mxu0 0.0
        %784 = vmatprep.mubr.f32.mxu0 0.0
        %785 = vmatmul.mubr.f32.gmra.mrb[0].mxu0 %v714
        %v786 = vpop.f32.mrb[0].mxu0
        %v787 = vadd.f32 0.0, %v786
        %v788 = vpop.f32.mrb[0].mxu0
        %789 = vdwg.mxu0
        %v791 = vsel %vm712, %v606, 0
        %v794 = vsel %vm716, %v603, 0
        %796 = vmatprep.subr.mxu0 0.0
        %797 = vmatpush1.msra.mxu0 %v794
        %798 = vmatprep.subr.mxu0 0.0
        %799 = vmatpush1.msra.mxu0 0.0
        %800 = vmatprep.subr.mxu0 0.0
        %801 = vmatpush1.msra.mxu0 0.0
        %802 = vmatprep.subr.mxu0 0.0
        %803 = vmatpush1.msra.mxu0 0.0
        %804 = vmatprep.subr.mxu0 0.0
        %805 = vmatpush1.msra.mxu0 0.0
        %806 = vmatprep.subr.mxu0 0.0
        %807 = vmatpush1.msra.mxu0 0.0
        %808 = vmatprep.subr.mxu0 0.0
        %809 = vmatpush1.msra.mxu0 0.0
        %810 = vmatprep.subr.mxu0 0.0
        %811 = vmatpush1.msra.mxu0 0.0
        %812 = vmatprep.subr.mxu0 0.0
        %813 = vmatpush1.msra.mxu0 0.0
        %814 = vmatprep.subr.mxu0 0.0
        %815 = vmatpush1.msra.mxu0 0.0
        %816 = vmatprep.subr.mxu0 0.0
        %817 = vmatpush1.msra.mxu0 0.0
        %818 = vmatprep.subr.mxu0 0.0
        %819 = vmatpush1.msra.mxu0 0.0
        %820 = vmatprep.subr.mxu0 0.0
        %821 = vmatpush1.msra.mxu0 0.0
        %822 = vmatprep.subr.mxu0 0.0
        %823 = vmatpush1.msra.mxu0 0.0
        %824 = vmatprep.subr.mxu0 0.0
        %825 = vmatpush1.msra.mxu0 0.0
        %826 = vmatprep.subr.mxu0 0.0
        %827 = vmatpush1.msra.mxu0 0.0
        %828 = vmatprep.subr.mxu0 0.0
        %829 = vmatpush1.msra.mxu0 0.0
        %830 = vmatprep.subr.mxu0 0.0
        %831 = vmatpush1.msra.mxu0 0.0
        %832 = vmatprep.subr.mxu0 0.0
        %833 = vmatpush1.msra.mxu0 0.0
        %834 = vmatprep.subr.mxu0 0.0
        %835 = vmatpush1.msra.mxu0 0.0
        %836 = vmatprep.subr.mxu0 0.0
        %837 = vmatpush1.msra.mxu0 0.0
        %838 = vmatprep.subr.mxu0 0.0
        %839 = vmatpush1.msra.mxu0 0.0
        %840 = vmatprep.subr.mxu0 0.0
        %841 = vmatpush1.msra.mxu0 0.0
        %842 = vmatprep.subr.mxu0 0.0
        %843 = vmatpush1.msra.mxu0 0.0
        %844 = vmatprep.subr.mxu0 0.0
        %845 = vmatpush1.msra.mxu0 0.0
        %846 = vmatprep.subr.mxu0 0.0
        %847 = vmatpush1.msra.mxu0 0.0
        %848 = vmatprep.subr.mxu0 0.0
        %849 = vmatpush1.msra.mxu0 0.0
        %850 = vmatprep.subr.mxu0 0.0
        %851 = vmatpush1.msra.mxu0 0.0
        %852 = vmatprep.subr.mxu0 0.0
        %853 = vmatpush1.msra.mxu0 0.0
        %854 = vmatprep.subr.mxu0 0.0
        %855 = vmatpush1.msra.mxu0 0.0
        %856 = vmatprep.subr.mxu0 0.0
        %857 = vmatpush1.msra.mxu0 0.0
        %858 = vmatprep.subr.mxu0 0.0
        %859 = vmatpush1.msra.mxu0 0.0
        %860 = vmatprep.mubr.f32.mxu0 0.0
        %861 = vmatmul.mubr.f32.gmra.mrb[0].mxu0 %v791
        %v862 = vpop.f32.mrb[0].mxu0
        %v863 = vadd.f32 %v787, %v862
        %v864 = vpop.f32.mrb[0].mxu0
        %865 = vdwg.mxu0
        %s866 = scalar_lea.vmem [#allocation2], 512
        %v867 = vld [vmem:[%s866] sm:$0xff]
        %v868 = vld [vmem:[%s866 + $0x8] sm:$0xff]
        %v869 = vld [vmem:[%s866 + $0x10] sm:$0xff]
        %v870 = vld [vmem:[%s866 + $0x18] sm:$0xff]
        %v871 = vld [vmem:[%s866 + $0x20] sm:$0xff]
        %v872 = vld [vmem:[%s866 + $0x28] sm:$0xff]
        %v873 = vld [vmem:[%s866 + $0x30] sm:$0xff]
        %v874 = vld [vmem:[%s866 + $0x38] sm:$0xff]
        %v875 = vld [vmem:[%s866 + $0x40] sm:$0xff]
        %v876 = vld [vmem:[%s866 + $0x48] sm:$0xff]
        %v877 = vld [vmem:[%s866 + $0x50] sm:$0xff]
        %v878 = vld [vmem:[%s866 + $0x58] sm:$0xff]
        %v879 = vld [vmem:[%s866 + $0x60] sm:$0xff]
        %v880 = vld [vmem:[%s866 + $0x68] sm:$0xff]
        %v881 = vld [vmem:[%s866 + $0x70] sm:$0xff]
        %v882 = vld [vmem:[%s866 + $0x78] sm:$0xff]
        %v883 = vld [vmem:[%s866 + $0x80] sm:$0xff]
        %v884 = vld [vmem:[%s866 + $0x88] sm:$0xff]
        %v885 = vld [vmem:[%s866 + $0x90] sm:$0xff]
        %v886 = vld [vmem:[%s866 + $0x98] sm:$0xff]
        %v887 = vld [vmem:[%s866 + $0xa0] sm:$0xff]
        %v888 = vld [vmem:[%s866 + $0xa8] sm:$0xff]
        %v889 = vld [vmem:[%s866 + $0xb0] sm:$0xff]
        %v890 = vld [vmem:[%s866 + $0xb8] sm:$0xff]
        %v891 = vld [vmem:[%s866 + $0xc0] sm:$0xff]
        %v892 = vld [vmem:[%s866 + $0xc8] sm:$0xff]
        %v893 = vld [vmem:[%s866 + $0xd0] sm:$0xff]
        %v894 = vld [vmem:[%s866 + $0xd8] sm:$0xff]
        %v895 = vld [vmem:[%s866 + $0xe0] sm:$0xff]
        %v896 = vld [vmem:[%s866 + $0xe8] sm:$0xff]
        %v897 = vld [vmem:[%s866 + $0xf0] sm:$0xff]
        %v898 = vld [vmem:[%s866 + $0xf8] sm:$0xff]
        %899 = vmatprep.subr.mxu0 0.0
        %900 = vmatpush1.msra.mxu0 %v867
        %901 = vmatprep.subr.mxu0 0.0
        %902 = vmatpush1.msra.mxu0 %v868
        %903 = vmatprep.subr.mxu0 0.0
        %904 = vmatpush1.msra.mxu0 %v869
        %905 = vmatprep.subr.mxu0 0.0
        %906 = vmatpush1.msra.mxu0 %v870
        %907 = vmatprep.subr.mxu0 0.0
        %908 = vmatpush1.msra.mxu0 %v871
        %909 = vmatprep.subr.mxu0 0.0
        %910 = vmatpush1.msra.mxu0 %v872
        %911 = vmatprep.subr.mxu0 0.0
        %912 = vmatpush1.msra.mxu0 %v873
        %913 = vmatprep.subr.mxu0 0.0
        %914 = vmatpush1.msra.mxu0 %v874
        %915 = vmatprep.subr.mxu0 0.0
        %916 = vmatpush1.msra.mxu0 %v875
        %917 = vmatprep.subr.mxu0 0.0
        %918 = vmatpush1.msra.mxu0 %v876
        %919 = vmatprep.subr.mxu0 0.0
        %920 = vmatpush1.msra.mxu0 %v877
        %921 = vmatprep.subr.mxu0 0.0
        %922 = vmatpush1.msra.mxu0 %v878
        %923 = vmatprep.subr.mxu0 0.0
        %924 = vmatpush1.msra.mxu0 %v879
        %925 = vmatprep.subr.mxu0 0.0
        %926 = vmatpush1.msra.mxu0 %v880
        %927 = vmatprep.subr.mxu0 0.0
        %928 = vmatpush1.msra.mxu0 %v881
        %929 = vmatprep.subr.mxu0 0.0
        %930 = vmatpush1.msra.mxu0 %v882
        %931 = vmatprep.subr.mxu0 0.0
        %932 = vmatpush1.msra.mxu0 %v883
        %933 = vmatprep.subr.mxu0 0.0
        %934 = vmatpush1.msra.mxu0 %v884
        %935 = vmatprep.subr.mxu0 0.0
        %936 = vmatpush1.msra.mxu0 %v885
        %937 = vmatprep.subr.mxu0 0.0
        %938 = vmatpush1.msra.mxu0 %v886
        %939 = vmatprep.subr.mxu0 0.0
        %940 = vmatpush1.msra.mxu0 %v887
        %941 = vmatprep.subr.mxu0 0.0
        %942 = vmatpush1.msra.mxu0 %v888
        %943 = vmatprep.subr.mxu0 0.0
        %944 = vmatpush1.msra.mxu0 %v889
        %945 = vmatprep.subr.mxu0 0.0
        %946 = vmatpush1.msra.mxu0 %v890
        %947 = vmatprep.subr.mxu0 0.0
        %948 = vmatpush1.msra.mxu0 %v891
        %949 = vmatprep.subr.mxu0 0.0
        %950 = vmatpush1.msra.mxu0 %v892
        %951 = vmatprep.subr.mxu0 0.0
        %952 = vmatpush1.msra.mxu0 %v893
        %953 = vmatprep.subr.mxu0 0.0
        %954 = vmatpush1.msra.mxu0 %v894
        %955 = vmatprep.subr.mxu0 0.0
        %956 = vmatpush1.msra.mxu0 %v895
        %957 = vmatprep.subr.mxu0 0.0
        %958 = vmatpush1.msra.mxu0 %v896
        %959 = vmatprep.subr.mxu0 0.0
        %960 = vmatpush1.msra.mxu0 %v897
        %961 = vmatprep.subr.mxu0 0.0
        %962 = vmatpush1.msra.mxu0 %v898
        %963 = vmatprep.mubr.f32.mxu0 %v534
        %964 = vmatmul.mubr.f32.gmra.mrb[0].mxu0 %v500
        %v965 = vpop.f32.mrb[0].mxu0
        %v966 = vadd.f32 0.0, %v965
        %v967 = vpop.f32.mrb[0].mxu0
        %968 = vdwg.mxu0
        %s969 = scalar_lea.vmem %s2, 16
        %v970 = vld [vmem:[%s969] sm:$0xff]
        %v972 = vsel %vm712, %v970, 0
        %v975 = vsel %vm716, %v966, 0
        %977 = vmatprep.subr.mxu0 0.0
        %978 = vmatpush1.msra.mxu0 %v975
        %979 = vmatprep.subr.mxu0 0.0
        %980 = vmatpush1.msra.mxu0 0.0
        %981 = vmatprep.subr.mxu0 0.0
        %982 = vmatpush1.msra.mxu0 0.0
        %983 = vmatprep.subr.mxu0 0.0
        %984 = vmatpush1.msra.mxu0 0.0
        %985 = vmatprep.subr.mxu0 0.0
        %986 = vmatpush1.msra.mxu0 0.0
        %987 = vmatprep.subr.mxu0 0.0
        %988 = vmatpush1.msra.mxu0 0.0
        %989 = vmatprep.subr.mxu0 0.0
        %990 = vmatpush1.msra.mxu0 0.0
        %991 = vmatprep.subr.mxu0 0.0
        %992 = vmatpush1.msra.mxu0 0.0
        %993 = vmatprep.subr.mxu0 0.0
        %994 = vmatpush1.msra.mxu0 0.0
        %995 = vmatprep.subr.mxu0 0.0
        %996 = vmatpush1.msra.mxu0 0.0
        %997 = vmatprep.subr.mxu0 0.0
        %998 = vmatpush1.msra.mxu0 0.0
        %999 = vmatprep.subr.mxu0 0.0
        %1000 = vmatpush1.msra.mxu0 0.0
        %1001 = vmatprep.subr.mxu0 0.0
        %1002 = vmatpush1.msra.mxu0 0.0
        %1003 = vmatprep.subr.mxu0 0.0
        %1004 = vmatpush1.msra.mxu0 0.0
        %1005 = vmatprep.subr.mxu0 0.0
        %1006 = vmatpush1.msra.mxu0 0.0
        %1007 = vmatprep.subr.mxu0 0.0
        %1008 = vmatpush1.msra.mxu0 0.0
        %1009 = vmatprep.subr.mxu0 0.0
        %1010 = vmatpush1.msra.mxu0 0.0
        %1011 = vmatprep.subr.mxu0 0.0
        %1012 = vmatpush1.msra.mxu0 0.0
        %1013 = vmatprep.subr.mxu0 0.0
        %1014 = vmatpush1.msra.mxu0 0.0
        %1015 = vmatprep.subr.mxu0 0.0
        %1016 = vmatpush1.msra.mxu0 0.0
        %1017 = vmatprep.subr.mxu0 0.0
        %1018 = vmatpush1.msra.mxu0 0.0
        %1019 = vmatprep.subr.mxu0 0.0
        %1020 = vmatpush1.msra.mxu0 0.0
        %1021 = vmatprep.subr.mxu0 0.0
        %1022 = vmatpush1.msra.mxu0 0.0
        %1023 = vmatprep.subr.mxu0 0.0
        %1024 = vmatpush1.msra.mxu0 0.0
        %1025 = vmatprep.subr.mxu0 0.0
        %1026 = vmatpush1.msra.mxu0 0.0
        %1027 = vmatprep.subr.mxu0 0.0
        %1028 = vmatpush1.msra.mxu0 0.0
        %1029 = vmatprep.subr.mxu0 0.0
        %1030 = vmatpush1.msra.mxu0 0.0
        %1031 = vmatprep.subr.mxu0 0.0
        %1032 = vmatpush1.msra.mxu0 0.0
        %1033 = vmatprep.subr.mxu0 0.0
        %1034 = vmatpush1.msra.mxu0 0.0
        %1035 = vmatprep.subr.mxu0 0.0
        %1036 = vmatpush1.msra.mxu0 0.0
        %1037 = vmatprep.subr.mxu0 0.0
        %1038 = vmatpush1.msra.mxu0 0.0
        %1039 = vmatprep.subr.mxu0 0.0
        %1040 = vmatpush1.msra.mxu0 0.0
        %1041 = vmatprep.mubr.f32.mxu0 0.0
        %1042 = vmatmul.mubr.f32.gmra.mrb[0].mxu0 %v972
        %v1043 = vpop.f32.mrb[0].mxu0
        %v1044 = vadd.f32 0.0, %v1043
        %v1045 = vpop.f32.mrb[0].mxu0
        %1046 = vdwg.mxu0
        %v1047 = vadd.f32 %v863, %v1044
        %s1048 = scalar_lea.vmem [#allocation2], 768
        %v1049 = vld [vmem:[%s1048] sm:$0xff]
        %v1050 = vld [vmem:[%s1048 + $0x8] sm:$0xff]
        %v1051 = vld [vmem:[%s1048 + $0x10] sm:$0xff]
        %v1052 = vld [vmem:[%s1048 + $0x18] sm:$0xff]
        %v1053 = vld [vmem:[%s1048 + $0x20] sm:$0xff]
        %v1054 = vld [vmem:[%s1048 + $0x28] sm:$0xff]
        %v1055 = vld [vmem:[%s1048 + $0x30] sm:$0xff]
        %v1056 = vld [vmem:[%s1048 + $0x38] sm:$0xff]
        %v1057 = vld [vmem:[%s1048 + $0x40] sm:$0xff]
        %v1058 = vld [vmem:[%s1048 + $0x48] sm:$0xff]
        %v1059 = vld [vmem:[%s1048 + $0x50] sm:$0xff]
        %v1060 = vld [vmem:[%s1048 + $0x58] sm:$0xff]
        %v1061 = vld [vmem:[%s1048 + $0x60] sm:$0xff]
        %v1062 = vld [vmem:[%s1048 + $0x68] sm:$0xff]
        %v1063 = vld [vmem:[%s1048 + $0x70] sm:$0xff]
        %v1064 = vld [vmem:[%s1048 + $0x78] sm:$0xff]
        %v1065 = vld [vmem:[%s1048 + $0x80] sm:$0xff]
        %v1066 = vld [vmem:[%s1048 + $0x88] sm:$0xff]
        %v1067 = vld [vmem:[%s1048 + $0x90] sm:$0xff]
        %v1068 = vld [vmem:[%s1048 + $0x98] sm:$0xff]
        %v1069 = vld [vmem:[%s1048 + $0xa0] sm:$0xff]
        %v1070 = vld [vmem:[%s1048 + $0xa8] sm:$0xff]
        %v1071 = vld [vmem:[%s1048 + $0xb0] sm:$0xff]
        %v1072 = vld [vmem:[%s1048 + $0xb8] sm:$0xff]
        %v1073 = vld [vmem:[%s1048 + $0xc0] sm:$0xff]
        %v1074 = vld [vmem:[%s1048 + $0xc8] sm:$0xff]
        %v1075 = vld [vmem:[%s1048 + $0xd0] sm:$0xff]
        %v1076 = vld [vmem:[%s1048 + $0xd8] sm:$0xff]
        %v1077 = vld [vmem:[%s1048 + $0xe0] sm:$0xff]
        %v1078 = vld [vmem:[%s1048 + $0xe8] sm:$0xff]
        %v1079 = vld [vmem:[%s1048 + $0xf0] sm:$0xff]
        %v1080 = vld [vmem:[%s1048 + $0xf8] sm:$0xff]
        %1081 = vmatprep.subr.mxu0 0.0
        %1082 = vmatpush1.msra.mxu0 %v1049
        %1083 = vmatprep.subr.mxu0 0.0
        %1084 = vmatpush1.msra.mxu0 %v1050
        %1085 = vmatprep.subr.mxu0 0.0
        %1086 = vmatpush1.msra.mxu0 %v1051
        %1087 = vmatprep.subr.mxu0 0.0
        %1088 = vmatpush1.msra.mxu0 %v1052
        %1089 = vmatprep.subr.mxu0 0.0
        %1090 = vmatpush1.msra.mxu0 %v1053
        %1091 = vmatprep.subr.mxu0 0.0
        %1092 = vmatpush1.msra.mxu0 %v1054
        %1093 = vmatprep.subr.mxu0 0.0
        %1094 = vmatpush1.msra.mxu0 %v1055
        %1095 = vmatprep.subr.mxu0 0.0
        %1096 = vmatpush1.msra.mxu0 %v1056
        %1097 = vmatprep.subr.mxu0 0.0
        %1098 = vmatpush1.msra.mxu0 %v1057
        %1099 = vmatprep.subr.mxu0 0.0
        %1100 = vmatpush1.msra.mxu0 %v1058
        %1101 = vmatprep.subr.mxu0 0.0
        %1102 = vmatpush1.msra.mxu0 %v1059
        %1103 = vmatprep.subr.mxu0 0.0
        %1104 = vmatpush1.msra.mxu0 %v1060
        %1105 = vmatprep.subr.mxu0 0.0
        %1106 = vmatpush1.msra.mxu0 %v1061
        %1107 = vmatprep.subr.mxu0 0.0
        %1108 = vmatpush1.msra.mxu0 %v1062
        %1109 = vmatprep.subr.mxu0 0.0
        %1110 = vmatpush1.msra.mxu0 %v1063
        %1111 = vmatprep.subr.mxu0 0.0
        %1112 = vmatpush1.msra.mxu0 %v1064
        %1113 = vmatprep.subr.mxu0 0.0
        %1114 = vmatpush1.msra.mxu0 %v1065
        %1115 = vmatprep.subr.mxu0 0.0
        %1116 = vmatpush1.msra.mxu0 %v1066
        %1117 = vmatprep.subr.mxu0 0.0
        %1118 = vmatpush1.msra.mxu0 %v1067
        %1119 = vmatprep.subr.mxu0 0.0
        %1120 = vmatpush1.msra.mxu0 %v1068
        %1121 = vmatprep.subr.mxu0 0.0
        %1122 = vmatpush1.msra.mxu0 %v1069
        %1123 = vmatprep.subr.mxu0 0.0
        %1124 = vmatpush1.msra.mxu0 %v1070
        %1125 = vmatprep.subr.mxu0 0.0
        %1126 = vmatpush1.msra.mxu0 %v1071
        %1127 = vmatprep.subr.mxu0 0.0
        %1128 = vmatpush1.msra.mxu0 %v1072
        %1129 = vmatprep.subr.mxu0 0.0
        %1130 = vmatpush1.msra.mxu0 %v1073
        %1131 = vmatprep.subr.mxu0 0.0
        %1132 = vmatpush1.msra.mxu0 %v1074
        %1133 = vmatprep.subr.mxu0 0.0
        %1134 = vmatpush1.msra.mxu0 %v1075
        %1135 = vmatprep.subr.mxu0 0.0
        %1136 = vmatpush1.msra.mxu0 %v1076
        %1137 = vmatprep.subr.mxu0 0.0
        %1138 = vmatpush1.msra.mxu0 %v1077
        %1139 = vmatprep.subr.mxu0 0.0
        %1140 = vmatpush1.msra.mxu0 %v1078
        %1141 = vmatprep.subr.mxu0 0.0
        %1142 = vmatpush1.msra.mxu0 %v1079
        %1143 = vmatprep.subr.mxu0 0.0
        %1144 = vmatpush1.msra.mxu0 %v1080
        %1145 = vmatprep.mubr.f32.mxu0 %v534
        %1146 = vmatmul.mubr.f32.gmra.mrb[0].mxu0 %v500
        %v1147 = vpop.f32.mrb[0].mxu0
        %v1148 = vadd.f32 0.0, %v1147
        %v1149 = vpop.f32.mrb[0].mxu0
        %1150 = vdwg.mxu0
        %s1151 = scalar_lea.vmem %s2, 24
        %v1152 = vld [vmem:[%s1151] sm:$0xff]
        %v1154 = vsel %vm712, %v1152, 0
        %v1157 = vsel %vm716, %v1148, 0
        %1159 = vmatprep.subr.mxu0 0.0
        %1160 = vmatpush1.msra.mxu0 %v1157
        %1161 = vmatprep.subr.mxu0 0.0
        %1162 = vmatpush1.msra.mxu0 0.0
        %1163 = vmatprep.subr.mxu0 0.0
        %1164 = vmatpush1.msra.mxu0 0.0
        %1165 = vmatprep.subr.mxu0 0.0
        %1166 = vmatpush1.msra.mxu0 0.0
        %1167 = vmatprep.subr.mxu0 0.0
        %1168 = vmatpush1.msra.mxu0 0.0
        %1169 = vmatprep.subr.mxu0 0.0
        %1170 = vmatpush1.msra.mxu0 0.0
        %1171 = vmatprep.subr.mxu0 0.0
        %1172 = vmatpush1.msra.mxu0 0.0
        %1173 = vmatprep.subr.mxu0 0.0
        %1174 = vmatpush1.msra.mxu0 0.0
        %1175 = vmatprep.subr.mxu0 0.0
        %1176 = vmatpush1.msra.mxu0 0.0
        %1177 = vmatprep.subr.mxu0 0.0
        %1178 = vmatpush1.msra.mxu0 0.0
        %1179 = vmatprep.subr.mxu0 0.0
        %1180 = vmatpush1.msra.mxu0 0.0
        %1181 = vmatprep.subr.mxu0 0.0
        %1182 = vmatpush1.msra.mxu0 0.0
        %1183 = vmatprep.subr.mxu0 0.0
        %1184 = vmatpush1.msra.mxu0 0.0
        %1185 = vmatprep.subr.mxu0 0.0
        %1186 = vmatpush1.msra.mxu0 0.0
        %1187 = vmatprep.subr.mxu0 0.0
        %1188 = vmatpush1.msra.mxu0 0.0
        %1189 = vmatprep.subr.mxu0 0.0
        %1190 = vmatpush1.msra.mxu0 0.0
        %1191 = vmatprep.subr.mxu0 0.0
        %1192 = vmatpush1.msra.mxu0 0.0
        %1193 = vmatprep.subr.mxu0 0.0
        %1194 = vmatpush1.msra.mxu0 0.0
        %1195 = vmatprep.subr.mxu0 0.0
        %1196 = vmatpush1.msra.mxu0 0.0
        %1197 = vmatprep.subr.mxu0 0.0
        %1198 = vmatpush1.msra.mxu0 0.0
        %1199 = vmatprep.subr.mxu0 0.0
        %1200 = vmatpush1.msra.mxu0 0.0
        %1201 = vmatprep.subr.mxu0 0.0
        %1202 = vmatpush1.msra.mxu0 0.0
        %1203 = vmatprep.subr.mxu0 0.0
        %1204 = vmatpush1.msra.mxu0 0.0
        %1205 = vmatprep.subr.mxu0 0.0
        %1206 = vmatpush1.msra.mxu0 0.0
        %1207 = vmatprep.subr.mxu0 0.0
        %1208 = vmatpush1.msra.mxu0 0.0
        %1209 = vmatprep.subr.mxu0 0.0
        %1210 = vmatpush1.msra.mxu0 0.0
        %1211 = vmatprep.subr.mxu0 0.0
        %1212 = vmatpush1.msra.mxu0 0.0
        %1213 = vmatprep.subr.mxu0 0.0
        %1214 = vmatpush1.msra.mxu0 0.0
        %1215 = vmatprep.subr.mxu0 0.0
        %1216 = vmatpush1.msra.mxu0 0.0
        %1217 = vmatprep.subr.mxu0 0.0
        %1218 = vmatpush1.msra.mxu0 0.0
        %1219 = vmatprep.subr.mxu0 0.0
        %1220 = vmatpush1.msra.mxu0 0.0
        %1221 = vmatprep.subr.mxu0 0.0
        %1222 = vmatpush1.msra.mxu0 0.0
        %1223 = vmatprep.mubr.f32.mxu0 0.0
        %1224 = vmatmul.mubr.f32.gmra.mrb[0].mxu0 %v1154
        %v1225 = vpop.f32.mrb[0].mxu0
        %v1226 = vadd.f32 0.0, %v1225
        %v1227 = vpop.f32.mrb[0].mxu0
        %1228 = vdwg.mxu0
        %v1229 = vadd.f32 %v1047, %v1226
        %s1230 = scalar_lea.vmem [#allocation2], 1024
        %v1231 = vld [vmem:[%s1230] sm:$0xff]
        %v1232 = vld [vmem:[%s1230 + $0x8] sm:$0xff]
        %v1233 = vld [vmem:[%s1230 + $0x10] sm:$0xff]
        %v1234 = vld [vmem:[%s1230 + $0x18] sm:$0xff]
        %v1235 = vld [vmem:[%s1230 + $0x20] sm:$0xff]
        %v1236 = vld [vmem:[%s1230 + $0x28] sm:$0xff]
        %v1237 = vld [vmem:[%s1230 + $0x30] sm:$0xff]
        %v1238 = vld [vmem:[%s1230 + $0x38] sm:$0xff]
        %v1239 = vld [vmem:[%s1230 + $0x40] sm:$0xff]
        %v1240 = vld [vmem:[%s1230 + $0x48] sm:$0xff]
        %v1241 = vld [vmem:[%s1230 + $0x50] sm:$0xff]
        %v1242 = vld [vmem:[%s1230 + $0x58] sm:$0xff]
        %v1243 = vld [vmem:[%s1230 + $0x60] sm:$0xff]
        %v1244 = vld [vmem:[%s1230 + $0x68] sm:$0xff]
        %v1245 = vld [vmem:[%s1230 + $0x70] sm:$0xff]
        %v1246 = vld [vmem:[%s1230 + $0x78] sm:$0xff]
        %v1247 = vld [vmem:[%s1230 + $0x80] sm:$0xff]
        %v1248 = vld [vmem:[%s1230 + $0x88] sm:$0xff]
        %v1249 = vld [vmem:[%s1230 + $0x90] sm:$0xff]
        %v1250 = vld [vmem:[%s1230 + $0x98] sm:$0xff]
        %v1251 = vld [vmem:[%s1230 + $0xa0] sm:$0xff]
        %v1252 = vld [vmem:[%s1230 + $0xa8] sm:$0xff]
        %v1253 = vld [vmem:[%s1230 + $0xb0] sm:$0xff]
        %v1254 = vld [vmem:[%s1230 + $0xb8] sm:$0xff]
        %v1255 = vld [vmem:[%s1230 + $0xc0] sm:$0xff]
        %v1256 = vld [vmem:[%s1230 + $0xc8] sm:$0xff]
        %v1257 = vld [vmem:[%s1230 + $0xd0] sm:$0xff]
        %v1258 = vld [vmem:[%s1230 + $0xd8] sm:$0xff]
        %v1259 = vld [vmem:[%s1230 + $0xe0] sm:$0xff]
        %v1260 = vld [vmem:[%s1230 + $0xe8] sm:$0xff]
        %v1261 = vld [vmem:[%s1230 + $0xf0] sm:$0xff]
        %v1262 = vld [vmem:[%s1230 + $0xf8] sm:$0xff]
        %1263 = vmatprep.subr.mxu0 0.0
        %1264 = vmatpush1.msra.mxu0 %v1231
        %1265 = vmatprep.subr.mxu0 0.0
        %1266 = vmatpush1.msra.mxu0 %v1232
        %1267 = vmatprep.subr.mxu0 0.0
        %1268 = vmatpush1.msra.mxu0 %v1233
        %1269 = vmatprep.subr.mxu0 0.0
        %1270 = vmatpush1.msra.mxu0 %v1234
        %1271 = vmatprep.subr.mxu0 0.0
        %1272 = vmatpush1.msra.mxu0 %v1235
        %1273 = vmatprep.subr.mxu0 0.0
        %1274 = vmatpush1.msra.mxu0 %v1236
        %1275 = vmatprep.subr.mxu0 0.0
        %1276 = vmatpush1.msra.mxu0 %v1237
        %1277 = vmatprep.subr.mxu0 0.0
        %1278 = vmatpush1.msra.mxu0 %v1238
        %1279 = vmatprep.subr.mxu0 0.0
        %1280 = vmatpush1.msra.mxu0 %v1239
        %1281 = vmatprep.subr.mxu0 0.0
        %1282 = vmatpush1.msra.mxu0 %v1240
        %1283 = vmatprep.subr.mxu0 0.0
        %1284 = vmatpush1.msra.mxu0 %v1241
        %1285 = vmatprep.subr.mxu0 0.0
        %1286 = vmatpush1.msra.mxu0 %v1242
        %1287 = vmatprep.subr.mxu0 0.0
        %1288 = vmatpush1.msra.mxu0 %v1243
        %1289 = vmatprep.subr.mxu0 0.0
        %1290 = vmatpush1.msra.mxu0 %v1244
        %1291 = vmatprep.subr.mxu0 0.0
        %1292 = vmatpush1.msra.mxu0 %v1245
        %1293 = vmatprep.subr.mxu0 0.0
        %1294 = vmatpush1.msra.mxu0 %v1246
        %1295 = vmatprep.subr.mxu0 0.0
        %1296 = vmatpush1.msra.mxu0 %v1247
        %1297 = vmatprep.subr.mxu0 0.0
        %1298 = vmatpush1.msra.mxu0 %v1248
        %1299 = vmatprep.subr.mxu0 0.0
        %1300 = vmatpush1.msra.mxu0 %v1249
        %1301 = vmatprep.subr.mxu0 0.0
        %1302 = vmatpush1.msra.mxu0 %v1250
        %1303 = vmatprep.subr.mxu0 0.0
        %1304 = vmatpush1.msra.mxu0 %v1251
        %1305 = vmatprep.subr.mxu0 0.0
        %1306 = vmatpush1.msra.mxu0 %v1252
        %1307 = vmatprep.subr.mxu0 0.0
        %1308 = vmatpush1.msra.mxu0 %v1253
        %1309 = vmatprep.subr.mxu0 0.0
        %1310 = vmatpush1.msra.mxu0 %v1254
        %1311 = vmatprep.subr.mxu0 0.0
        %1312 = vmatpush1.msra.mxu0 %v1255
        %1313 = vmatprep.subr.mxu0 0.0
        %1314 = vmatpush1.msra.mxu0 %v1256
        %1315 = vmatprep.subr.mxu0 0.0
        %1316 = vmatpush1.msra.mxu0 %v1257
        %1317 = vmatprep.subr.mxu0 0.0
        %1318 = vmatpush1.msra.mxu0 %v1258
        %1319 = vmatprep.subr.mxu0 0.0
        %1320 = vmatpush1.msra.mxu0 %v1259
        %1321 = vmatprep.subr.mxu0 0.0
        %1322 = vmatpush1.msra.mxu0 %v1260
        %1323 = vmatprep.subr.mxu0 0.0
        %1324 = vmatpush1.msra.mxu0 %v1261
        %1325 = vmatprep.subr.mxu0 0.0
        %1326 = vmatpush1.msra.mxu0 %v1262
        %1327 = vmatprep.mubr.f32.mxu0 %v534
        %1328 = vmatmul.mubr.f32.gmra.mrb[0].mxu0 %v500
        %v1329 = vpop.f32.mrb[0].mxu0
        %v1330 = vadd.f32 0.0, %v1329
        %v1331 = vpop.f32.mrb[0].mxu0
        %1332 = vdwg.mxu0
        %s1333 = scalar_lea.vmem %s2, 32
        %v1334 = vld [vmem:[%s1333] sm:$0xff]
        %v1336 = vsel %vm712, %v1334, 0
        %v1339 = vsel %vm716, %v1330, 0
        %1341 = vmatprep.subr.mxu0 0.0
        %1342 = vmatpush1.msra.mxu0 %v1339
        %1343 = vmatprep.subr.mxu0 0.0
        %1344 = vmatpush1.msra.mxu0 0.0
        %1345 = vmatprep.subr.mxu0 0.0
        %1346 = vmatpush1.msra.mxu0 0.0
        %1347 = vmatprep.subr.mxu0 0.0
        %1348 = vmatpush1.msra.mxu0 0.0
        %1349 = vmatprep.subr.mxu0 0.0
        %1350 = vmatpush1.msra.mxu0 0.0
        %1351 = vmatprep.subr.mxu0 0.0
        %1352 = vmatpush1.msra.mxu0 0.0
        %1353 = vmatprep.subr.mxu0 0.0
        %1354 = vmatpush1.msra.mxu0 0.0
        %1355 = vmatprep.subr.mxu0 0.0
        %1356 = vmatpush1.msra.mxu0 0.0
        %1357 = vmatprep.subr.mxu0 0.0
        %1358 = vmatpush1.msra.mxu0 0.0
        %1359 = vmatprep.subr.mxu0 0.0
        %1360 = vmatpush1.msra.mxu0 0.0
        %1361 = vmatprep.subr.mxu0 0.0
        %1362 = vmatpush1.msra.mxu0 0.0
        %1363 = vmatprep.subr.mxu0 0.0
        %1364 = vmatpush1.msra.mxu0 0.0
        %1365 = vmatprep.subr.mxu0 0.0
        %1366 = vmatpush1.msra.mxu0 0.0
        %1367 = vmatprep.subr.mxu0 0.0
        %1368 = vmatpush1.msra.mxu0 0.0
        %1369 = vmatprep.subr.mxu0 0.0
        %1370 = vmatpush1.msra.mxu0 0.0
        %1371 = vmatprep.subr.mxu0 0.0
        %1372 = vmatpush1.msra.mxu0 0.0
        %1373 = vmatprep.subr.mxu0 0.0
        %1374 = vmatpush1.msra.mxu0 0.0
        %1375 = vmatprep.subr.mxu0 0.0
        %1376 = vmatpush1.msra.mxu0 0.0
        %1377 = vmatprep.subr.mxu0 0.0
        %1378 = vmatpush1.msra.mxu0 0.0
        %1379 = vmatprep.subr.mxu0 0.0
        %1380 = vmatpush1.msra.mxu0 0.0
        %1381 = vmatprep.subr.mxu0 0.0
        %1382 = vmatpush1.msra.mxu0 0.0
        %1383 = vmatprep.subr.mxu0 0.0
        %1384 = vmatpush1.msra.mxu0 0.0
        %1385 = vmatprep.subr.mxu0 0.0
        %1386 = vmatpush1.msra.mxu0 0.0
        %1387 = vmatprep.subr.mxu0 0.0
        %1388 = vmatpush1.msra.mxu0 0.0
        %1389 = vmatprep.subr.mxu0 0.0
        %1390 = vmatpush1.msra.mxu0 0.0
        %1391 = vmatprep.subr.mxu0 0.0
        %1392 = vmatpush1.msra.mxu0 0.0
        %1393 = vmatprep.subr.mxu0 0.0
        %1394 = vmatpush1.msra.mxu0 0.0
        %1395 = vmatprep.subr.mxu0 0.0
        %1396 = vmatpush1.msra.mxu0 0.0
        %1397 = vmatprep.subr.mxu0 0.0
        %1398 = vmatpush1.msra.mxu0 0.0
        %1399 = vmatprep.subr.mxu0 0.0
        %1400 = vmatpush1.msra.mxu0 0.0
        %1401 = vmatprep.subr.mxu0 0.0
        %1402 = vmatpush1.msra.mxu0 0.0
        %1403 = vmatprep.subr.mxu0 0.0
        %1404 = vmatpush1.msra.mxu0 0.0
        %1405 = vmatprep.mubr.f32.mxu0 0.0
        %1406 = vmatmul.mubr.f32.gmra.mrb[0].mxu0 %v1336
        %v1407 = vpop.f32.mrb[0].mxu0
        %v1408 = vadd.f32 0.0, %v1407
        %v1409 = vpop.f32.mrb[0].mxu0
        %1410 = vdwg.mxu0
        %v1411 = vadd.f32 %v1229, %v1408
        %s1412 = scalar_lea.vmem [#allocation2], 1280
        %v1413 = vld [vmem:[%s1412] sm:$0xff]
        %v1414 = vld [vmem:[%s1412 + $0x8] sm:$0xff]
        %v1415 = vld [vmem:[%s1412 + $0x10] sm:$0xff]
        %v1416 = vld [vmem:[%s1412 + $0x18] sm:$0xff]
        %v1417 = vld [vmem:[%s1412 + $0x20] sm:$0xff]
        %v1418 = vld [vmem:[%s1412 + $0x28] sm:$0xff]
        %v1419 = vld [vmem:[%s1412 + $0x30] sm:$0xff]
        %v1420 = vld [vmem:[%s1412 + $0x38] sm:$0xff]
        %v1421 = vld [vmem:[%s1412 + $0x40] sm:$0xff]
        %v1422 = vld [vmem:[%s1412 + $0x48] sm:$0xff]
        %v1423 = vld [vmem:[%s1412 + $0x50] sm:$0xff]
        %v1424 = vld [vmem:[%s1412 + $0x58] sm:$0xff]
        %v1425 = vld [vmem:[%s1412 + $0x60] sm:$0xff]
        %v1426 = vld [vmem:[%s1412 + $0x68] sm:$0xff]
        %v1427 = vld [vmem:[%s1412 + $0x70] sm:$0xff]
        %v1428 = vld [vmem:[%s1412 + $0x78] sm:$0xff]
        %v1429 = vld [vmem:[%s1412 + $0x80] sm:$0xff]
        %v1430 = vld [vmem:[%s1412 + $0x88] sm:$0xff]
        %v1431 = vld [vmem:[%s1412 + $0x90] sm:$0xff]
        %v1432 = vld [vmem:[%s1412 + $0x98] sm:$0xff]
        %v1433 = vld [vmem:[%s1412 + $0xa0] sm:$0xff]
        %v1434 = vld [vmem:[%s1412 + $0xa8] sm:$0xff]
        %v1435 = vld [vmem:[%s1412 + $0xb0] sm:$0xff]
        %v1436 = vld [vmem:[%s1412 + $0xb8] sm:$0xff]
        %v1437 = vld [vmem:[%s1412 + $0xc0] sm:$0xff]
        %v1438 = vld [vmem:[%s1412 + $0xc8] sm:$0xff]
        %v1439 = vld [vmem:[%s1412 + $0xd0] sm:$0xff]
        %v1440 = vld [vmem:[%s1412 + $0xd8] sm:$0xff]
        %v1441 = vld [vmem:[%s1412 + $0xe0] sm:$0xff]
        %v1442 = vld [vmem:[%s1412 + $0xe8] sm:$0xff]
        %v1443 = vld [vmem:[%s1412 + $0xf0] sm:$0xff]
        %v1444 = vld [vmem:[%s1412 + $0xf8] sm:$0xff]
        %1445 = vmatprep.subr.mxu0 0.0
        %1446 = vmatpush1.msra.mxu0 %v1413
        %1447 = vmatprep.subr.mxu0 0.0
        %1448 = vmatpush1.msra.mxu0 %v1414
        %1449 = vmatprep.subr.mxu0 0.0
        %1450 = vmatpush1.msra.mxu0 %v1415
        %1451 = vmatprep.subr.mxu0 0.0
        %1452 = vmatpush1.msra.mxu0 %v1416
        %1453 = vmatprep.subr.mxu0 0.0
        %1454 = vmatpush1.msra.mxu0 %v1417
        %1455 = vmatprep.subr.mxu0 0.0
        %1456 = vmatpush1.msra.mxu0 %v1418
        %1457 = vmatprep.subr.mxu0 0.0
        %1458 = vmatpush1.msra.mxu0 %v1419
        %1459 = vmatprep.subr.mxu0 0.0
        %1460 = vmatpush1.msra.mxu0 %v1420
        %1461 = vmatprep.subr.mxu0 0.0
        %1462 = vmatpush1.msra.mxu0 %v1421
        %1463 = vmatprep.subr.mxu0 0.0
        %1464 = vmatpush1.msra.mxu0 %v1422
        %1465 = vmatprep.subr.mxu0 0.0
        %1466 = vmatpush1.msra.mxu0 %v1423
        %1467 = vmatprep.subr.mxu0 0.0
        %1468 = vmatpush1.msra.mxu0 %v1424
        %1469 = vmatprep.subr.mxu0 0.0
        %1470 = vmatpush1.msra.mxu0 %v1425
        %1471 = vmatprep.subr.mxu0 0.0
        %1472 = vmatpush1.msra.mxu0 %v1426
        %1473 = vmatprep.subr.mxu0 0.0
        %1474 = vmatpush1.msra.mxu0 %v1427
        %1475 = vmatprep.subr.mxu0 0.0
        %1476 = vmatpush1.msra.mxu0 %v1428
        %1477 = vmatprep.subr.mxu0 0.0
        %1478 = vmatpush1.msra.mxu0 %v1429
        %1479 = vmatprep.subr.mxu0 0.0
        %1480 = vmatpush1.msra.mxu0 %v1430
        %1481 = vmatprep.subr.mxu0 0.0
        %1482 = vmatpush1.msra.mxu0 %v1431
        %1483 = vmatprep.subr.mxu0 0.0
        %1484 = vmatpush1.msra.mxu0 %v1432
        %1485 = vmatprep.subr.mxu0 0.0
        %1486 = vmatpush1.msra.mxu0 %v1433
        %1487 = vmatprep.subr.mxu0 0.0
        %1488 = vmatpush1.msra.mxu0 %v1434
        %1489 = vmatprep.subr.mxu0 0.0
        %1490 = vmatpush1.msra.mxu0 %v1435
        %1491 = vmatprep.subr.mxu0 0.0
        %1492 = vmatpush1.msra.mxu0 %v1436
        %1493 = vmatprep.subr.mxu0 0.0
        %1494 = vmatpush1.msra.mxu0 %v1437
        %1495 = vmatprep.subr.mxu0 0.0
        %1496 = vmatpush1.msra.mxu0 %v1438
        %1497 = vmatprep.subr.mxu0 0.0
        %1498 = vmatpush1.msra.mxu0 %v1439
        %1499 = vmatprep.subr.mxu0 0.0
        %1500 = vmatpush1.msra.mxu0 %v1440
        %1501 = vmatprep.subr.mxu0 0.0
        %1502 = vmatpush1.msra.mxu0 %v1441
        %1503 = vmatprep.subr.mxu0 0.0
        %1504 = vmatpush1.msra.mxu0 %v1442
        %1505 = vmatprep.subr.mxu0 0.0
        %1506 = vmatpush1.msra.mxu0 %v1443
        %1507 = vmatprep.subr.mxu0 0.0
        %1508 = vmatpush1.msra.mxu0 %v1444
        %1509 = vmatprep.mubr.f32.mxu0 %v534
        %1510 = vmatmul.mubr.f32.gmra.mrb[0].mxu0 %v500
        %v1511 = vpop.f32.mrb[0].mxu0
        %v1512 = vadd.f32 0.0, %v1511
        %v1513 = vpop.f32.mrb[0].mxu0
        %1514 = vdwg.mxu0
        %s1515 = scalar_lea.vmem %s2, 40
        %v1516 = vld [vmem:[%s1515] sm:$0xff]
        %v1518 = vsel %vm712, %v1516, 0
        %v1521 = vsel %vm716, %v1512, 0
        %1523 = vmatprep.subr.mxu0 0.0
        %1524 = vmatpush1.msra.mxu0 %v1521
        %1525 = vmatprep.subr.mxu0 0.0
        %1526 = vmatpush1.msra.mxu0 0.0
        %1527 = vmatprep.subr.mxu0 0.0
        %1528 = vmatpush1.msra.mxu0 0.0
        %1529 = vmatprep.subr.mxu0 0.0
        %1530 = vmatpush1.msra.mxu0 0.0
        %1531 = vmatprep.subr.mxu0 0.0
        %1532 = vmatpush1.msra.mxu0 0.0
        %1533 = vmatprep.subr.mxu0 0.0
        %1534 = vmatpush1.msra.mxu0 0.0
        %1535 = vmatprep.subr.mxu0 0.0
        %1536 = vmatpush1.msra.mxu0 0.0
        %1537 = vmatprep.subr.mxu0 0.0
        %1538 = vmatpush1.msra.mxu0 0.0
        %1539 = vmatprep.subr.mxu0 0.0
        %1540 = vmatpush1.msra.mxu0 0.0
        %1541 = vmatprep.subr.mxu0 0.0
        %1542 = vmatpush1.msra.mxu0 0.0
        %1543 = vmatprep.subr.mxu0 0.0
        %1544 = vmatpush1.msra.mxu0 0.0
        %1545 = vmatprep.subr.mxu0 0.0
        %1546 = vmatpush1.msra.mxu0 0.0
        %1547 = vmatprep.subr.mxu0 0.0
        %1548 = vmatpush1.msra.mxu0 0.0
        %1549 = vmatprep.subr.mxu0 0.0
        %1550 = vmatpush1.msra.mxu0 0.0
        %1551 = vmatprep.subr.mxu0 0.0
        %1552 = vmatpush1.msra.mxu0 0.0
        %1553 = vmatprep.subr.mxu0 0.0
        %1554 = vmatpush1.msra.mxu0 0.0
        %1555 = vmatprep.subr.mxu0 0.0
        %1556 = vmatpush1.msra.mxu0 0.0
        %1557 = vmatprep.subr.mxu0 0.0
        %1558 = vmatpush1.msra.mxu0 0.0
        %1559 = vmatprep.subr.mxu0 0.0
        %1560 = vmatpush1.msra.mxu0 0.0
        %1561 = vmatprep.subr.mxu0 0.0
        %1562 = vmatpush1.msra.mxu0 0.0
        %1563 = vmatprep.subr.mxu0 0.0
        %1564 = vmatpush1.msra.mxu0 0.0
        %1565 = vmatprep.subr.mxu0 0.0
        %1566 = vmatpush1.msra.mxu0 0.0
        %1567 = vmatprep.subr.mxu0 0.0
        %1568 = vmatpush1.msra.mxu0 0.0
        %1569 = vmatprep.subr.mxu0 0.0
        %1570 = vmatpush1.msra.mxu0 0.0
        %1571 = vmatprep.subr.mxu0 0.0
        %1572 = vmatpush1.msra.mxu0 0.0
        %1573 = vmatprep.subr.mxu0 0.0
        %1574 = vmatpush1.msra.mxu0 0.0
        %1575 = vmatprep.subr.mxu0 0.0
        %1576 = vmatpush1.msra.mxu0 0.0
        %1577 = vmatprep.subr.mxu0 0.0
        %1578 = vmatpush1.msra.mxu0 0.0
        %1579 = vmatprep.subr.mxu0 0.0
        %1580 = vmatpush1.msra.mxu0 0.0
        %1581 = vmatprep.subr.mxu0 0.0
        %1582 = vmatpush1.msra.mxu0 0.0
        %1583 = vmatprep.subr.mxu0 0.0
        %1584 = vmatpush1.msra.mxu0 0.0
        %1585 = vmatprep.subr.mxu0 0.0
        %1586 = vmatpush1.msra.mxu0 0.0
        %1587 = vmatprep.mubr.f32.mxu0 0.0
        %1588 = vmatmul.mubr.f32.gmra.mrb[0].mxu0 %v1518
        %v1589 = vpop.f32.mrb[0].mxu0
        %v1590 = vadd.f32 0.0, %v1589
        %v1591 = vpop.f32.mrb[0].mxu0
        %1592 = vdwg.mxu0
        %v1593 = vadd.f32 %v1411, %v1590
        %s1594 = scalar_lea.vmem [#allocation2], 1536
        %v1595 = vld [vmem:[%s1594] sm:$0xff]
        %v1596 = vld [vmem:[%s1594 + $0x8] sm:$0xff]
        %v1597 = vld [vmem:[%s1594 + $0x10] sm:$0xff]
        %v1598 = vld [vmem:[%s1594 + $0x18] sm:$0xff]
        %v1599 = vld [vmem:[%s1594 + $0x20] sm:$0xff]
        %v1600 = vld [vmem:[%s1594 + $0x28] sm:$0xff]
        %v1601 = vld [vmem:[%s1594 + $0x30] sm:$0xff]
        %v1602 = vld [vmem:[%s1594 + $0x38] sm:$0xff]
        %v1603 = vld [vmem:[%s1594 + $0x40] sm:$0xff]
        %v1604 = vld [vmem:[%s1594 + $0x48] sm:$0xff]
        %v1605 = vld [vmem:[%s1594 + $0x50] sm:$0xff]
        %v1606 = vld [vmem:[%s1594 + $0x58] sm:$0xff]
        %v1607 = vld [vmem:[%s1594 + $0x60] sm:$0xff]
        %v1608 = vld [vmem:[%s1594 + $0x68] sm:$0xff]
        %v1609 = vld [vmem:[%s1594 + $0x70] sm:$0xff]
        %v1610 = vld [vmem:[%s1594 + $0x78] sm:$0xff]
        %v1611 = vld [vmem:[%s1594 + $0x80] sm:$0xff]
        %v1612 = vld [vmem:[%s1594 + $0x88] sm:$0xff]
        %v1613 = vld [vmem:[%s1594 + $0x90] sm:$0xff]
        %v1614 = vld [vmem:[%s1594 + $0x98] sm:$0xff]
        %v1615 = vld [vmem:[%s1594 + $0xa0] sm:$0xff]
        %v1616 = vld [vmem:[%s1594 + $0xa8] sm:$0xff]
        %v1617 = vld [vmem:[%s1594 + $0xb0] sm:$0xff]
        %v1618 = vld [vmem:[%s1594 + $0xb8] sm:$0xff]
        %v1619 = vld [vmem:[%s1594 + $0xc0] sm:$0xff]
        %v1620 = vld [vmem:[%s1594 + $0xc8] sm:$0xff]
        %v1621 = vld [vmem:[%s1594 + $0xd0] sm:$0xff]
        %v1622 = vld [vmem:[%s1594 + $0xd8] sm:$0xff]
        %v1623 = vld [vmem:[%s1594 + $0xe0] sm:$0xff]
        %v1624 = vld [vmem:[%s1594 + $0xe8] sm:$0xff]
        %v1625 = vld [vmem:[%s1594 + $0xf0] sm:$0xff]
        %v1626 = vld [vmem:[%s1594 + $0xf8] sm:$0xff]
        %1627 = vmatprep.subr.mxu0 0.0
        %1628 = vmatpush1.msra.mxu0 %v1595
        %1629 = vmatprep.subr.mxu0 0.0
        %1630 = vmatpush1.msra.mxu0 %v1596
        %1631 = vmatprep.subr.mxu0 0.0
        %1632 = vmatpush1.msra.mxu0 %v1597
        %1633 = vmatprep.subr.mxu0 0.0
        %1634 = vmatpush1.msra.mxu0 %v1598
        %1635 = vmatprep.subr.mxu0 0.0
        %1636 = vmatpush1.msra.mxu0 %v1599
        %1637 = vmatprep.subr.mxu0 0.0
        %1638 = vmatpush1.msra.mxu0 %v1600
        %1639 = vmatprep.subr.mxu0 0.0
        %1640 = vmatpush1.msra.mxu0 %v1601
        %1641 = vmatprep.subr.mxu0 0.0
        %1642 = vmatpush1.msra.mxu0 %v1602
        %1643 = vmatprep.subr.mxu0 0.0
        %1644 = vmatpush1.msra.mxu0 %v1603
        %1645 = vmatprep.subr.mxu0 0.0
        %1646 = vmatpush1.msra.mxu0 %v1604
        %1647 = vmatprep.subr.mxu0 0.0
        %1648 = vmatpush1.msra.mxu0 %v1605
        %1649 = vmatprep.subr.mxu0 0.0
        %1650 = vmatpush1.msra.mxu0 %v1606
        %1651 = vmatprep.subr.mxu0 0.0
        %1652 = vmatpush1.msra.mxu0 %v1607
        %1653 = vmatprep.subr.mxu0 0.0
        %1654 = vmatpush1.msra.mxu0 %v1608
        %1655 = vmatprep.subr.mxu0 0.0
        %1656 = vmatpush1.msra.mxu0 %v1609
        %1657 = vmatprep.subr.mxu0 0.0
        %1658 = vmatpush1.msra.mxu0 %v1610
        %1659 = vmatprep.subr.mxu0 0.0
        %1660 = vmatpush1.msra.mxu0 %v1611
        %1661 = vmatprep.subr.mxu0 0.0
        %1662 = vmatpush1.msra.mxu0 %v1612
        %1663 = vmatprep.subr.mxu0 0.0
        %1664 = vmatpush1.msra.mxu0 %v1613
        %1665 = vmatprep.subr.mxu0 0.0
        %1666 = vmatpush1.msra.mxu0 %v1614
        %1667 = vmatprep.subr.mxu0 0.0
        %1668 = vmatpush1.msra.mxu0 %v1615
        %1669 = vmatprep.subr.mxu0 0.0
        %1670 = vmatpush1.msra.mxu0 %v1616
        %1671 = vmatprep.subr.mxu0 0.0
        %1672 = vmatpush1.msra.mxu0 %v1617
        %1673 = vmatprep.subr.mxu0 0.0
        %1674 = vmatpush1.msra.mxu0 %v1618
        %1675 = vmatprep.subr.mxu0 0.0
        %1676 = vmatpush1.msra.mxu0 %v1619
        %1677 = vmatprep.subr.mxu0 0.0
        %1678 = vmatpush1.msra.mxu0 %v1620
        %1679 = vmatprep.subr.mxu0 0.0
        %1680 = vmatpush1.msra.mxu0 %v1621
        %1681 = vmatprep.subr.mxu0 0.0
        %1682 = vmatpush1.msra.mxu0 %v1622
        %1683 = vmatprep.subr.mxu0 0.0
        %1684 = vmatpush1.msra.mxu0 %v1623
        %1685 = vmatprep.subr.mxu0 0.0
        %1686 = vmatpush1.msra.mxu0 %v1624
        %1687 = vmatprep.subr.mxu0 0.0
        %1688 = vmatpush1.msra.mxu0 %v1625
        %1689 = vmatprep.subr.mxu0 0.0
        %1690 = vmatpush1.msra.mxu0 %v1626
        %1691 = vmatprep.mubr.f32.mxu0 %v534
        %1692 = vmatmul.mubr.f32.gmra.mrb[0].mxu0 %v500
        %v1693 = vpop.f32.mrb[0].mxu0
        %v1694 = vadd.f32 0.0, %v1693
        %v1695 = vpop.f32.mrb[0].mxu0
        %1696 = vdwg.mxu0
        %s1697 = scalar_lea.vmem %s2, 48
        %v1698 = vld [vmem:[%s1697] sm:$0xff]
        %v1700 = vsel %vm712, %v1698, 0
        %v1703 = vsel %vm716, %v1694, 0
        %1705 = vmatprep.subr.mxu0 0.0
        %1706 = vmatpush1.msra.mxu0 %v1703
        %1707 = vmatprep.subr.mxu0 0.0
        %1708 = vmatpush1.msra.mxu0 0.0
        %1709 = vmatprep.subr.mxu0 0.0
        %1710 = vmatpush1.msra.mxu0 0.0
        %1711 = vmatprep.subr.mxu0 0.0
        %1712 = vmatpush1.msra.mxu0 0.0
        %1713 = vmatprep.subr.mxu0 0.0
        %1714 = vmatpush1.msra.mxu0 0.0
        %1715 = vmatprep.subr.mxu0 0.0
        %1716 = vmatpush1.msra.mxu0 0.0
        %1717 = vmatprep.subr.mxu0 0.0
        %1718 = vmatpush1.msra.mxu0 0.0
        %1719 = vmatprep.subr.mxu0 0.0
        %1720 = vmatpush1.msra.mxu0 0.0
        %1721 = vmatprep.subr.mxu0 0.0
        %1722 = vmatpush1.msra.mxu0 0.0
        %1723 = vmatprep.subr.mxu0 0.0
        %1724 = vmatpush1.msra.mxu0 0.0
        %1725 = vmatprep.subr.mxu0 0.0
        %1726 = vmatpush1.msra.mxu0 0.0
        %1727 = vmatprep.subr.mxu0 0.0
        %1728 = vmatpush1.msra.mxu0 0.0
        %1729 = vmatprep.subr.mxu0 0.0
        %1730 = vmatpush1.msra.mxu0 0.0
        %1731 = vmatprep.subr.mxu0 0.0
        %1732 = vmatpush1.msra.mxu0 0.0
        %1733 = vmatprep.subr.mxu0 0.0
        %1734 = vmatpush1.msra.mxu0 0.0
        %1735 = vmatprep.subr.mxu0 0.0
        %1736 = vmatpush1.msra.mxu0 0.0
        %1737 = vmatprep.subr.mxu0 0.0
        %1738 = vmatpush1.msra.mxu0 0.0
        %1739 = vmatprep.subr.mxu0 0.0
        %1740 = vmatpush1.msra.mxu0 0.0
        %1741 = vmatprep.subr.mxu0 0.0
        %1742 = vmatpush1.msra.mxu0 0.0
        %1743 = vmatprep.subr.mxu0 0.0
        %1744 = vmatpush1.msra.mxu0 0.0
        %1745 = vmatprep.subr.mxu0 0.0
        %1746 = vmatpush1.msra.mxu0 0.0
        %1747 = vmatprep.subr.mxu0 0.0
        %1748 = vmatpush1.msra.mxu0 0.0
        %1749 = vmatprep.subr.mxu0 0.0
        %1750 = vmatpush1.msra.mxu0 0.0
        %1751 = vmatprep.subr.mxu0 0.0
        %1752 = vmatpush1.msra.mxu0 0.0
        %1753 = vmatprep.subr.mxu0 0.0
        %1754 = vmatpush1.msra.mxu0 0.0
        %1755 = vmatprep.subr.mxu0 0.0
        %1756 = vmatpush1.msra.mxu0 0.0
        %1757 = vmatprep.subr.mxu0 0.0
        %1758 = vmatpush1.msra.mxu0 0.0
        %1759 = vmatprep.subr.mxu0 0.0
        %1760 = vmatpush1.msra.mxu0 0.0
        %1761 = vmatprep.subr.mxu0 0.0
        %1762 = vmatpush1.msra.mxu0 0.0
        %1763 = vmatprep.subr.mxu0 0.0
        %1764 = vmatpush1.msra.mxu0 0.0
        %1765 = vmatprep.subr.mxu0 0.0
        %1766 = vmatpush1.msra.mxu0 0.0
        %1767 = vmatprep.subr.mxu0 0.0
        %1768 = vmatpush1.msra.mxu0 0.0
        %1769 = vmatprep.mubr.f32.mxu0 0.0
        %1770 = vmatmul.mubr.f32.gmra.mrb[0].mxu0 %v1700
        %v1771 = vpop.f32.mrb[0].mxu0
        %v1772 = vadd.f32 0.0, %v1771
        %v1773 = vpop.f32.mrb[0].mxu0
        %1774 = vdwg.mxu0
        %v1775 = vadd.f32 %v1593, %v1772
        %s1776 = scalar_lea.vmem [#allocation2], 1792
        %v1777 = vld [vmem:[%s1776] sm:$0xff]
        %v1778 = vld [vmem:[%s1776 + $0x8] sm:$0xff]
        %v1779 = vld [vmem:[%s1776 + $0x10] sm:$0xff]
        %v1780 = vld [vmem:[%s1776 + $0x18] sm:$0xff]
        %v1781 = vld [vmem:[%s1776 + $0x20] sm:$0xff]
        %v1782 = vld [vmem:[%s1776 + $0x28] sm:$0xff]
        %v1783 = vld [vmem:[%s1776 + $0x30] sm:$0xff]
        %v1784 = vld [vmem:[%s1776 + $0x38] sm:$0xff]
        %v1785 = vld [vmem:[%s1776 + $0x40] sm:$0xff]
        %v1786 = vld [vmem:[%s1776 + $0x48] sm:$0xff]
        %v1787 = vld [vmem:[%s1776 + $0x50] sm:$0xff]
        %v1788 = vld [vmem:[%s1776 + $0x58] sm:$0xff]
        %v1789 = vld [vmem:[%s1776 + $0x60] sm:$0xff]
        %v1790 = vld [vmem:[%s1776 + $0x68] sm:$0xff]
        %v1791 = vld [vmem:[%s1776 + $0x70] sm:$0xff]
        %v1792 = vld [vmem:[%s1776 + $0x78] sm:$0xff]
        %v1793 = vld [vmem:[%s1776 + $0x80] sm:$0xff]
        %v1794 = vld [vmem:[%s1776 + $0x88] sm:$0xff]
        %v1795 = vld [vmem:[%s1776 + $0x90] sm:$0xff]
        %v1796 = vld [vmem:[%s1776 + $0x98] sm:$0xff]
        %v1797 = vld [vmem:[%s1776 + $0xa0] sm:$0xff]
        %v1798 = vld [vmem:[%s1776 + $0xa8] sm:$0xff]
        %v1799 = vld [vmem:[%s1776 + $0xb0] sm:$0xff]
        %v1800 = vld [vmem:[%s1776 + $0xb8] sm:$0xff]
        %v1801 = vld [vmem:[%s1776 + $0xc0] sm:$0xff]
        %v1802 = vld [vmem:[%s1776 + $0xc8] sm:$0xff]
        %v1803 = vld [vmem:[%s1776 + $0xd0] sm:$0xff]
        %v1804 = vld [vmem:[%s1776 + $0xd8] sm:$0xff]
        %v1805 = vld [vmem:[%s1776 + $0xe0] sm:$0xff]
        %v1806 = vld [vmem:[%s1776 + $0xe8] sm:$0xff]
        %v1807 = vld [vmem:[%s1776 + $0xf0] sm:$0xff]
        %v1808 = vld [vmem:[%s1776 + $0xf8] sm:$0xff]
        %1809 = vmatprep.subr.mxu0 0.0
        %1810 = vmatpush1.msra.mxu0 %v1777
        %1811 = vmatprep.subr.mxu0 0.0
        %1812 = vmatpush1.msra.mxu0 %v1778
        %1813 = vmatprep.subr.mxu0 0.0
        %1814 = vmatpush1.msra.mxu0 %v1779
        %1815 = vmatprep.subr.mxu0 0.0
        %1816 = vmatpush1.msra.mxu0 %v1780
        %1817 = vmatprep.subr.mxu0 0.0
        %1818 = vmatpush1.msra.mxu0 %v1781
        %1819 = vmatprep.subr.mxu0 0.0
        %1820 = vmatpush1.msra.mxu0 %v1782
        %1821 = vmatprep.subr.mxu0 0.0
        %1822 = vmatpush1.msra.mxu0 %v1783
        %1823 = vmatprep.subr.mxu0 0.0
        %1824 = vmatpush1.msra.mxu0 %v1784
        %1825 = vmatprep.subr.mxu0 0.0
        %1826 = vmatpush1.msra.mxu0 %v1785
        %1827 = vmatprep.subr.mxu0 0.0
        %1828 = vmatpush1.msra.mxu0 %v1786
        %1829 = vmatprep.subr.mxu0 0.0
        %1830 = vmatpush1.msra.mxu0 %v1787
        %1831 = vmatprep.subr.mxu0 0.0
        %1832 = vmatpush1.msra.mxu0 %v1788
        %1833 = vmatprep.subr.mxu0 0.0
        %1834 = vmatpush1.msra.mxu0 %v1789
        %1835 = vmatprep.subr.mxu0 0.0
        %1836 = vmatpush1.msra.mxu0 %v1790
        %1837 = vmatprep.subr.mxu0 0.0
        %1838 = vmatpush1.msra.mxu0 %v1791
        %1839 = vmatprep.subr.mxu0 0.0
        %1840 = vmatpush1.msra.mxu0 %v1792
        %1841 = vmatprep.subr.mxu0 0.0
        %1842 = vmatpush1.msra.mxu0 %v1793
        %1843 = vmatprep.subr.mxu0 0.0
        %1844 = vmatpush1.msra.mxu0 %v1794
        %1845 = vmatprep.subr.mxu0 0.0
        %1846 = vmatpush1.msra.mxu0 %v1795
        %1847 = vmatprep.subr.mxu0 0.0
        %1848 = vmatpush1.msra.mxu0 %v1796
        %1849 = vmatprep.subr.mxu0 0.0
        %1850 = vmatpush1.msra.mxu0 %v1797
        %1851 = vmatprep.subr.mxu0 0.0
        %1852 = vmatpush1.msra.mxu0 %v1798
        %1853 = vmatprep.subr.mxu0 0.0
        %1854 = vmatpush1.msra.mxu0 %v1799
        %1855 = vmatprep.subr.mxu0 0.0
        %1856 = vmatpush1.msra.mxu0 %v1800
        %1857 = vmatprep.subr.mxu0 0.0
        %1858 = vmatpush1.msra.mxu0 %v1801
        %1859 = vmatprep.subr.mxu0 0.0
        %1860 = vmatpush1.msra.mxu0 %v1802
        %1861 = vmatprep.subr.mxu0 0.0
        %1862 = vmatpush1.msra.mxu0 %v1803
        %1863 = vmatprep.subr.mxu0 0.0
        %1864 = vmatpush1.msra.mxu0 %v1804
        %1865 = vmatprep.subr.mxu0 0.0
        %1866 = vmatpush1.msra.mxu0 %v1805
        %1867 = vmatprep.subr.mxu0 0.0
        %1868 = vmatpush1.msra.mxu0 %v1806
        %1869 = vmatprep.subr.mxu0 0.0
        %1870 = vmatpush1.msra.mxu0 %v1807
        %1871 = vmatprep.subr.mxu0 0.0
        %1872 = vmatpush1.msra.mxu0 %v1808
        %1873 = vmatprep.mubr.f32.mxu0 %v534
        %1874 = vmatmul.mubr.f32.gmra.mrb[0].mxu0 %v500
        %v1875 = vpop.f32.mrb[0].mxu0
        %v1876 = vadd.f32 0.0, %v1875
        %v1877 = vpop.f32.mrb[0].mxu0
        %1878 = vdwg.mxu0
        %s1879 = scalar_lea.vmem %s2, 56
        %v1880 = vld [vmem:[%s1879] sm:$0xff]
        %v1882 = vsel %vm712, %v1880, 0
        %v1885 = vsel %vm716, %v1876, 0
        %1887 = vmatprep.subr.mxu0 0.0
        %1888 = vmatpush1.msra.mxu0 %v1885
        %1889 = vmatprep.subr.mxu0 0.0
        %1890 = vmatpush1.msra.mxu0 0.0
        %1891 = vmatprep.subr.mxu0 0.0
        %1892 = vmatpush1.msra.mxu0 0.0
        %1893 = vmatprep.subr.mxu0 0.0
        %1894 = vmatpush1.msra.mxu0 0.0
        %1895 = vmatprep.subr.mxu0 0.0
        %1896 = vmatpush1.msra.mxu0 0.0
        %1897 = vmatprep.subr.mxu0 0.0
        %1898 = vmatpush1.msra.mxu0 0.0
        %1899 = vmatprep.subr.mxu0 0.0
        %1900 = vmatpush1.msra.mxu0 0.0
        %1901 = vmatprep.subr.mxu0 0.0
        %1902 = vmatpush1.msra.mxu0 0.0
        %1903 = vmatprep.subr.mxu0 0.0
        %1904 = vmatpush1.msra.mxu0 0.0
        %1905 = vmatprep.subr.mxu0 0.0
        %1906 = vmatpush1.msra.mxu0 0.0
        %1907 = vmatprep.subr.mxu0 0.0
        %1908 = vmatpush1.msra.mxu0 0.0
        %1909 = vmatprep.subr.mxu0 0.0
        %1910 = vmatpush1.msra.mxu0 0.0
        %1911 = vmatprep.subr.mxu0 0.0
        %1912 = vmatpush1.msra.mxu0 0.0
        %1913 = vmatprep.subr.mxu0 0.0
        %1914 = vmatpush1.msra.mxu0 0.0
        %1915 = vmatprep.subr.mxu0 0.0
        %1916 = vmatpush1.msra.mxu0 0.0
        %1917 = vmatprep.subr.mxu0 0.0
        %1918 = vmatpush1.msra.mxu0 0.0
        %1919 = vmatprep.subr.mxu0 0.0
        %1920 = vmatpush1.msra.mxu0 0.0
        %1921 = vmatprep.subr.mxu0 0.0
        %1922 = vmatpush1.msra.mxu0 0.0
        %1923 = vmatprep.subr.mxu0 0.0
        %1924 = vmatpush1.msra.mxu0 0.0
        %1925 = vmatprep.subr.mxu0 0.0
        %1926 = vmatpush1.msra.mxu0 0.0
        %1927 = vmatprep.subr.mxu0 0.0
        %1928 = vmatpush1.msra.mxu0 0.0
        %1929 = vmatprep.subr.mxu0 0.0
        %1930 = vmatpush1.msra.mxu0 0.0
        %1931 = vmatprep.subr.mxu0 0.0
        %1932 = vmatpush1.msra.mxu0 0.0
        %1933 = vmatprep.subr.mxu0 0.0
        %1934 = vmatpush1.msra.mxu0 0.0
        %1935 = vmatprep.subr.mxu0 0.0
        %1936 = vmatpush1.msra.mxu0 0.0
        %1937 = vmatprep.subr.mxu0 0.0
        %1938 = vmatpush1.msra.mxu0 0.0
        %1939 = vmatprep.subr.mxu0 0.0
        %1940 = vmatpush1.msra.mxu0 0.0
        %1941 = vmatprep.subr.mxu0 0.0
        %1942 = vmatpush1.msra.mxu0 0.0
        %1943 = vmatprep.subr.mxu0 0.0
        %1944 = vmatpush1.msra.mxu0 0.0
        %1945 = vmatprep.subr.mxu0 0.0
        %1946 = vmatpush1.msra.mxu0 0.0
        %1947 = vmatprep.subr.mxu0 0.0
        %1948 = vmatpush1.msra.mxu0 0.0
        %1949 = vmatprep.subr.mxu0 0.0
        %1950 = vmatpush1.msra.mxu0 0.0
        %1951 = vmatprep.mubr.f32.mxu0 0.0
        %1952 = vmatmul.mubr.f32.gmra.mrb[0].mxu0 %v1882
        %v1953 = vpop.f32.mrb[0].mxu0
        %v1954 = vadd.f32 0.0, %v1953
        %v1955 = vpop.f32.mrb[0].mxu0
        %1956 = vdwg.mxu0
        %v1957 = vadd.f32 %v1775, %v1954
        %s1958 = scalar_lea.vmem [#allocation2], 2048
        %v1959 = vld [vmem:[%s1958] sm:$0xff]
        %v1960 = vld [vmem:[%s1958 + $0x8] sm:$0xff]
        %v1961 = vld [vmem:[%s1958 + $0x10] sm:$0xff]
        %v1962 = vld [vmem:[%s1958 + $0x18] sm:$0xff]
        %v1963 = vld [vmem:[%s1958 + $0x20] sm:$0xff]
        %v1964 = vld [vmem:[%s1958 + $0x28] sm:$0xff]
        %v1965 = vld [vmem:[%s1958 + $0x30] sm:$0xff]
        %v1966 = vld [vmem:[%s1958 + $0x38] sm:$0xff]
        %v1967 = vld [vmem:[%s1958 + $0x40] sm:$0xff]
        %v1968 = vld [vmem:[%s1958 + $0x48] sm:$0xff]
        %v1969 = vld [vmem:[%s1958 + $0x50] sm:$0xff]
        %v1970 = vld [vmem:[%s1958 + $0x58] sm:$0xff]
        %v1971 = vld [vmem:[%s1958 + $0x60] sm:$0xff]
        %v1972 = vld [vmem:[%s1958 + $0x68] sm:$0xff]
        %v1973 = vld [vmem:[%s1958 + $0x70] sm:$0xff]
        %v1974 = vld [vmem:[%s1958 + $0x78] sm:$0xff]
        %v1975 = vld [vmem:[%s1958 + $0x80] sm:$0xff]
        %v1976 = vld [vmem:[%s1958 + $0x88] sm:$0xff]
        %v1977 = vld [vmem:[%s1958 + $0x90] sm:$0xff]
        %v1978 = vld [vmem:[%s1958 + $0x98] sm:$0xff]
        %v1979 = vld [vmem:[%s1958 + $0xa0] sm:$0xff]
        %v1980 = vld [vmem:[%s1958 + $0xa8] sm:$0xff]
        %v1981 = vld [vmem:[%s1958 + $0xb0] sm:$0xff]
        %v1982 = vld [vmem:[%s1958 + $0xb8] sm:$0xff]
        %v1983 = vld [vmem:[%s1958 + $0xc0] sm:$0xff]
        %v1984 = vld [vmem:[%s1958 + $0xc8] sm:$0xff]
        %v1985 = vld [vmem:[%s1958 + $0xd0] sm:$0xff]
        %v1986 = vld [vmem:[%s1958 + $0xd8] sm:$0xff]
        %v1987 = vld [vmem:[%s1958 + $0xe0] sm:$0xff]
        %v1988 = vld [vmem:[%s1958 + $0xe8] sm:$0xff]
        %v1989 = vld [vmem:[%s1958 + $0xf0] sm:$0xff]
        %v1990 = vld [vmem:[%s1958 + $0xf8] sm:$0xff]
        %1991 = vmatprep.subr.mxu0 0.0
        %1992 = vmatpush1.msra.mxu0 %v1959
        %1993 = vmatprep.subr.mxu0 0.0
        %1994 = vmatpush1.msra.mxu0 %v1960
        %1995 = vmatprep.subr.mxu0 0.0
        %1996 = vmatpush1.msra.mxu0 %v1961
        %1997 = vmatprep.subr.mxu0 0.0
        %1998 = vmatpush1.msra.mxu0 %v1962
        %1999 = vmatprep.subr.mxu0 0.0
        %2000 = vmatpush1.msra.mxu0 %v1963
        %2001 = vmatprep.subr.mxu0 0.0
        %2002 = vmatpush1.msra.mxu0 %v1964
        %2003 = vmatprep.subr.mxu0 0.0
        %2004 = vmatpush1.msra.mxu0 %v1965
        %2005 = vmatprep.subr.mxu0 0.0
        %2006 = vmatpush1.msra.mxu0 %v1966
        %2007 = vmatprep.subr.mxu0 0.0
        %2008 = vmatpush1.msra.mxu0 %v1967
        %2009 = vmatprep.subr.mxu0 0.0
        %2010 = vmatpush1.msra.mxu0 %v1968
        %2011 = vmatprep.subr.mxu0 0.0
        %2012 = vmatpush1.msra.mxu0 %v1969
        %2013 = vmatprep.subr.mxu0 0.0
        %2014 = vmatpush1.msra.mxu0 %v1970
        %2015 = vmatprep.subr.mxu0 0.0
        %2016 = vmatpush1.msra.mxu0 %v1971
        %2017 = vmatprep.subr.mxu0 0.0
        %2018 = vmatpush1.msra.mxu0 %v1972
        %2019 = vmatprep.subr.mxu0 0.0
        %2020 = vmatpush1.msra.mxu0 %v1973
        %2021 = vmatprep.subr.mxu0 0.0
        %2022 = vmatpush1.msra.mxu0 %v1974
        %2023 = vmatprep.subr.mxu0 0.0
        %2024 = vmatpush1.msra.mxu0 %v1975
        %2025 = vmatprep.subr.mxu0 0.0
        %2026 = vmatpush1.msra.mxu0 %v1976
        %2027 = vmatprep.subr.mxu0 0.0
        %2028 = vmatpush1.msra.mxu0 %v1977
        %2029 = vmatprep.subr.mxu0 0.0
        %2030 = vmatpush1.msra.mxu0 %v1978
        %2031 = vmatprep.subr.mxu0 0.0
        %2032 = vmatpush1.msra.mxu0 %v1979
        %2033 = vmatprep.subr.mxu0 0.0
        %2034 = vmatpush1.msra.mxu0 %v1980
        %2035 = vmatprep.subr.mxu0 0.0
        %2036 = vmatpush1.msra.mxu0 %v1981
        %2037 = vmatprep.subr.mxu0 0.0
        %2038 = vmatpush1.msra.mxu0 %v1982
        %2039 = vmatprep.subr.mxu0 0.0
        %2040 = vmatpush1.msra.mxu0 %v1983
        %2041 = vmatprep.subr.mxu0 0.0
        %2042 = vmatpush1.msra.mxu0 %v1984
        %2043 = vmatprep.subr.mxu0 0.0
        %2044 = vmatpush1.msra.mxu0 %v1985
        %2045 = vmatprep.subr.mxu0 0.0
        %2046 = vmatpush1.msra.mxu0 %v1986
        %2047 = vmatprep.subr.mxu0 0.0
        %2048 = vmatpush1.msra.mxu0 %v1987
        %2049 = vmatprep.subr.mxu0 0.0
        %2050 = vmatpush1.msra.mxu0 %v1988
        %2051 = vmatprep.subr.mxu0 0.0
        %2052 = vmatpush1.msra.mxu0 %v1989
        %2053 = vmatprep.subr.mxu0 0.0
        %2054 = vmatpush1.msra.mxu0 %v1990
        %2055 = vmatprep.mubr.f32.mxu0 %v534
        %2056 = vmatmul.mubr.f32.gmra.mrb[0].mxu0 %v500
        %v2057 = vpop.f32.mrb[0].mxu0
        %v2058 = vadd.f32 0.0, %v2057
        %v2059 = vpop.f32.mrb[0].mxu0
        %2060 = vdwg.mxu0
        %s2061 = scalar_lea.vmem %s2, 64
        %v2062 = vld [vmem:[%s2061] sm:$0xff]
        %v2064 = vsel %vm712, %v2062, 0
        %v2067 = vsel %vm716, %v2058, 0
        %2069 = vmatprep.subr.mxu0 0.0
        %2070 = vmatpush1.msra.mxu0 %v2067
        %2071 = vmatprep.subr.mxu0 0.0
        %2072 = vmatpush1.msra.mxu0 0.0
        %2073 = vmatprep.subr.mxu0 0.0
        %2074 = vmatpush1.msra.mxu0 0.0
        %2075 = vmatprep.subr.mxu0 0.0
        %2076 = vmatpush1.msra.mxu0 0.0
        %2077 = vmatprep.subr.mxu0 0.0
        %2078 = vmatpush1.msra.mxu0 0.0
        %2079 = vmatprep.subr.mxu0 0.0
        %2080 = vmatpush1.msra.mxu0 0.0
        %2081 = vmatprep.subr.mxu0 0.0
        %2082 = vmatpush1.msra.mxu0 0.0
        %2083 = vmatprep.subr.mxu0 0.0
        %2084 = vmatpush1.msra.mxu0 0.0
        %2085 = vmatprep.subr.mxu0 0.0
        %2086 = vmatpush1.msra.mxu0 0.0
        %2087 = vmatprep.subr.mxu0 0.0
        %2088 = vmatpush1.msra.mxu0 0.0
        %2089 = vmatprep.subr.mxu0 0.0
        %2090 = vmatpush1.msra.mxu0 0.0
        %2091 = vmatprep.subr.mxu0 0.0
        %2092 = vmatpush1.msra.mxu0 0.0
        %2093 = vmatprep.subr.mxu0 0.0
        %2094 = vmatpush1.msra.mxu0 0.0
        %2095 = vmatprep.subr.mxu0 0.0
        %2096 = vmatpush1.msra.mxu0 0.0
        %2097 = vmatprep.subr.mxu0 0.0
        %2098 = vmatpush1.msra.mxu0 0.0
        %2099 = vmatprep.subr.mxu0 0.0
        %2100 = vmatpush1.msra.mxu0 0.0
        %2101 = vmatprep.subr.mxu0 0.0
        %2102 = vmatpush1.msra.mxu0 0.0
        %2103 = vmatprep.subr.mxu0 0.0
        %2104 = vmatpush1.msra.mxu0 0.0
        %2105 = vmatprep.subr.mxu0 0.0
        %2106 = vmatpush1.msra.mxu0 0.0
        %2107 = vmatprep.subr.mxu0 0.0
        %2108 = vmatpush1.msra.mxu0 0.0
        %2109 = vmatprep.subr.mxu0 0.0
        %2110 = vmatpush1.msra.mxu0 0.0
        %2111 = vmatprep.subr.mxu0 0.0
        %2112 = vmatpush1.msra.mxu0 0.0
        %2113 = vmatprep.subr.mxu0 0.0
        %2114 = vmatpush1.msra.mxu0 0.0
        %2115 = vmatprep.subr.mxu0 0.0
        %2116 = vmatpush1.msra.mxu0 0.0
        %2117 = vmatprep.subr.mxu0 0.0
        %2118 = vmatpush1.msra.mxu0 0.0
        %2119 = vmatprep.subr.mxu0 0.0
        %2120 = vmatpush1.msra.mxu0 0.0
        %2121 = vmatprep.subr.mxu0 0.0
        %2122 = vmatpush1.msra.mxu0 0.0
        %2123 = vmatprep.subr.mxu0 0.0
        %2124 = vmatpush1.msra.mxu0 0.0
        %2125 = vmatprep.subr.mxu0 0.0
        %2126 = vmatpush1.msra.mxu0 0.0
        %2127 = vmatprep.subr.mxu0 0.0
        %2128 = vmatpush1.msra.mxu0 0.0
        %2129 = vmatprep.subr.mxu0 0.0
        %2130 = vmatpush1.msra.mxu0 0.0
        %2131 = vmatprep.subr.mxu0 0.0
        %2132 = vmatpush1.msra.mxu0 0.0
        %2133 = vmatprep.mubr.f32.mxu0 0.0
        %2134 = vmatmul.mubr.f32.gmra.mrb[0].mxu0 %v2064
        %v2135 = vpop.f32.mrb[0].mxu0
        %v2136 = vadd.f32 0.0, %v2135
        %v2137 = vpop.f32.mrb[0].mxu0
        %2138 = vdwg.mxu0
        %v2139 = vadd.f32 %v1957, %v2136
        %v2140 = vld [vmem:[%s3] sm:$0xff]
        %2142 = vset.pattern.permute.xlu0 0
        %2143 = vperm.xlu0 %2142, %v2140
        %v2144 = vpop.permute.xlu0 %2143
        %v2146 = vadd.f32 %v2139, %v2144
        %v2147 = vmax.f32 %v2146, 0.0
        %v2148 = vld [vmem:[#allocation4] sm:$0xff]
        %v2149 = vld [vmem:[#allocation4 + $0x8] sm:$0xff]
        %v2150 = vld [vmem:[#allocation4 + $0x10] sm:$0xff]
        %v2151 = vld [vmem:[#allocation4 + $0x18] sm:$0xff]
        %v2152 = vld [vmem:[#allocation4 + $0x20] sm:$0xff]
        %v2153 = vld [vmem:[#allocation4 + $0x28] sm:$0xff]
        %v2154 = vld [vmem:[#allocation4 + $0x30] sm:$0xff]
        %v2155 = vld [vmem:[#allocation4 + $0x38] sm:$0xff]
        %vm2156 = vcmask 523264
        %v2158 = vsel %vm2156, %v2147, 0
        %2160 = vmatprep.subr.mxu0 0.0
        %2161 = vmatpush1.msra.mxu0 %v2148
        %2162 = vmatprep.subr.mxu0 0.0
        %2163 = vmatpush1.msra.mxu0 %v2149
        %2164 = vmatprep.subr.mxu0 0.0
        %2165 = vmatpush1.msra.mxu0 %v2150
        %2166 = vmatprep.subr.mxu0 0.0
        %2167 = vmatpush1.msra.mxu0 %v2151
        %2168 = vmatprep.subr.mxu0 0.0
        %2169 = vmatpush1.msra.mxu0 %v2152
        %2170 = vmatprep.subr.mxu0 0.0
        %2171 = vmatpush1.msra.mxu0 %v2153
        %2172 = vmatprep.subr.mxu0 0.0
        %2173 = vmatpush1.msra.mxu0 %v2154
        %2174 = vmatprep.subr.mxu0 0.0
        %2175 = vmatpush1.msra.mxu0 %v2155
        %2176 = vmatprep.subr.mxu0 0.0
        %2177 = vmatpush1.msra.mxu0 0.0
        %2178 = vmatprep.subr.mxu0 0.0
        %2179 = vmatpush1.msra.mxu0 0.0
        %2180 = vmatprep.subr.mxu0 0.0
        %2181 = vmatpush1.msra.mxu0 0.0
        %2182 = vmatprep.subr.mxu0 0.0
        %2183 = vmatpush1.msra.mxu0 0.0
        %2184 = vmatprep.subr.mxu0 0.0
        %2185 = vmatpush1.msra.mxu0 0.0
        %2186 = vmatprep.subr.mxu0 0.0
        %2187 = vmatpush1.msra.mxu0 0.0
        %2188 = vmatprep.subr.mxu0 0.0
        %2189 = vmatpush1.msra.mxu0 0.0
        %2190 = vmatprep.subr.mxu0 0.0
        %2191 = vmatpush1.msra.mxu0 0.0
        %2192 = vmatprep.subr.mxu0 0.0
        %2193 = vmatpush1.msra.mxu0 0.0
        %2194 = vmatprep.subr.mxu0 0.0
        %2195 = vmatpush1.msra.mxu0 0.0
        %2196 = vmatprep.subr.mxu0 0.0
        %2197 = vmatpush1.msra.mxu0 0.0
        %2198 = vmatprep.subr.mxu0 0.0
        %2199 = vmatpush1.msra.mxu0 0.0
        %2200 = vmatprep.subr.mxu0 0.0
        %2201 = vmatpush1.msra.mxu0 0.0
        %2202 = vmatprep.subr.mxu0 0.0
        %2203 = vmatpush1.msra.mxu0 0.0
        %2204 = vmatprep.subr.mxu0 0.0
        %2205 = vmatpush1.msra.mxu0 0.0
        %2206 = vmatprep.subr.mxu0 0.0
        %2207 = vmatpush1.msra.mxu0 0.0
        %2208 = vmatprep.subr.mxu0 0.0
        %2209 = vmatpush1.msra.mxu0 0.0
        %2210 = vmatprep.subr.mxu0 0.0
        %2211 = vmatpush1.msra.mxu0 0.0
        %2212 = vmatprep.subr.mxu0 0.0
        %2213 = vmatpush1.msra.mxu0 0.0
        %2214 = vmatprep.subr.mxu0 0.0
        %2215 = vmatpush1.msra.mxu0 0.0
        %2216 = vmatprep.subr.mxu0 0.0
        %2217 = vmatpush1.msra.mxu0 0.0
        %2218 = vmatprep.subr.mxu0 0.0
        %2219 = vmatpush1.msra.mxu0 0.0
        %2220 = vmatprep.subr.mxu0 0.0
        %2221 = vmatpush1.msra.mxu0 0.0
        %2222 = vmatprep.subr.mxu0 0.0
        %2223 = vmatpush1.msra.mxu0 0.0
        %2224 = vmatprep.mubr.f32.mxu0 0.0
        %2225 = vmatmul.mubr.f32.gmra.mrb[0].mxu0 %v2158
        %v2226 = vpop.f32.mrb[0].mxu0
        %v2227 = vadd.f32 0.0, %v2226
        %v2228 = vpop.f32.mrb[0].mxu0
        %2229 = vdwg.mxu0
        %v2230 = vld [vmem:[%s5] sm:$0xff]
        %v2231 = vld [vmem:[%s5 + $0x8] sm:$0xff]
        %s2232 = scalar_lea.vmem [#allocation4], 64
        %v2233 = vld [vmem:[%s2232] sm:$0xff]
        %v2234 = vld [vmem:[%s2232 + $0x8] sm:$0xff]
        %v2235 = vld [vmem:[%s2232 + $0x10] sm:$0xff]
        %v2236 = vld [vmem:[%s2232 + $0x18] sm:$0xff]
        %v2237 = vld [vmem:[%s2232 + $0x20] sm:$0xff]
        %v2238 = vld [vmem:[%s2232 + $0x28] sm:$0xff]
        %v2239 = vld [vmem:[%s2232 + $0x30] sm:$0xff]
        %v2240 = vld [vmem:[%s2232 + $0x38] sm:$0xff]
        %2241 = vmatprep.subr.mxu0 0.0
        %2242 = vmatpush1.msra.mxu0 %v2233
        %2243 = vmatprep.subr.mxu0 0.0
        %2244 = vmatpush1.msra.mxu0 %v2234
        %2245 = vmatprep.subr.mxu0 0.0
        %2246 = vmatpush1.msra.mxu0 %v2235
        %2247 = vmatprep.subr.mxu0 0.0
        %2248 = vmatpush1.msra.mxu0 %v2236
        %2249 = vmatprep.subr.mxu0 0.0
        %2250 = vmatpush1.msra.mxu0 %v2237
        %2251 = vmatprep.subr.mxu0 0.0
        %2252 = vmatpush1.msra.mxu0 %v2238
        %2253 = vmatprep.subr.mxu0 0.0
        %2254 = vmatpush1.msra.mxu0 %v2239
        %2255 = vmatprep.subr.mxu0 0.0
        %2256 = vmatpush1.msra.mxu0 %v2240
        %2257 = vmatprep.subr.mxu0 0.0
        %2258 = vmatpush1.msra.mxu0 0.0
        %2259 = vmatprep.subr.mxu0 0.0
        %2260 = vmatpush1.msra.mxu0 0.0
        %2261 = vmatprep.subr.mxu0 0.0
        %2262 = vmatpush1.msra.mxu0 0.0
        %2263 = vmatprep.subr.mxu0 0.0
        %2264 = vmatpush1.msra.mxu0 0.0
        %2265 = vmatprep.subr.mxu0 0.0
        %2266 = vmatpush1.msra.mxu0 0.0
        %2267 = vmatprep.subr.mxu0 0.0
        %2268 = vmatpush1.msra.mxu0 0.0
        %2269 = vmatprep.subr.mxu0 0.0
        %2270 = vmatpush1.msra.mxu0 0.0
        %2271 = vmatprep.subr.mxu0 0.0
        %2272 = vmatpush1.msra.mxu0 0.0
        %2273 = vmatprep.subr.mxu0 0.0
        %2274 = vmatpush1.msra.mxu0 0.0
        %2275 = vmatprep.subr.mxu0 0.0
        %2276 = vmatpush1.msra.mxu0 0.0
        %2277 = vmatprep.subr.mxu0 0.0
        %2278 = vmatpush1.msra.mxu0 0.0
        %2279 = vmatprep.subr.mxu0 0.0
        %2280 = vmatpush1.msra.mxu0 0.0
        %2281 = vmatprep.subr.mxu0 0.0
        %2282 = vmatpush1.msra.mxu0 0.0
        %2283 = vmatprep.subr.mxu0 0.0
        %2284 = vmatpush1.msra.mxu0 0.0
        %2285 = vmatprep.subr.mxu0 0.0
        %2286 = vmatpush1.msra.mxu0 0.0
        %2287 = vmatprep.subr.mxu0 0.0
        %2288 = vmatpush1.msra.mxu0 0.0
        %2289 = vmatprep.subr.mxu0 0.0
        %2290 = vmatpush1.msra.mxu0 0.0
        %2291 = vmatprep.subr.mxu0 0.0
        %2292 = vmatpush1.msra.mxu0 0.0
        %2293 = vmatprep.subr.mxu0 0.0
        %2294 = vmatpush1.msra.mxu0 0.0
        %2295 = vmatprep.subr.mxu0 0.0
        %2296 = vmatpush1.msra.mxu0 0.0
        %2297 = vmatprep.subr.mxu0 0.0
        %2298 = vmatpush1.msra.mxu0 0.0
        %2299 = vmatprep.subr.mxu0 0.0
        %2300 = vmatpush1.msra.mxu0 0.0
        %2301 = vmatprep.subr.mxu0 0.0
        %2302 = vmatpush1.msra.mxu0 0.0
        %2303 = vmatprep.subr.mxu0 0.0
        %2304 = vmatpush1.msra.mxu0 0.0
        %2305 = vmatprep.mubr.f32.mxu0 0.0
        %2306 = vmatmul.mubr.f32.gmra.mrb[0].mxu0 %v2158
        %v2307 = vpop.f32.mrb[0].mxu0
        %v2308 = vadd.f32 0.0, %v2307
        %v2309 = vpop.f32.mrb[0].mxu0
        %2310 = vdwg.mxu0
        %s2311 = scalar_lea.vmem %s5, 16
        %v2312 = vld [vmem:[%s2311] sm:$0xff]
        %v2313 = vld [vmem:[%s2311 + $0x8] sm:$0xff]
        %vm2314 = vcmask 64512
        %v2316 = vsel %vm2314, %v2312, 0
        %v2319 = vsel %vm2314, %v2313, 0
        %2321 = vmatprep.subr.mxu0 0.0
        %2322 = vmatpush1.msra.mxu0 %v2308
        %2323 = vmatprep.subr.mxu0 0.0
        %2324 = vmatpush1.msra.mxu0 0.0
        %2325 = vmatprep.subr.mxu0 0.0
        %2326 = vmatpush1.msra.mxu0 0.0
        %2327 = vmatprep.subr.mxu0 0.0
        %2328 = vmatpush1.msra.mxu0 0.0
        %2329 = vmatprep.subr.mxu0 0.0
        %2330 = vmatpush1.msra.mxu0 0.0
        %2331 = vmatprep.subr.mxu0 0.0
        %2332 = vmatpush1.msra.mxu0 0.0
        %2333 = vmatprep.subr.mxu0 0.0
        %2334 = vmatpush1.msra.mxu0 0.0
        %2335 = vmatprep.subr.mxu0 0.0
        %2336 = vmatpush1.msra.mxu0 0.0
        %2337 = vmatprep.subr.mxu0 0.0
        %2338 = vmatpush1.msra.mxu0 0.0
        %2339 = vmatprep.subr.mxu0 0.0
        %2340 = vmatpush1.msra.mxu0 0.0
        %2341 = vmatprep.subr.mxu0 0.0
        %2342 = vmatpush1.msra.mxu0 0.0
        %2343 = vmatprep.subr.mxu0 0.0
        %2344 = vmatpush1.msra.mxu0 0.0
        %2345 = vmatprep.subr.mxu0 0.0
        %2346 = vmatpush1.msra.mxu0 0.0
        %2347 = vmatprep.subr.mxu0 0.0
        %2348 = vmatpush1.msra.mxu0 0.0
        %2349 = vmatprep.subr.mxu0 0.0
        %2350 = vmatpush1.msra.mxu0 0.0
        %2351 = vmatprep.subr.mxu0 0.0
        %2352 = vmatpush1.msra.mxu0 0.0
        %2353 = vmatprep.subr.mxu0 0.0
        %2354 = vmatpush1.msra.mxu0 0.0
        %2355 = vmatprep.subr.mxu0 0.0
        %2356 = vmatpush1.msra.mxu0 0.0
        %2357 = vmatprep.subr.mxu0 0.0
        %2358 = vmatpush1.msra.mxu0 0.0
        %2359 = vmatprep.subr.mxu0 0.0
        %2360 = vmatpush1.msra.mxu0 0.0
        %2361 = vmatprep.subr.mxu0 0.0
        %2362 = vmatpush1.msra.mxu0 0.0
        %2363 = vmatprep.subr.mxu0 0.0
        %2364 = vmatpush1.msra.mxu0 0.0
        %2365 = vmatprep.subr.mxu0 0.0
        %2366 = vmatpush1.msra.mxu0 0.0
        %2367 = vmatprep.subr.mxu0 0.0
        %2368 = vmatpush1.msra.mxu0 0.0
        %2369 = vmatprep.subr.mxu0 0.0
        %2370 = vmatpush1.msra.mxu0 0.0
        %2371 = vmatprep.subr.mxu0 0.0
        %2372 = vmatpush1.msra.mxu0 0.0
        %2373 = vmatprep.subr.mxu0 0.0
        %2374 = vmatpush1.msra.mxu0 0.0
        %2375 = vmatprep.subr.mxu0 0.0
        %2376 = vmatpush1.msra.mxu0 0.0
        %2377 = vmatprep.subr.mxu0 0.0
        %2378 = vmatpush1.msra.mxu0 0.0
        %2379 = vmatprep.subr.mxu0 0.0
        %2380 = vmatpush1.msra.mxu0 0.0
        %2381 = vmatprep.subr.mxu0 0.0
        %2382 = vmatpush1.msra.mxu0 0.0
        %2383 = vmatprep.subr.mxu0 0.0
        %2384 = vmatpush1.msra.mxu0 0.0
        %2385 = vmatprep.mubr.f32.mxu0 0.0
        %2386 = vmatmul.mubr.f32.gmra.mrb[0].mxu0 %v2316
        %v2387 = vpop.f32.mrb[0].mxu0
        %v2388 = vadd.f32 0.0, %v2387
        %v2389 = vpop.f32.mrb[0].mxu0
        %2390 = vmatprep.mubr.f32.mxu0 0.0
        %2391 = vmatmul.mubr.f32.gmra.mrb[0].mxu0 %v2319
        %v2392 = vpop.f32.mrb[0].mxu0
        %v2393 = vadd.f32 0.0, %v2392
        %v2394 = vpop.f32.mrb[0].mxu0
        %2395 = vdwg.mxu0
        %v2397 = vsel %vm2314, %v2230, 0
        %v2400 = vsel %vm2314, %v2231, 0
        %2402 = vmatprep.subr.mxu0 0.0
        %2403 = vmatpush1.msra.mxu0 %v2227
        %2404 = vmatprep.subr.mxu0 0.0
        %2405 = vmatpush1.msra.mxu0 0.0
        %2406 = vmatprep.subr.mxu0 0.0
        %2407 = vmatpush1.msra.mxu0 0.0
        %2408 = vmatprep.subr.mxu0 0.0
        %2409 = vmatpush1.msra.mxu0 0.0
        %2410 = vmatprep.subr.mxu0 0.0
        %2411 = vmatpush1.msra.mxu0 0.0
        %2412 = vmatprep.subr.mxu0 0.0
        %2413 = vmatpush1.msra.mxu0 0.0
        %2414 = vmatprep.subr.mxu0 0.0
        %2415 = vmatpush1.msra.mxu0 0.0
        %2416 = vmatprep.subr.mxu0 0.0
        %2417 = vmatpush1.msra.mxu0 0.0
        %2418 = vmatprep.subr.mxu0 0.0
        %2419 = vmatpush1.msra.mxu0 0.0
        %2420 = vmatprep.subr.mxu0 0.0
        %2421 = vmatpush1.msra.mxu0 0.0
        %2422 = vmatprep.subr.mxu0 0.0
        %2423 = vmatpush1.msra.mxu0 0.0
        %2424 = vmatprep.subr.mxu0 0.0
        %2425 = vmatpush1.msra.mxu0 0.0
        %2426 = vmatprep.subr.mxu0 0.0
        %2427 = vmatpush1.msra.mxu0 0.0
        %2428 = vmatprep.subr.mxu0 0.0
        %2429 = vmatpush1.msra.mxu0 0.0
        %2430 = vmatprep.subr.mxu0 0.0
        %2431 = vmatpush1.msra.mxu0 0.0
        %2432 = vmatprep.subr.mxu0 0.0
        %2433 = vmatpush1.msra.mxu0 0.0
        %2434 = vmatprep.subr.mxu0 0.0
        %2435 = vmatpush1.msra.mxu0 0.0
        %2436 = vmatprep.subr.mxu0 0.0
        %2437 = vmatpush1.msra.mxu0 0.0
        %2438 = vmatprep.subr.mxu0 0.0
        %2439 = vmatpush1.msra.mxu0 0.0
        %2440 = vmatprep.subr.mxu0 0.0
        %2441 = vmatpush1.msra.mxu0 0.0
        %2442 = vmatprep.subr.mxu0 0.0
        %2443 = vmatpush1.msra.mxu0 0.0
        %2444 = vmatprep.subr.mxu0 0.0
        %2445 = vmatpush1.msra.mxu0 0.0
        %2446 = vmatprep.subr.mxu0 0.0
        %2447 = vmatpush1.msra.mxu0 0.0
        %2448 = vmatprep.subr.mxu0 0.0
        %2449 = vmatpush1.msra.mxu0 0.0
        %2450 = vmatprep.subr.mxu0 0.0
        %2451 = vmatpush1.msra.mxu0 0.0
        %2452 = vmatprep.subr.mxu0 0.0
        %2453 = vmatpush1.msra.mxu0 0.0
        %2454 = vmatprep.subr.mxu0 0.0
        %2455 = vmatpush1.msra.mxu0 0.0
        %2456 = vmatprep.subr.mxu0 0.0
        %2457 = vmatpush1.msra.mxu0 0.0
        %2458 = vmatprep.subr.mxu0 0.0
        %2459 = vmatpush1.msra.mxu0 0.0
        %2460 = vmatprep.subr.mxu0 0.0
        %2461 = vmatpush1.msra.mxu0 0.0
        %2462 = vmatprep.subr.mxu0 0.0
        %2463 = vmatpush1.msra.mxu0 0.0
        %2464 = vmatprep.subr.mxu0 0.0
        %2465 = vmatpush1.msra.mxu0 0.0
        %2466 = vmatprep.mubr.f32.mxu0 0.0
        %2467 = vmatmul.mubr.f32.gmra.mrb[0].mxu0 %v2397
        %v2468 = vpop.f32.mrb[0].mxu0
        %v2469 = vadd.f32 %v2388, %v2468
        %v2470 = vpop.f32.mrb[0].mxu0
        %2471 = vmatprep.mubr.f32.mxu0 0.0
        %2472 = vmatmul.mubr.f32.gmra.mrb[0].mxu0 %v2400
        %v2473 = vpop.f32.mrb[0].mxu0
        %v2474 = vadd.f32 %v2393, %v2473
        %v2475 = vpop.f32.mrb[0].mxu0
        %2476 = vdwg.mxu0
        %s2477 = scalar_lea.vmem [#allocation4], 128
        %v2478 = vld [vmem:[%s2477] sm:$0xff]
        %v2479 = vld [vmem:[%s2477 + $0x8] sm:$0xff]
        %v2480 = vld [vmem:[%s2477 + $0x10] sm:$0xff]
        %v2481 = vld [vmem:[%s2477 + $0x18] sm:$0xff]
        %v2482 = vld [vmem:[%s2477 + $0x20] sm:$0xff]
        %v2483 = vld [vmem:[%s2477 + $0x28] sm:$0xff]
        %v2484 = vld [vmem:[%s2477 + $0x30] sm:$0xff]
        %v2485 = vld [vmem:[%s2477 + $0x38] sm:$0xff]
        %2486 = vmatprep.subr.mxu0 0.0
        %2487 = vmatpush1.msra.mxu0 %v2478
        %2488 = vmatprep.subr.mxu0 0.0
        %2489 = vmatpush1.msra.mxu0 %v2479
        %2490 = vmatprep.subr.mxu0 0.0
        %2491 = vmatpush1.msra.mxu0 %v2480
        %2492 = vmatprep.subr.mxu0 0.0
        %2493 = vmatpush1.msra.mxu0 %v2481
        %2494 = vmatprep.subr.mxu0 0.0
        %2495 = vmatpush1.msra.mxu0 %v2482
        %2496 = vmatprep.subr.mxu0 0.0
        %2497 = vmatpush1.msra.mxu0 %v2483
        %2498 = vmatprep.subr.mxu0 0.0
        %2499 = vmatpush1.msra.mxu0 %v2484
        %2500 = vmatprep.subr.mxu0 0.0
        %2501 = vmatpush1.msra.mxu0 %v2485
        %2502 = vmatprep.subr.mxu0 0.0
        %2503 = vmatpush1.msra.mxu0 0.0
        %2504 = vmatprep.subr.mxu0 0.0
        %2505 = vmatpush1.msra.mxu0 0.0
        %2506 = vmatprep.subr.mxu0 0.0
        %2507 = vmatpush1.msra.mxu0 0.0
        %2508 = vmatprep.subr.mxu0 0.0
        %2509 = vmatpush1.msra.mxu0 0.0
        %2510 = vmatprep.subr.mxu0 0.0
        %2511 = vmatpush1.msra.mxu0 0.0
        %2512 = vmatprep.subr.mxu0 0.0
        %2513 = vmatpush1.msra.mxu0 0.0
        %2514 = vmatprep.subr.mxu0 0.0
        %2515 = vmatpush1.msra.mxu0 0.0
        %2516 = vmatprep.subr.mxu0 0.0
        %2517 = vmatpush1.msra.mxu0 0.0
        %2518 = vmatprep.subr.mxu0 0.0
        %2519 = vmatpush1.msra.mxu0 0.0
        %2520 = vmatprep.subr.mxu0 0.0
        %2521 = vmatpush1.msra.mxu0 0.0
        %2522 = vmatprep.subr.mxu0 0.0
        %2523 = vmatpush1.msra.mxu0 0.0
        %2524 = vmatprep.subr.mxu0 0.0
        %2525 = vmatpush1.msra.mxu0 0.0
        %2526 = vmatprep.subr.mxu0 0.0
        %2527 = vmatpush1.msra.mxu0 0.0
        %2528 = vmatprep.subr.mxu0 0.0
        %2529 = vmatpush1.msra.mxu0 0.0
        %2530 = vmatprep.subr.mxu0 0.0
        %2531 = vmatpush1.msra.mxu0 0.0
        %2532 = vmatprep.subr.mxu0 0.0
        %2533 = vmatpush1.msra.mxu0 0.0
        %2534 = vmatprep.subr.mxu0 0.0
        %2535 = vmatpush1.msra.mxu0 0.0
        %2536 = vmatprep.subr.mxu0 0.0
        %2537 = vmatpush1.msra.mxu0 0.0
        %2538 = vmatprep.subr.mxu0 0.0
        %2539 = vmatpush1.msra.mxu0 0.0
        %2540 = vmatprep.subr.mxu0 0.0
        %2541 = vmatpush1.msra.mxu0 0.0
        %2542 = vmatprep.subr.mxu0 0.0
        %2543 = vmatpush1.msra.mxu0 0.0
        %2544 = vmatprep.subr.mxu0 0.0
        %2545 = vmatpush1.msra.mxu0 0.0
        %2546 = vmatprep.subr.mxu0 0.0
        %2547 = vmatpush1.msra.mxu0 0.0
        %2548 = vmatprep.subr.mxu0 0.0
        %2549 = vmatpush1.msra.mxu0 0.0
        %2550 = vmatprep.mubr.f32.mxu0 0.0
        %2551 = vmatmul.mubr.f32.gmra.mrb[0].mxu0 %v2158
        %v2552 = vpop.f32.mrb[0].mxu0
        %v2553 = vadd.f32 0.0, %v2552
        %v2554 = vpop.f32.mrb[0].mxu0
        %2555 = vdwg.mxu0
        %s2556 = scalar_lea.vmem %s5, 32
        %v2557 = vld [vmem:[%s2556] sm:$0xff]
        %v2558 = vld [vmem:[%s2556 + $0x8] sm:$0xff]
        %v2560 = vsel %vm2314, %v2557, 0
        %v2563 = vsel %vm2314, %v2558, 0
        %2565 = vmatprep.subr.mxu0 0.0
        %2566 = vmatpush1.msra.mxu0 %v2553
        %2567 = vmatprep.subr.mxu0 0.0
        %2568 = vmatpush1.msra.mxu0 0.0
        %2569 = vmatprep.subr.mxu0 0.0
        %2570 = vmatpush1.msra.mxu0 0.0
        %2571 = vmatprep.subr.mxu0 0.0
        %2572 = vmatpush1.msra.mxu0 0.0
        %2573 = vmatprep.subr.mxu0 0.0
        %2574 = vmatpush1.msra.mxu0 0.0
        %2575 = vmatprep.subr.mxu0 0.0
        %2576 = vmatpush1.msra.mxu0 0.0
        %2577 = vmatprep.subr.mxu0 0.0
        %2578 = vmatpush1.msra.mxu0 0.0
        %2579 = vmatprep.subr.mxu0 0.0
        %2580 = vmatpush1.msra.mxu0 0.0
        %2581 = vmatprep.subr.mxu0 0.0
        %2582 = vmatpush1.msra.mxu0 0.0
        %2583 = vmatprep.subr.mxu0 0.0
        %2584 = vmatpush1.msra.mxu0 0.0
        %2585 = vmatprep.subr.mxu0 0.0
        %2586 = vmatpush1.msra.mxu0 0.0
        %2587 = vmatprep.subr.mxu0 0.0
        %2588 = vmatpush1.msra.mxu0 0.0
        %2589 = vmatprep.subr.mxu0 0.0
        %2590 = vmatpush1.msra.mxu0 0.0
        %2591 = vmatprep.subr.mxu0 0.0
        %2592 = vmatpush1.msra.mxu0 0.0
        %2593 = vmatprep.subr.mxu0 0.0
        %2594 = vmatpush1.msra.mxu0 0.0
        %2595 = vmatprep.subr.mxu0 0.0
        %2596 = vmatpush1.msra.mxu0 0.0
        %2597 = vmatprep.subr.mxu0 0.0
        %2598 = vmatpush1.msra.mxu0 0.0
        %2599 = vmatprep.subr.mxu0 0.0
        %2600 = vmatpush1.msra.mxu0 0.0
        %2601 = vmatprep.subr.mxu0 0.0
        %2602 = vmatpush1.msra.mxu0 0.0
        %2603 = vmatprep.subr.mxu0 0.0
        %2604 = vmatpush1.msra.mxu0 0.0
        %2605 = vmatprep.subr.mxu0 0.0
        %2606 = vmatpush1.msra.mxu0 0.0
        %2607 = vmatprep.subr.mxu0 0.0
        %2608 = vmatpush1.msra.mxu0 0.0
        %2609 = vmatprep.subr.mxu0 0.0
        %2610 = vmatpush1.msra.mxu0 0.0
        %2611 = vmatprep.subr.mxu0 0.0
        %2612 = vmatpush1.msra.mxu0 0.0
        %2613 = vmatprep.subr.mxu0 0.0
        %2614 = vmatpush1.msra.mxu0 0.0
        %2615 = vmatprep.subr.mxu0 0.0
        %2616 = vmatpush1.msra.mxu0 0.0
        %2617 = vmatprep.subr.mxu0 0.0
        %2618 = vmatpush1.msra.mxu0 0.0
        %2619 = vmatprep.subr.mxu0 0.0
        %2620 = vmatpush1.msra.mxu0 0.0
        %2621 = vmatprep.subr.mxu0 0.0
        %2622 = vmatpush1.msra.mxu0 0.0
        %2623 = vmatprep.subr.mxu0 0.0
        %2624 = vmatpush1.msra.mxu0 0.0
        %2625 = vmatprep.subr.mxu0 0.0
        %2626 = vmatpush1.msra.mxu0 0.0
        %2627 = vmatprep.subr.mxu0 0.0
        %2628 = vmatpush1.msra.mxu0 0.0
        %2629 = vmatprep.mubr.f32.mxu0 0.0
        %2630 = vmatmul.mubr.f32.gmra.mrb[0].mxu0 %v2560
        %v2631 = vpop.f32.mrb[0].mxu0
        %v2632 = vadd.f32 0.0, %v2631
        %v2633 = vpop.f32.mrb[0].mxu0
        %2634 = vmatprep.mubr.f32.mxu0 0.0
        %2635 = vmatmul.mubr.f32.gmra.mrb[0].mxu0 %v2563
        %v2636 = vpop.f32.mrb[0].mxu0
        %v2637 = vadd.f32 0.0, %v2636
        %v2638 = vpop.f32.mrb[0].mxu0
        %2639 = vdwg.mxu0
        %v2640 = vadd.f32 %v2469, %v2632
        %v2641 = vadd.f32 %v2474, %v2637
        %s2642 = scalar_lea.vmem [#allocation4], 192
        %v2643 = vld [vmem:[%s2642] sm:$0xff]
        %v2644 = vld [vmem:[%s2642 + $0x8] sm:$0xff]
        %v2645 = vld [vmem:[%s2642 + $0x10] sm:$0xff]
        %v2646 = vld [vmem:[%s2642 + $0x18] sm:$0xff]
        %v2647 = vld [vmem:[%s2642 + $0x20] sm:$0xff]
        %v2648 = vld [vmem:[%s2642 + $0x28] sm:$0xff]
        %v2649 = vld [vmem:[%s2642 + $0x30] sm:$0xff]
        %v2650 = vld [vmem:[%s2642 + $0x38] sm:$0xff]
        %2651 = vmatprep.subr.mxu0 0.0
        %2652 = vmatpush1.msra.mxu0 %v2643
        %2653 = vmatprep.subr.mxu0 0.0
        %2654 = vmatpush1.msra.mxu0 %v2644
        %2655 = vmatprep.subr.mxu0 0.0
        %2656 = vmatpush1.msra.mxu0 %v2645
        %2657 = vmatprep.subr.mxu0 0.0
        %2658 = vmatpush1.msra.mxu0 %v2646
        %2659 = vmatprep.subr.mxu0 0.0
        %2660 = vmatpush1.msra.mxu0 %v2647
        %2661 = vmatprep.subr.mxu0 0.0
        %2662 = vmatpush1.msra.mxu0 %v2648
        %2663 = vmatprep.subr.mxu0 0.0
        %2664 = vmatpush1.msra.mxu0 %v2649
        %2665 = vmatprep.subr.mxu0 0.0
        %2666 = vmatpush1.msra.mxu0 %v2650
        %2667 = vmatprep.subr.mxu0 0.0
        %2668 = vmatpush1.msra.mxu0 0.0
        %2669 = vmatprep.subr.mxu0 0.0
        %2670 = vmatpush1.msra.mxu0 0.0
        %2671 = vmatprep.subr.mxu0 0.0
        %2672 = vmatpush1.msra.mxu0 0.0
        %2673 = vmatprep.subr.mxu0 0.0
        %2674 = vmatpush1.msra.mxu0 0.0
        %2675 = vmatprep.subr.mxu0 0.0
        %2676 = vmatpush1.msra.mxu0 0.0
        %2677 = vmatprep.subr.mxu0 0.0
        %2678 = vmatpush1.msra.mxu0 0.0
        %2679 = vmatprep.subr.mxu0 0.0
        %2680 = vmatpush1.msra.mxu0 0.0
        %2681 = vmatprep.subr.mxu0 0.0
        %2682 = vmatpush1.msra.mxu0 0.0
        %2683 = vmatprep.subr.mxu0 0.0
        %2684 = vmatpush1.msra.mxu0 0.0
        %2685 = vmatprep.subr.mxu0 0.0
        %2686 = vmatpush1.msra.mxu0 0.0
        %2687 = vmatprep.subr.mxu0 0.0
        %2688 = vmatpush1.msra.mxu0 0.0
        %2689 = vmatprep.subr.mxu0 0.0
        %2690 = vmatpush1.msra.mxu0 0.0
        %2691 = vmatprep.subr.mxu0 0.0
        %2692 = vmatpush1.msra.mxu0 0.0
        %2693 = vmatprep.subr.mxu0 0.0
        %2694 = vmatpush1.msra.mxu0 0.0
        %2695 = vmatprep.subr.mxu0 0.0
        %2696 = vmatpush1.msra.mxu0 0.0
        %2697 = vmatprep.subr.mxu0 0.0
        %2698 = vmatpush1.msra.mxu0 0.0
        %2699 = vmatprep.subr.mxu0 0.0
        %2700 = vmatpush1.msra.mxu0 0.0
        %2701 = vmatprep.subr.mxu0 0.0
        %2702 = vmatpush1.msra.mxu0 0.0
        %2703 = vmatprep.subr.mxu0 0.0
        %2704 = vmatpush1.msra.mxu0 0.0
        %2705 = vmatprep.subr.mxu0 0.0
        %2706 = vmatpush1.msra.mxu0 0.0
        %2707 = vmatprep.subr.mxu0 0.0
        %2708 = vmatpush1.msra.mxu0 0.0
        %2709 = vmatprep.subr.mxu0 0.0
        %2710 = vmatpush1.msra.mxu0 0.0
        %2711 = vmatprep.subr.mxu0 0.0
        %2712 = vmatpush1.msra.mxu0 0.0
        %2713 = vmatprep.subr.mxu0 0.0
        %2714 = vmatpush1.msra.mxu0 0.0
        %2715 = vmatprep.mubr.f32.mxu0 0.0
        %2716 = vmatmul.mubr.f32.gmra.mrb[0].mxu0 %v2158
        %v2717 = vpop.f32.mrb[0].mxu0
        %v2718 = vadd.f32 0.0, %v2717
        %v2719 = vpop.f32.mrb[0].mxu0
        %2720 = vdwg.mxu0
        %s2721 = scalar_lea.vmem %s5, 48
        %v2722 = vld [vmem:[%s2721] sm:$0xff]
        %v2723 = vld [vmem:[%s2721 + $0x8] sm:$0xff]
        %v2725 = vsel %vm2314, %v2722, 0
        %v2728 = vsel %vm2314, %v2723, 0
        %2730 = vmatprep.subr.mxu0 0.0
        %2731 = vmatpush1.msra.mxu0 %v2718
        %2732 = vmatprep.subr.mxu0 0.0
        %2733 = vmatpush1.msra.mxu0 0.0
        %2734 = vmatprep.subr.mxu0 0.0
        %2735 = vmatpush1.msra.mxu0 0.0
        %2736 = vmatprep.subr.mxu0 0.0
        %2737 = vmatpush1.msra.mxu0 0.0
        %2738 = vmatprep.subr.mxu0 0.0
        %2739 = vmatpush1.msra.mxu0 0.0
        %2740 = vmatprep.subr.mxu0 0.0
        %2741 = vmatpush1.msra.mxu0 0.0
        %2742 = vmatprep.subr.mxu0 0.0
        %2743 = vmatpush1.msra.mxu0 0.0
        %2744 = vmatprep.subr.mxu0 0.0
        %2745 = vmatpush1.msra.mxu0 0.0
        %2746 = vmatprep.subr.mxu0 0.0
        %2747 = vmatpush1.msra.mxu0 0.0
        %2748 = vmatprep.subr.mxu0 0.0
        %2749 = vmatpush1.msra.mxu0 0.0
        %2750 = vmatprep.subr.mxu0 0.0
        %2751 = vmatpush1.msra.mxu0 0.0
        %2752 = vmatprep.subr.mxu0 0.0
        %2753 = vmatpush1.msra.mxu0 0.0
        %2754 = vmatprep.subr.mxu0 0.0
        %2755 = vmatpush1.msra.mxu0 0.0
        %2756 = vmatprep.subr.mxu0 0.0
        %2757 = vmatpush1.msra.mxu0 0.0
        %2758 = vmatprep.subr.mxu0 0.0
        %2759 = vmatpush1.msra.mxu0 0.0
        %2760 = vmatprep.subr.mxu0 0.0
        %2761 = vmatpush1.msra.mxu0 0.0
        %2762 = vmatprep.subr.mxu0 0.0
        %2763 = vmatpush1.msra.mxu0 0.0
        %2764 = vmatprep.subr.mxu0 0.0
        %2765 = vmatpush1.msra.mxu0 0.0
        %2766 = vmatprep.subr.mxu0 0.0
        %2767 = vmatpush1.msra.mxu0 0.0
        %2768 = vmatprep.subr.mxu0 0.0
        %2769 = vmatpush1.msra.mxu0 0.0
        %2770 = vmatprep.subr.mxu0 0.0
        %2771 = vmatpush1.msra.mxu0 0.0
        %2772 = vmatprep.subr.mxu0 0.0
        %2773 = vmatpush1.msra.mxu0 0.0
        %2774 = vmatprep.subr.mxu0 0.0
        %2775 = vmatpush1.msra.mxu0 0.0
        %2776 = vmatprep.subr.mxu0 0.0
        %2777 = vmatpush1.msra.mxu0 0.0
        %2778 = vmatprep.subr.mxu0 0.0
        %2779 = vmatpush1.msra.mxu0 0.0
        %2780 = vmatprep.subr.mxu0 0.0
        %2781 = vmatpush1.msra.mxu0 0.0
        %2782 = vmatprep.subr.mxu0 0.0
        %2783 = vmatpush1.msra.mxu0 0.0
        %2784 = vmatprep.subr.mxu0 0.0
        %2785 = vmatpush1.msra.mxu0 0.0
        %2786 = vmatprep.subr.mxu0 0.0
        %2787 = vmatpush1.msra.mxu0 0.0
        %2788 = vmatprep.subr.mxu0 0.0
        %2789 = vmatpush1.msra.mxu0 0.0
        %2790 = vmatprep.subr.mxu0 0.0
        %2791 = vmatpush1.msra.mxu0 0.0
        %2792 = vmatprep.subr.mxu0 0.0
        %2793 = vmatpush1.msra.mxu0 0.0
        %2794 = vmatprep.mubr.f32.mxu0 0.0
        %2795 = vmatmul.mubr.f32.gmra.mrb[0].mxu0 %v2725
        %v2796 = vpop.f32.mrb[0].mxu0
        %v2797 = vadd.f32 0.0, %v2796
        %v2798 = vpop.f32.mrb[0].mxu0
        %2799 = vmatprep.mubr.f32.mxu0 0.0
        %2800 = vmatmul.mubr.f32.gmra.mrb[0].mxu0 %v2728
        %v2801 = vpop.f32.mrb[0].mxu0
        %v2802 = vadd.f32 0.0, %v2801
        %v2803 = vpop.f32.mrb[0].mxu0
        %2804 = vdwg.mxu0
        %v2805 = vadd.f32 %v2640, %v2797
        %v2806 = vadd.f32 %v2641, %v2802
        %s2807 = scalar_lea.vmem [#allocation4], 256
        %v2808 = vld [vmem:[%s2807] sm:$0xff]
        %v2809 = vld [vmem:[%s2807 + $0x8] sm:$0xff]
        %v2810 = vld [vmem:[%s2807 + $0x10] sm:$0xff]
        %v2811 = vld [vmem:[%s2807 + $0x18] sm:$0xff]
        %v2812 = vld [vmem:[%s2807 + $0x20] sm:$0xff]
        %v2813 = vld [vmem:[%s2807 + $0x28] sm:$0xff]
        %v2814 = vld [vmem:[%s2807 + $0x30] sm:$0xff]
        %v2815 = vld [vmem:[%s2807 + $0x38] sm:$0xff]
        %2816 = vmatprep.subr.mxu0 0.0
        %2817 = vmatpush1.msra.mxu0 %v2808
        %2818 = vmatprep.subr.mxu0 0.0
        %2819 = vmatpush1.msra.mxu0 %v2809
        %2820 = vmatprep.subr.mxu0 0.0
        %2821 = vmatpush1.msra.mxu0 %v2810
        %2822 = vmatprep.subr.mxu0 0.0
        %2823 = vmatpush1.msra.mxu0 %v2811
        %2824 = vmatprep.subr.mxu0 0.0
        %2825 = vmatpush1.msra.mxu0 %v2812
        %2826 = vmatprep.subr.mxu0 0.0
        %2827 = vmatpush1.msra.mxu0 %v2813
        %2828 = vmatprep.subr.mxu0 0.0
        %2829 = vmatpush1.msra.mxu0 %v2814
        %2830 = vmatprep.subr.mxu0 0.0
        %2831 = vmatpush1.msra.mxu0 %v2815
        %2832 = vmatprep.subr.mxu0 0.0
        %2833 = vmatpush1.msra.mxu0 0.0
        %2834 = vmatprep.subr.mxu0 0.0
        %2835 = vmatpush1.msra.mxu0 0.0
        %2836 = vmatprep.subr.mxu0 0.0
        %2837 = vmatpush1.msra.mxu0 0.0
        %2838 = vmatprep.subr.mxu0 0.0
        %2839 = vmatpush1.msra.mxu0 0.0
        %2840 = vmatprep.subr.mxu0 0.0
        %2841 = vmatpush1.msra.mxu0 0.0
        %2842 = vmatprep.subr.mxu0 0.0
        %2843 = vmatpush1.msra.mxu0 0.0
        %2844 = vmatprep.subr.mxu0 0.0
        %2845 = vmatpush1.msra.mxu0 0.0
        %2846 = vmatprep.subr.mxu0 0.0
        %2847 = vmatpush1.msra.mxu0 0.0
        %2848 = vmatprep.subr.mxu0 0.0
        %2849 = vmatpush1.msra.mxu0 0.0
        %2850 = vmatprep.subr.mxu0 0.0
        %2851 = vmatpush1.msra.mxu0 0.0
        %2852 = vmatprep.subr.mxu0 0.0
        %2853 = vmatpush1.msra.mxu0 0.0
        %2854 = vmatprep.subr.mxu0 0.0
        %2855 = vmatpush1.msra.mxu0 0.0
        %2856 = vmatprep.subr.mxu0 0.0
        %2857 = vmatpush1.msra.mxu0 0.0
        %2858 = vmatprep.subr.mxu0 0.0
        %2859 = vmatpush1.msra.mxu0 0.0
        %2860 = vmatprep.subr.mxu0 0.0
        %2861 = vmatpush1.msra.mxu0 0.0
        %2862 = vmatprep.subr.mxu0 0.0
        %2863 = vmatpush1.msra.mxu0 0.0
        %2864 = vmatprep.subr.mxu0 0.0
        %2865 = vmatpush1.msra.mxu0 0.0
        %2866 = vmatprep.subr.mxu0 0.0
        %2867 = vmatpush1.msra.mxu0 0.0
        %2868 = vmatprep.subr.mxu0 0.0
        %2869 = vmatpush1.msra.mxu0 0.0
        %2870 = vmatprep.subr.mxu0 0.0
        %2871 = vmatpush1.msra.mxu0 0.0
        %2872 = vmatprep.subr.mxu0 0.0
        %2873 = vmatpush1.msra.mxu0 0.0
        %2874 = vmatprep.subr.mxu0 0.0
        %2875 = vmatpush1.msra.mxu0 0.0
        %2876 = vmatprep.subr.mxu0 0.0
        %2877 = vmatpush1.msra.mxu0 0.0
        %2878 = vmatprep.subr.mxu0 0.0
        %2879 = vmatpush1.msra.mxu0 0.0
        %2880 = vmatprep.mubr.f32.mxu0 0.0
        %2881 = vmatmul.mubr.f32.gmra.mrb[0].mxu0 %v2158
        %v2882 = vpop.f32.mrb[0].mxu0
        %v2883 = vadd.f32 0.0, %v2882
        %v2884 = vpop.f32.mrb[0].mxu0
        %2885 = vdwg.mxu0
        %s2886 = scalar_lea.vmem %s5, 64
        %v2887 = vld [vmem:[%s2886] sm:$0xff]
        %v2888 = vld [vmem:[%s2886 + $0x8] sm:$0xff]
        %v2890 = vsel %vm2314, %v2887, 0
        %v2893 = vsel %vm2314, %v2888, 0
        %2895 = vmatprep.subr.mxu0 0.0
        %2896 = vmatpush1.msra.mxu0 %v2883
        %2897 = vmatprep.subr.mxu0 0.0
        %2898 = vmatpush1.msra.mxu0 0.0
        %2899 = vmatprep.subr.mxu0 0.0
        %2900 = vmatpush1.msra.mxu0 0.0
        %2901 = vmatprep.subr.mxu0 0.0
        %2902 = vmatpush1.msra.mxu0 0.0
        %2903 = vmatprep.subr.mxu0 0.0
        %2904 = vmatpush1.msra.mxu0 0.0
        %2905 = vmatprep.subr.mxu0 0.0
        %2906 = vmatpush1.msra.mxu0 0.0
        %2907 = vmatprep.subr.mxu0 0.0
        %2908 = vmatpush1.msra.mxu0 0.0
        %2909 = vmatprep.subr.mxu0 0.0
        %2910 = vmatpush1.msra.mxu0 0.0
        %2911 = vmatprep.subr.mxu0 0.0
        %2912 = vmatpush1.msra.mxu0 0.0
        %2913 = vmatprep.subr.mxu0 0.0
        %2914 = vmatpush1.msra.mxu0 0.0
        %2915 = vmatprep.subr.mxu0 0.0
        %2916 = vmatpush1.msra.mxu0 0.0
        %2917 = vmatprep.subr.mxu0 0.0
        %2918 = vmatpush1.msra.mxu0 0.0
        %2919 = vmatprep.subr.mxu0 0.0
        %2920 = vmatpush1.msra.mxu0 0.0
        %2921 = vmatprep.subr.mxu0 0.0
        %2922 = vmatpush1.msra.mxu0 0.0
        %2923 = vmatprep.subr.mxu0 0.0
        %2924 = vmatpush1.msra.mxu0 0.0
        %2925 = vmatprep.subr.mxu0 0.0
        %2926 = vmatpush1.msra.mxu0 0.0
        %2927 = vmatprep.subr.mxu0 0.0
        %2928 = vmatpush1.msra.mxu0 0.0
        %2929 = vmatprep.subr.mxu0 0.0
        %2930 = vmatpush1.msra.mxu0 0.0
        %2931 = vmatprep.subr.mxu0 0.0
        %2932 = vmatpush1.msra.mxu0 0.0
        %2933 = vmatprep.subr.mxu0 0.0
        %2934 = vmatpush1.msra.mxu0 0.0
        %2935 = vmatprep.subr.mxu0 0.0
        %2936 = vmatpush1.msra.mxu0 0.0
        %2937 = vmatprep.subr.mxu0 0.0
        %2938 = vmatpush1.msra.mxu0 0.0
        %2939 = vmatprep.subr.mxu0 0.0
        %2940 = vmatpush1.msra.mxu0 0.0
        %2941 = vmatprep.subr.mxu0 0.0
        %2942 = vmatpush1.msra.mxu0 0.0
        %2943 = vmatprep.subr.mxu0 0.0
        %2944 = vmatpush1.msra.mxu0 0.0
        %2945 = vmatprep.subr.mxu0 0.0
        %2946 = vmatpush1.msra.mxu0 0.0
        %2947 = vmatprep.subr.mxu0 0.0
        %2948 = vmatpush1.msra.mxu0 0.0
        %2949 = vmatprep.subr.mxu0 0.0
        %2950 = vmatpush1.msra.mxu0 0.0
        %2951 = vmatprep.subr.mxu0 0.0
        %2952 = vmatpush1.msra.mxu0 0.0
        %2953 = vmatprep.subr.mxu0 0.0
        %2954 = vmatpush1.msra.mxu0 0.0
        %2955 = vmatprep.subr.mxu0 0.0
        %2956 = vmatpush1.msra.mxu0 0.0
        %2957 = vmatprep.subr.mxu0 0.0
        %2958 = vmatpush1.msra.mxu0 0.0
        %2959 = vmatprep.mubr.f32.mxu0 0.0
        %2960 = vmatmul.mubr.f32.gmra.mrb[0].mxu0 %v2890
        %v2961 = vpop.f32.mrb[0].mxu0
        %v2962 = vadd.f32 0.0, %v2961
        %v2963 = vpop.f32.mrb[0].mxu0
        %2964 = vmatprep.mubr.f32.mxu0 0.0
        %2965 = vmatmul.mubr.f32.gmra.mrb[0].mxu0 %v2893
        %v2966 = vpop.f32.mrb[0].mxu0
        %v2967 = vadd.f32 0.0, %v2966
        %v2968 = vpop.f32.mrb[0].mxu0
        %2969 = vdwg.mxu0
        %v2970 = vadd.f32 %v2805, %v2962
        %v2971 = vadd.f32 %v2806, %v2967
        %s2972 = scalar_lea.vmem [#allocation4], 320
        %v2973 = vld [vmem:[%s2972] sm:$0xff]
        %v2974 = vld [vmem:[%s2972 + $0x8] sm:$0xff]
        %v2975 = vld [vmem:[%s2972 + $0x10] sm:$0xff]
        %v2976 = vld [vmem:[%s2972 + $0x18] sm:$0xff]
        %v2977 = vld [vmem:[%s2972 + $0x20] sm:$0xff]
        %v2978 = vld [vmem:[%s2972 + $0x28] sm:$0xff]
        %v2979 = vld [vmem:[%s2972 + $0x30] sm:$0xff]
        %v2980 = vld [vmem:[%s2972 + $0x38] sm:$0xff]
        %2981 = vmatprep.subr.mxu0 0.0
        %2982 = vmatpush1.msra.mxu0 %v2973
        %2983 = vmatprep.subr.mxu0 0.0
        %2984 = vmatpush1.msra.mxu0 %v2974
        %2985 = vmatprep.subr.mxu0 0.0
        %2986 = vmatpush1.msra.mxu0 %v2975
        %2987 = vmatprep.subr.mxu0 0.0
        %2988 = vmatpush1.msra.mxu0 %v2976
        %2989 = vmatprep.subr.mxu0 0.0
        %2990 = vmatpush1.msra.mxu0 %v2977
        %2991 = vmatprep.subr.mxu0 0.0
        %2992 = vmatpush1.msra.mxu0 %v2978
        %2993 = vmatprep.subr.mxu0 0.0
        %2994 = vmatpush1.msra.mxu0 %v2979
        %2995 = vmatprep.subr.mxu0 0.0
        %2996 = vmatpush1.msra.mxu0 %v2980
        %2997 = vmatprep.subr.mxu0 0.0
        %2998 = vmatpush1.msra.mxu0 0.0
        %2999 = vmatprep.subr.mxu0 0.0
        %3000 = vmatpush1.msra.mxu0 0.0
        %3001 = vmatprep.subr.mxu0 0.0
        %3002 = vmatpush1.msra.mxu0 0.0
        %3003 = vmatprep.subr.mxu0 0.0
        %3004 = vmatpush1.msra.mxu0 0.0
        %3005 = vmatprep.subr.mxu0 0.0
        %3006 = vmatpush1.msra.mxu0 0.0
        %3007 = vmatprep.subr.mxu0 0.0
        %3008 = vmatpush1.msra.mxu0 0.0
        %3009 = vmatprep.subr.mxu0 0.0
        %3010 = vmatpush1.msra.mxu0 0.0
        %3011 = vmatprep.subr.mxu0 0.0
        %3012 = vmatpush1.msra.mxu0 0.0
        %3013 = vmatprep.subr.mxu0 0.0
        %3014 = vmatpush1.msra.mxu0 0.0
        %3015 = vmatprep.subr.mxu0 0.0
        %3016 = vmatpush1.msra.mxu0 0.0
        %3017 = vmatprep.subr.mxu0 0.0
        %3018 = vmatpush1.msra.mxu0 0.0
        %3019 = vmatprep.subr.mxu0 0.0
        %3020 = vmatpush1.msra.mxu0 0.0
        %3021 = vmatprep.subr.mxu0 0.0
        %3022 = vmatpush1.msra.mxu0 0.0
        %3023 = vmatprep.subr.mxu0 0.0
        %3024 = vmatpush1.msra.mxu0 0.0
        %3025 = vmatprep.subr.mxu0 0.0
        %3026 = vmatpush1.msra.mxu0 0.0
        %3027 = vmatprep.subr.mxu0 0.0
        %3028 = vmatpush1.msra.mxu0 0.0
        %3029 = vmatprep.subr.mxu0 0.0
        %3030 = vmatpush1.msra.mxu0 0.0
        %3031 = vmatprep.subr.mxu0 0.0
        %3032 = vmatpush1.msra.mxu0 0.0
        %3033 = vmatprep.subr.mxu0 0.0
        %3034 = vmatpush1.msra.mxu0 0.0
        %3035 = vmatprep.subr.mxu0 0.0
        %3036 = vmatpush1.msra.mxu0 0.0
        %3037 = vmatprep.subr.mxu0 0.0
        %3038 = vmatpush1.msra.mxu0 0.0
        %3039 = vmatprep.subr.mxu0 0.0
        %3040 = vmatpush1.msra.mxu0 0.0
        %3041 = vmatprep.subr.mxu0 0.0
        %3042 = vmatpush1.msra.mxu0 0.0
        %3043 = vmatprep.subr.mxu0 0.0
        %3044 = vmatpush1.msra.mxu0 0.0
        %3045 = vmatprep.mubr.f32.mxu0 0.0
        %3046 = vmatmul.mubr.f32.gmra.mrb[0].mxu0 %v2158
        %v3047 = vpop.f32.mrb[0].mxu0
        %v3048 = vadd.f32 0.0, %v3047
        %v3049 = vpop.f32.mrb[0].mxu0
        %3050 = vdwg.mxu0
        %s3051 = scalar_lea.vmem %s5, 80
        %v3052 = vld [vmem:[%s3051] sm:$0xff]
        %v3053 = vld [vmem:[%s3051 + $0x8] sm:$0xff]
        %v3055 = vsel %vm2314, %v3052, 0
        %v3058 = vsel %vm2314, %v3053, 0
        %3060 = vmatprep.subr.mxu0 0.0
        %3061 = vmatpush1.msra.mxu0 %v3048
        %3062 = vmatprep.subr.mxu0 0.0
        %3063 = vmatpush1.msra.mxu0 0.0
        %3064 = vmatprep.subr.mxu0 0.0
        %3065 = vmatpush1.msra.mxu0 0.0
        %3066 = vmatprep.subr.mxu0 0.0
        %3067 = vmatpush1.msra.mxu0 0.0
        %3068 = vmatprep.subr.mxu0 0.0
        %3069 = vmatpush1.msra.mxu0 0.0
        %3070 = vmatprep.subr.mxu0 0.0
        %3071 = vmatpush1.msra.mxu0 0.0
        %3072 = vmatprep.subr.mxu0 0.0
        %3073 = vmatpush1.msra.mxu0 0.0
        %3074 = vmatprep.subr.mxu0 0.0
        %3075 = vmatpush1.msra.mxu0 0.0
        %3076 = vmatprep.subr.mxu0 0.0
        %3077 = vmatpush1.msra.mxu0 0.0
        %3078 = vmatprep.subr.mxu0 0.0
        %3079 = vmatpush1.msra.mxu0 0.0
        %3080 = vmatprep.subr.mxu0 0.0
        %3081 = vmatpush1.msra.mxu0 0.0
        %3082 = vmatprep.subr.mxu0 0.0
        %3083 = vmatpush1.msra.mxu0 0.0
        %3084 = vmatprep.subr.mxu0 0.0
        %3085 = vmatpush1.msra.mxu0 0.0
        %3086 = vmatprep.subr.mxu0 0.0
        %3087 = vmatpush1.msra.mxu0 0.0
        %3088 = vmatprep.subr.mxu0 0.0
        %3089 = vmatpush1.msra.mxu0 0.0
        %3090 = vmatprep.subr.mxu0 0.0
        %3091 = vmatpush1.msra.mxu0 0.0
        %3092 = vmatprep.subr.mxu0 0.0
        %3093 = vmatpush1.msra.mxu0 0.0
        %3094 = vmatprep.subr.mxu0 0.0
        %3095 = vmatpush1.msra.mxu0 0.0
        %3096 = vmatprep.subr.mxu0 0.0
        %3097 = vmatpush1.msra.mxu0 0.0
        %3098 = vmatprep.subr.mxu0 0.0
        %3099 = vmatpush1.msra.mxu0 0.0
        %3100 = vmatprep.subr.mxu0 0.0
        %3101 = vmatpush1.msra.mxu0 0.0
        %3102 = vmatprep.subr.mxu0 0.0
        %3103 = vmatpush1.msra.mxu0 0.0
        %3104 = vmatprep.subr.mxu0 0.0
        %3105 = vmatpush1.msra.mxu0 0.0
        %3106 = vmatprep.subr.mxu0 0.0
        %3107 = vmatpush1.msra.mxu0 0.0
        %3108 = vmatprep.subr.mxu0 0.0
        %3109 = vmatpush1.msra.mxu0 0.0
        %3110 = vmatprep.subr.mxu0 0.0
        %3111 = vmatpush1.msra.mxu0 0.0
        %3112 = vmatprep.subr.mxu0 0.0
        %3113 = vmatpush1.msra.mxu0 0.0
        %3114 = vmatprep.subr.mxu0 0.0
        %3115 = vmatpush1.msra.mxu0 0.0
        %3116 = vmatprep.subr.mxu0 0.0
        %3117 = vmatpush1.msra.mxu0 0.0
        %3118 = vmatprep.subr.mxu0 0.0
        %3119 = vmatpush1.msra.mxu0 0.0
        %3120 = vmatprep.subr.mxu0 0.0
        %3121 = vmatpush1.msra.mxu0 0.0
        %3122 = vmatprep.subr.mxu0 0.0
        %3123 = vmatpush1.msra.mxu0 0.0
        %3124 = vmatprep.mubr.f32.mxu0 0.0
        %3125 = vmatmul.mubr.f32.gmra.mrb[0].mxu0 %v3055
        %v3126 = vpop.f32.mrb[0].mxu0
        %v3127 = vadd.f32 0.0, %v3126
        %v3128 = vpop.f32.mrb[0].mxu0
        %3129 = vmatprep.mubr.f32.mxu0 0.0
        %3130 = vmatmul.mubr.f32.gmra.mrb[0].mxu0 %v3058
        %v3131 = vpop.f32.mrb[0].mxu0
        %v3132 = vadd.f32 0.0, %v3131
        %v3133 = vpop.f32.mrb[0].mxu0
        %3134 = vdwg.mxu0
        %v3135 = vadd.f32 %v2970, %v3127
        %v3136 = vadd.f32 %v2971, %v3132
        %s3137 = scalar_lea.vmem [#allocation4], 384
        %v3138 = vld [vmem:[%s3137] sm:$0xff]
        %v3139 = vld [vmem:[%s3137 + $0x8] sm:$0xff]
        %v3140 = vld [vmem:[%s3137 + $0x10] sm:$0xff]
        %v3141 = vld [vmem:[%s3137 + $0x18] sm:$0xff]
        %v3142 = vld [vmem:[%s3137 + $0x20] sm:$0xff]
        %v3143 = vld [vmem:[%s3137 + $0x28] sm:$0xff]
        %v3144 = vld [vmem:[%s3137 + $0x30] sm:$0xff]
        %v3145 = vld [vmem:[%s3137 + $0x38] sm:$0xff]
        %3146 = vmatprep.subr.mxu0 0.0
        %3147 = vmatpush1.msra.mxu0 %v3138
        %3148 = vmatprep.subr.mxu0 0.0
        %3149 = vmatpush1.msra.mxu0 %v3139
        %3150 = vmatprep.subr.mxu0 0.0
        %3151 = vmatpush1.msra.mxu0 %v3140
        %3152 = vmatprep.subr.mxu0 0.0
        %3153 = vmatpush1.msra.mxu0 %v3141
        %3154 = vmatprep.subr.mxu0 0.0
        %3155 = vmatpush1.msra.mxu0 %v3142
        %3156 = vmatprep.subr.mxu0 0.0
        %3157 = vmatpush1.msra.mxu0 %v3143
        %3158 = vmatprep.subr.mxu0 0.0
        %3159 = vmatpush1.msra.mxu0 %v3144
        %3160 = vmatprep.subr.mxu0 0.0
        %3161 = vmatpush1.msra.mxu0 %v3145
        %3162 = vmatprep.subr.mxu0 0.0
        %3163 = vmatpush1.msra.mxu0 0.0
        %3164 = vmatprep.subr.mxu0 0.0
        %3165 = vmatpush1.msra.mxu0 0.0
        %3166 = vmatprep.subr.mxu0 0.0
        %3167 = vmatpush1.msra.mxu0 0.0
        %3168 = vmatprep.subr.mxu0 0.0
        %3169 = vmatpush1.msra.mxu0 0.0
        %3170 = vmatprep.subr.mxu0 0.0
        %3171 = vmatpush1.msra.mxu0 0.0
        %3172 = vmatprep.subr.mxu0 0.0
        %3173 = vmatpush1.msra.mxu0 0.0
        %3174 = vmatprep.subr.mxu0 0.0
        %3175 = vmatpush1.msra.mxu0 0.0
        %3176 = vmatprep.subr.mxu0 0.0
        %3177 = vmatpush1.msra.mxu0 0.0
        %3178 = vmatprep.subr.mxu0 0.0
        %3179 = vmatpush1.msra.mxu0 0.0
        %3180 = vmatprep.subr.mxu0 0.0
        %3181 = vmatpush1.msra.mxu0 0.0
        %3182 = vmatprep.subr.mxu0 0.0
        %3183 = vmatpush1.msra.mxu0 0.0
        %3184 = vmatprep.subr.mxu0 0.0
        %3185 = vmatpush1.msra.mxu0 0.0
        %3186 = vmatprep.subr.mxu0 0.0
        %3187 = vmatpush1.msra.mxu0 0.0
        %3188 = vmatprep.subr.mxu0 0.0
        %3189 = vmatpush1.msra.mxu0 0.0
        %3190 = vmatprep.subr.mxu0 0.0
        %3191 = vmatpush1.msra.mxu0 0.0
        %3192 = vmatprep.subr.mxu0 0.0
        %3193 = vmatpush1.msra.mxu0 0.0
        %3194 = vmatprep.subr.mxu0 0.0
        %3195 = vmatpush1.msra.mxu0 0.0
        %3196 = vmatprep.subr.mxu0 0.0
        %3197 = vmatpush1.msra.mxu0 0.0
        %3198 = vmatprep.subr.mxu0 0.0
        %3199 = vmatpush1.msra.mxu0 0.0
        %3200 = vmatprep.subr.mxu0 0.0
        %3201 = vmatpush1.msra.mxu0 0.0
        %3202 = vmatprep.subr.mxu0 0.0
        %3203 = vmatpush1.msra.mxu0 0.0
        %3204 = vmatprep.subr.mxu0 0.0
        %3205 = vmatpush1.msra.mxu0 0.0
        %3206 = vmatprep.subr.mxu0 0.0
        %3207 = vmatpush1.msra.mxu0 0.0
        %3208 = vmatprep.subr.mxu0 0.0
        %3209 = vmatpush1.msra.mxu0 0.0
        %3210 = vmatprep.mubr.f32.mxu0 0.0
        %3211 = vmatmul.mubr.f32.gmra.mrb[0].mxu0 %v2158
        %v3212 = vpop.f32.mrb[0].mxu0
        %v3213 = vadd.f32 0.0, %v3212
        %v3214 = vpop.f32.mrb[0].mxu0
        %3215 = vdwg.mxu0
        %s3216 = scalar_lea.vmem %s5, 96
        %v3217 = vld [vmem:[%s3216] sm:$0xff]
        %v3218 = vld [vmem:[%s3216 + $0x8] sm:$0xff]
        %v3220 = vsel %vm2314, %v3217, 0
        %v3223 = vsel %vm2314, %v3218, 0
        %3225 = vmatprep.subr.mxu0 0.0
        %3226 = vmatpush1.msra.mxu0 %v3213
        %3227 = vmatprep.subr.mxu0 0.0
        %3228 = vmatpush1.msra.mxu0 0.0
        %3229 = vmatprep.subr.mxu0 0.0
        %3230 = vmatpush1.msra.mxu0 0.0
        %3231 = vmatprep.subr.mxu0 0.0
        %3232 = vmatpush1.msra.mxu0 0.0
        %3233 = vmatprep.subr.mxu0 0.0
        %3234 = vmatpush1.msra.mxu0 0.0
        %3235 = vmatprep.subr.mxu0 0.0
        %3236 = vmatpush1.msra.mxu0 0.0
        %3237 = vmatprep.subr.mxu0 0.0
        %3238 = vmatpush1.msra.mxu0 0.0
        %3239 = vmatprep.subr.mxu0 0.0
        %3240 = vmatpush1.msra.mxu0 0.0
        %3241 = vmatprep.subr.mxu0 0.0
        %3242 = vmatpush1.msra.mxu0 0.0
        %3243 = vmatprep.subr.mxu0 0.0
        %3244 = vmatpush1.msra.mxu0 0.0
        %3245 = vmatprep.subr.mxu0 0.0
        %3246 = vmatpush1.msra.mxu0 0.0
        %3247 = vmatprep.subr.mxu0 0.0
        %3248 = vmatpush1.msra.mxu0 0.0
        %3249 = vmatprep.subr.mxu0 0.0
        %3250 = vmatpush1.msra.mxu0 0.0
        %3251 = vmatprep.subr.mxu0 0.0
        %3252 = vmatpush1.msra.mxu0 0.0
        %3253 = vmatprep.subr.mxu0 0.0
        %3254 = vmatpush1.msra.mxu0 0.0
        %3255 = vmatprep.subr.mxu0 0.0
        %3256 = vmatpush1.msra.mxu0 0.0
        %3257 = vmatprep.subr.mxu0 0.0
        %3258 = vmatpush1.msra.mxu0 0.0
        %3259 = vmatprep.subr.mxu0 0.0
        %3260 = vmatpush1.msra.mxu0 0.0
        %3261 = vmatprep.subr.mxu0 0.0
        %3262 = vmatpush1.msra.mxu0 0.0
        %3263 = vmatprep.subr.mxu0 0.0
        %3264 = vmatpush1.msra.mxu0 0.0
        %3265 = vmatprep.subr.mxu0 0.0
        %3266 = vmatpush1.msra.mxu0 0.0
        %3267 = vmatprep.subr.mxu0 0.0
        %3268 = vmatpush1.msra.mxu0 0.0
        %3269 = vmatprep.subr.mxu0 0.0
        %3270 = vmatpush1.msra.mxu0 0.0
        %3271 = vmatprep.subr.mxu0 0.0
        %3272 = vmatpush1.msra.mxu0 0.0
        %3273 = vmatprep.subr.mxu0 0.0
        %3274 = vmatpush1.msra.mxu0 0.0
        %3275 = vmatprep.subr.mxu0 0.0
        %3276 = vmatpush1.msra.mxu0 0.0
        %3277 = vmatprep.subr.mxu0 0.0
        %3278 = vmatpush1.msra.mxu0 0.0
        %3279 = vmatprep.subr.mxu0 0.0
        %3280 = vmatpush1.msra.mxu0 0.0
        %3281 = vmatprep.subr.mxu0 0.0
        %3282 = vmatpush1.msra.mxu0 0.0
        %3283 = vmatprep.subr.mxu0 0.0
        %3284 = vmatpush1.msra.mxu0 0.0
        %3285 = vmatprep.subr.mxu0 0.0
        %3286 = vmatpush1.msra.mxu0 0.0
        %3287 = vmatprep.subr.mxu0 0.0
        %3288 = vmatpush1.msra.mxu0 0.0
        %3289 = vmatprep.mubr.f32.mxu0 0.0
        %3290 = vmatmul.mubr.f32.gmra.mrb[0].mxu0 %v3220
        %v3291 = vpop.f32.mrb[0].mxu0
        %v3292 = vadd.f32 0.0, %v3291
        %v3293 = vpop.f32.mrb[0].mxu0
        %3294 = vmatprep.mubr.f32.mxu0 0.0
        %3295 = vmatmul.mubr.f32.gmra.mrb[0].mxu0 %v3223
        %v3296 = vpop.f32.mrb[0].mxu0
        %v3297 = vadd.f32 0.0, %v3296
        %v3298 = vpop.f32.mrb[0].mxu0
        %3299 = vdwg.mxu0
        %v3300 = vadd.f32 %v3135, %v3292
        %v3301 = vadd.f32 %v3136, %v3297
        %s3302 = scalar_lea.vmem [#allocation4], 448
        %v3303 = vld [vmem:[%s3302] sm:$0xff]
        %v3304 = vld [vmem:[%s3302 + $0x8] sm:$0xff]
        %v3305 = vld [vmem:[%s3302 + $0x10] sm:$0xff]
        %v3306 = vld [vmem:[%s3302 + $0x18] sm:$0xff]
        %v3307 = vld [vmem:[%s3302 + $0x20] sm:$0xff]
        %v3308 = vld [vmem:[%s3302 + $0x28] sm:$0xff]
        %v3309 = vld [vmem:[%s3302 + $0x30] sm:$0xff]
        %v3310 = vld [vmem:[%s3302 + $0x38] sm:$0xff]
        %3311 = vmatprep.subr.mxu0 0.0
        %3312 = vmatpush1.msra.mxu0 %v3303
        %3313 = vmatprep.subr.mxu0 0.0
        %3314 = vmatpush1.msra.mxu0 %v3304
        %3315 = vmatprep.subr.mxu0 0.0
        %3316 = vmatpush1.msra.mxu0 %v3305
        %3317 = vmatprep.subr.mxu0 0.0
        %3318 = vmatpush1.msra.mxu0 %v3306
        %3319 = vmatprep.subr.mxu0 0.0
        %3320 = vmatpush1.msra.mxu0 %v3307
        %3321 = vmatprep.subr.mxu0 0.0
        %3322 = vmatpush1.msra.mxu0 %v3308
        %3323 = vmatprep.subr.mxu0 0.0
        %3324 = vmatpush1.msra.mxu0 %v3309
        %3325 = vmatprep.subr.mxu0 0.0
        %3326 = vmatpush1.msra.mxu0 %v3310
        %3327 = vmatprep.subr.mxu0 0.0
        %3328 = vmatpush1.msra.mxu0 0.0
        %3329 = vmatprep.subr.mxu0 0.0
        %3330 = vmatpush1.msra.mxu0 0.0
        %3331 = vmatprep.subr.mxu0 0.0
        %3332 = vmatpush1.msra.mxu0 0.0
        %3333 = vmatprep.subr.mxu0 0.0
        %3334 = vmatpush1.msra.mxu0 0.0
        %3335 = vmatprep.subr.mxu0 0.0
        %3336 = vmatpush1.msra.mxu0 0.0
        %3337 = vmatprep.subr.mxu0 0.0
        %3338 = vmatpush1.msra.mxu0 0.0
        %3339 = vmatprep.subr.mxu0 0.0
        %3340 = vmatpush1.msra.mxu0 0.0
        %3341 = vmatprep.subr.mxu0 0.0
        %3342 = vmatpush1.msra.mxu0 0.0
        %3343 = vmatprep.subr.mxu0 0.0
        %3344 = vmatpush1.msra.mxu0 0.0
        %3345 = vmatprep.subr.mxu0 0.0
        %3346 = vmatpush1.msra.mxu0 0.0
        %3347 = vmatprep.subr.mxu0 0.0
        %3348 = vmatpush1.msra.mxu0 0.0
        %3349 = vmatprep.subr.mxu0 0.0
        %3350 = vmatpush1.msra.mxu0 0.0
        %3351 = vmatprep.subr.mxu0 0.0
        %3352 = vmatpush1.msra.mxu0 0.0
        %3353 = vmatprep.subr.mxu0 0.0
        %3354 = vmatpush1.msra.mxu0 0.0
        %3355 = vmatprep.subr.mxu0 0.0
        %3356 = vmatpush1.msra.mxu0 0.0
        %3357 = vmatprep.subr.mxu0 0.0
        %3358 = vmatpush1.msra.mxu0 0.0
        %3359 = vmatprep.subr.mxu0 0.0
        %3360 = vmatpush1.msra.mxu0 0.0
        %3361 = vmatprep.subr.mxu0 0.0
        %3362 = vmatpush1.msra.mxu0 0.0
        %3363 = vmatprep.subr.mxu0 0.0
        %3364 = vmatpush1.msra.mxu0 0.0
        %3365 = vmatprep.subr.mxu0 0.0
        %3366 = vmatpush1.msra.mxu0 0.0
        %3367 = vmatprep.subr.mxu0 0.0
        %3368 = vmatpush1.msra.mxu0 0.0
        %3369 = vmatprep.subr.mxu0 0.0
        %3370 = vmatpush1.msra.mxu0 0.0
        %3371 = vmatprep.subr.mxu0 0.0
        %3372 = vmatpush1.msra.mxu0 0.0
        %3373 = vmatprep.subr.mxu0 0.0
        %3374 = vmatpush1.msra.mxu0 0.0
        %3375 = vmatprep.mubr.f32.mxu0 0.0
        %3376 = vmatmul.mubr.f32.gmra.mrb[0].mxu0 %v2158
        %v3377 = vpop.f32.mrb[0].mxu0
        %v3378 = vadd.f32 0.0, %v3377
        %v3379 = vpop.f32.mrb[0].mxu0
        %3380 = vdwg.mxu0
        %s3381 = scalar_lea.vmem %s5, 112
        %v3382 = vld [vmem:[%s3381] sm:$0xff]
        %v3383 = vld [vmem:[%s3381 + $0x8] sm:$0xff]
        %v3385 = vsel %vm2314, %v3382, 0
        %v3388 = vsel %vm2314, %v3383, 0
        %3390 = vmatprep.subr.mxu0 0.0
        %3391 = vmatpush1.msra.mxu0 %v3378
        %3392 = vmatprep.subr.mxu0 0.0
        %3393 = vmatpush1.msra.mxu0 0.0
        %3394 = vmatprep.subr.mxu0 0.0
        %3395 = vmatpush1.msra.mxu0 0.0
        %3396 = vmatprep.subr.mxu0 0.0
        %3397 = vmatpush1.msra.mxu0 0.0
        %3398 = vmatprep.subr.mxu0 0.0
        %3399 = vmatpush1.msra.mxu0 0.0
        %3400 = vmatprep.subr.mxu0 0.0
        %3401 = vmatpush1.msra.mxu0 0.0
        %3402 = vmatprep.subr.mxu0 0.0
        %3403 = vmatpush1.msra.mxu0 0.0
        %3404 = vmatprep.subr.mxu0 0.0
        %3405 = vmatpush1.msra.mxu0 0.0
        %3406 = vmatprep.subr.mxu0 0.0
        %3407 = vmatpush1.msra.mxu0 0.0
        %3408 = vmatprep.subr.mxu0 0.0
        %3409 = vmatpush1.msra.mxu0 0.0
        %3410 = vmatprep.subr.mxu0 0.0
        %3411 = vmatpush1.msra.mxu0 0.0
        %3412 = vmatprep.subr.mxu0 0.0
        %3413 = vmatpush1.msra.mxu0 0.0
        %3414 = vmatprep.subr.mxu0 0.0
        %3415 = vmatpush1.msra.mxu0 0.0
        %3416 = vmatprep.subr.mxu0 0.0
        %3417 = vmatpush1.msra.mxu0 0.0
        %3418 = vmatprep.subr.mxu0 0.0
        %3419 = vmatpush1.msra.mxu0 0.0
        %3420 = vmatprep.subr.mxu0 0.0
        %3421 = vmatpush1.msra.mxu0 0.0
        %3422 = vmatprep.subr.mxu0 0.0
        %3423 = vmatpush1.msra.mxu0 0.0
        %3424 = vmatprep.subr.mxu0 0.0
        %3425 = vmatpush1.msra.mxu0 0.0
        %3426 = vmatprep.subr.mxu0 0.0
        %3427 = vmatpush1.msra.mxu0 0.0
        %3428 = vmatprep.subr.mxu0 0.0
        %3429 = vmatpush1.msra.mxu0 0.0
        %3430 = vmatprep.subr.mxu0 0.0
        %3431 = vmatpush1.msra.mxu0 0.0
        %3432 = vmatprep.subr.mxu0 0.0
        %3433 = vmatpush1.msra.mxu0 0.0
        %3434 = vmatprep.subr.mxu0 0.0
        %3435 = vmatpush1.msra.mxu0 0.0
        %3436 = vmatprep.subr.mxu0 0.0
        %3437 = vmatpush1.msra.mxu0 0.0
        %3438 = vmatprep.subr.mxu0 0.0
        %3439 = vmatpush1.msra.mxu0 0.0
        %3440 = vmatprep.subr.mxu0 0.0
        %3441 = vmatpush1.msra.mxu0 0.0
        %3442 = vmatprep.subr.mxu0 0.0
        %3443 = vmatpush1.msra.mxu0 0.0
        %3444 = vmatprep.subr.mxu0 0.0
        %3445 = vmatpush1.msra.mxu0 0.0
        %3446 = vmatprep.subr.mxu0 0.0
        %3447 = vmatpush1.msra.mxu0 0.0
        %3448 = vmatprep.subr.mxu0 0.0
        %3449 = vmatpush1.msra.mxu0 0.0
        %3450 = vmatprep.subr.mxu0 0.0
        %3451 = vmatpush1.msra.mxu0 0.0
        %3452 = vmatprep.subr.mxu0 0.0
        %3453 = vmatpush1.msra.mxu0 0.0
        %3454 = vmatprep.mubr.f32.mxu0 0.0
        %3455 = vmatmul.mubr.f32.gmra.mrb[0].mxu0 %v3385
        %v3456 = vpop.f32.mrb[0].mxu0
        %v3457 = vadd.f32 0.0, %v3456
        %v3458 = vpop.f32.mrb[0].mxu0
        %3459 = vmatprep.mubr.f32.mxu0 0.0
        %3460 = vmatmul.mubr.f32.gmra.mrb[0].mxu0 %v3388
        %v3461 = vpop.f32.mrb[0].mxu0
        %v3462 = vadd.f32 0.0, %v3461
        %v3463 = vpop.f32.mrb[0].mxu0
        %3464 = vdwg.mxu0
        %v3465 = vadd.f32 %v3300, %v3457
        %v3466 = vadd.f32 %v3301, %v3462
        %s3467 = scalar_lea.vmem [#allocation4], 512
        %v3468 = vld [vmem:[%s3467] sm:$0xff]
        %v3469 = vld [vmem:[%s3467 + $0x8] sm:$0xff]
        %v3470 = vld [vmem:[%s3467 + $0x10] sm:$0xff]
        %v3471 = vld [vmem:[%s3467 + $0x18] sm:$0xff]
        %v3472 = vld [vmem:[%s3467 + $0x20] sm:$0xff]
        %v3473 = vld [vmem:[%s3467 + $0x28] sm:$0xff]
        %v3474 = vld [vmem:[%s3467 + $0x30] sm:$0xff]
        %v3475 = vld [vmem:[%s3467 + $0x38] sm:$0xff]
        %3476 = vmatprep.subr.mxu0 0.0
        %3477 = vmatpush1.msra.mxu0 %v3468
        %3478 = vmatprep.subr.mxu0 0.0
        %3479 = vmatpush1.msra.mxu0 %v3469
        %3480 = vmatprep.subr.mxu0 0.0
        %3481 = vmatpush1.msra.mxu0 %v3470
        %3482 = vmatprep.subr.mxu0 0.0
        %3483 = vmatpush1.msra.mxu0 %v3471
        %3484 = vmatprep.subr.mxu0 0.0
        %3485 = vmatpush1.msra.mxu0 %v3472
        %3486 = vmatprep.subr.mxu0 0.0
        %3487 = vmatpush1.msra.mxu0 %v3473
        %3488 = vmatprep.subr.mxu0 0.0
        %3489 = vmatpush1.msra.mxu0 %v3474
        %3490 = vmatprep.subr.mxu0 0.0
        %3491 = vmatpush1.msra.mxu0 %v3475
        %3492 = vmatprep.subr.mxu0 0.0
        %3493 = vmatpush1.msra.mxu0 0.0
        %3494 = vmatprep.subr.mxu0 0.0
        %3495 = vmatpush1.msra.mxu0 0.0
        %3496 = vmatprep.subr.mxu0 0.0
        %3497 = vmatpush1.msra.mxu0 0.0
        %3498 = vmatprep.subr.mxu0 0.0
        %3499 = vmatpush1.msra.mxu0 0.0
        %3500 = vmatprep.subr.mxu0 0.0
        %3501 = vmatpush1.msra.mxu0 0.0
        %3502 = vmatprep.subr.mxu0 0.0
        %3503 = vmatpush1.msra.mxu0 0.0
        %3504 = vmatprep.subr.mxu0 0.0
        %3505 = vmatpush1.msra.mxu0 0.0
        %3506 = vmatprep.subr.mxu0 0.0
        %3507 = vmatpush1.msra.mxu0 0.0
        %3508 = vmatprep.subr.mxu0 0.0
        %3509 = vmatpush1.msra.mxu0 0.0
        %3510 = vmatprep.subr.mxu0 0.0
        %3511 = vmatpush1.msra.mxu0 0.0
        %3512 = vmatprep.subr.mxu0 0.0
        %3513 = vmatpush1.msra.mxu0 0.0
        %3514 = vmatprep.subr.mxu0 0.0
        %3515 = vmatpush1.msra.mxu0 0.0
        %3516 = vmatprep.subr.mxu0 0.0
        %3517 = vmatpush1.msra.mxu0 0.0
        %3518 = vmatprep.subr.mxu0 0.0
        %3519 = vmatpush1.msra.mxu0 0.0
        %3520 = vmatprep.subr.mxu0 0.0
        %3521 = vmatpush1.msra.mxu0 0.0
        %3522 = vmatprep.subr.mxu0 0.0
        %3523 = vmatpush1.msra.mxu0 0.0
        %3524 = vmatprep.subr.mxu0 0.0
        %3525 = vmatpush1.msra.mxu0 0.0
        %3526 = vmatprep.subr.mxu0 0.0
        %3527 = vmatpush1.msra.mxu0 0.0
        %3528 = vmatprep.subr.mxu0 0.0
        %3529 = vmatpush1.msra.mxu0 0.0
        %3530 = vmatprep.subr.mxu0 0.0
        %3531 = vmatpush1.msra.mxu0 0.0
        %3532 = vmatprep.subr.mxu0 0.0
        %3533 = vmatpush1.msra.mxu0 0.0
        %3534 = vmatprep.subr.mxu0 0.0
        %3535 = vmatpush1.msra.mxu0 0.0
        %3536 = vmatprep.subr.mxu0 0.0
        %3537 = vmatpush1.msra.mxu0 0.0
        %3538 = vmatprep.subr.mxu0 0.0
        %3539 = vmatpush1.msra.mxu0 0.0
        %3540 = vmatprep.mubr.f32.mxu0 0.0
        %3541 = vmatmul.mubr.f32.gmra.mrb[0].mxu0 %v2158
        %v3542 = vpop.f32.mrb[0].mxu0
        %v3543 = vadd.f32 0.0, %v3542
        %v3544 = vpop.f32.mrb[0].mxu0
        %3545 = vdwg.mxu0
        %s3546 = scalar_lea.vmem %s5, 128
        %v3547 = vld [vmem:[%s3546] sm:$0xff]
        %v3548 = vld [vmem:[%s3546 + $0x8] sm:$0xff]
        %v3550 = vsel %vm2314, %v3547, 0
        %v3553 = vsel %vm2314, %v3548, 0
        %3555 = vmatprep.subr.mxu0 0.0
        %3556 = vmatpush1.msra.mxu0 %v3543
        %3557 = vmatprep.subr.mxu0 0.0
        %3558 = vmatpush1.msra.mxu0 0.0
        %3559 = vmatprep.subr.mxu0 0.0
        %3560 = vmatpush1.msra.mxu0 0.0
        %3561 = vmatprep.subr.mxu0 0.0
        %3562 = vmatpush1.msra.mxu0 0.0
        %3563 = vmatprep.subr.mxu0 0.0
        %3564 = vmatpush1.msra.mxu0 0.0
        %3565 = vmatprep.subr.mxu0 0.0
        %3566 = vmatpush1.msra.mxu0 0.0
        %3567 = vmatprep.subr.mxu0 0.0
        %3568 = vmatpush1.msra.mxu0 0.0
        %3569 = vmatprep.subr.mxu0 0.0
        %3570 = vmatpush1.msra.mxu0 0.0
        %3571 = vmatprep.subr.mxu0 0.0
        %3572 = vmatpush1.msra.mxu0 0.0
        %3573 = vmatprep.subr.mxu0 0.0
        %3574 = vmatpush1.msra.mxu0 0.0
        %3575 = vmatprep.subr.mxu0 0.0
        %3576 = vmatpush1.msra.mxu0 0.0
        %3577 = vmatprep.subr.mxu0 0.0
        %3578 = vmatpush1.msra.mxu0 0.0
        %3579 = vmatprep.subr.mxu0 0.0
        %3580 = vmatpush1.msra.mxu0 0.0
        %3581 = vmatprep.subr.mxu0 0.0
        %3582 = vmatpush1.msra.mxu0 0.0
        %3583 = vmatprep.subr.mxu0 0.0
        %3584 = vmatpush1.msra.mxu0 0.0
        %3585 = vmatprep.subr.mxu0 0.0
        %3586 = vmatpush1.msra.mxu0 0.0
        %3587 = vmatprep.subr.mxu0 0.0
        %3588 = vmatpush1.msra.mxu0 0.0
        %3589 = vmatprep.subr.mxu0 0.0
        %3590 = vmatpush1.msra.mxu0 0.0
        %3591 = vmatprep.subr.mxu0 0.0
        %3592 = vmatpush1.msra.mxu0 0.0
        %3593 = vmatprep.subr.mxu0 0.0
        %3594 = vmatpush1.msra.mxu0 0.0
        %3595 = vmatprep.subr.mxu0 0.0
        %3596 = vmatpush1.msra.mxu0 0.0
        %3597 = vmatprep.subr.mxu0 0.0
        %3598 = vmatpush1.msra.mxu0 0.0
        %3599 = vmatprep.subr.mxu0 0.0
        %3600 = vmatpush1.msra.mxu0 0.0
        %3601 = vmatprep.subr.mxu0 0.0
        %3602 = vmatpush1.msra.mxu0 0.0
        %3603 = vmatprep.subr.mxu0 0.0
        %3604 = vmatpush1.msra.mxu0 0.0
        %3605 = vmatprep.subr.mxu0 0.0
        %3606 = vmatpush1.msra.mxu0 0.0
        %3607 = vmatprep.subr.mxu0 0.0
        %3608 = vmatpush1.msra.mxu0 0.0
        %3609 = vmatprep.subr.mxu0 0.0
        %3610 = vmatpush1.msra.mxu0 0.0
        %3611 = vmatprep.subr.mxu0 0.0
        %3612 = vmatpush1.msra.mxu0 0.0
        %3613 = vmatprep.subr.mxu0 0.0
        %3614 = vmatpush1.msra.mxu0 0.0
        %3615 = vmatprep.subr.mxu0 0.0
        %3616 = vmatpush1.msra.mxu0 0.0
        %3617 = vmatprep.subr.mxu0 0.0
        %3618 = vmatpush1.msra.mxu0 0.0
        %3619 = vmatprep.mubr.f32.mxu0 0.0
        %3620 = vmatmul.mubr.f32.gmra.mrb[0].mxu0 %v3550
        %v3621 = vpop.f32.mrb[0].mxu0
        %v3622 = vadd.f32 0.0, %v3621
        %v3623 = vpop.f32.mrb[0].mxu0
        %3624 = vmatprep.mubr.f32.mxu0 0.0
        %3625 = vmatmul.mubr.f32.gmra.mrb[0].mxu0 %v3553
        %v3626 = vpop.f32.mrb[0].mxu0
        %v3627 = vadd.f32 0.0, %v3626
        %v3628 = vpop.f32.mrb[0].mxu0
        %3629 = vdwg.mxu0
        %v3630 = vadd.f32 %v3465, %v3622
        %v3631 = vadd.f32 %v3466, %v3627
        %v3632 = vld [vmem:[%s6] sm:$0xff]
        %v3633 = vld [vmem:[%s6 + $0x8] sm:$0xff]
        %3635 = vset.pattern.permute.xlu0 0
        %3636 = vperm.xlu0 %3635, %v3632
        %v3637 = vpop.permute.xlu0 %3636
        %3640 = vset.pattern.permute.xlu0 0
        %3641 = vperm.xlu0 %3640, %v3633
        %v3642 = vpop.permute.xlu0 %3641
        %v3644 = vadd.f32 %v3630, %v3637
        %v3645 = vadd.f32 %v3631, %v3642
        %v3646 = vmax.f32 %v3644, 0.0
        %v3647 = vmax.f32 %v3645, 0.0
        %v3648 = vld [vmem:[#allocation6] sm:$0xff]
        %v3649 = vld [vmem:[#allocation6 + $0x8] sm:$0xff]
        %vm3650 = vcmask 130048
        %v3652 = vsel %vm3650, %v3646, 0
        %v3655 = vsel %vm3650, %v3647, 0
        %3657 = vmatprep.subr.mxu0 0.0
        %3658 = vmatpush1.msra.mxu0 %v3648
        %3659 = vmatprep.subr.mxu0 0.0
        %3660 = vmatpush1.msra.mxu0 %v3649
        %3661 = vmatprep.subr.mxu0 0.0
        %3662 = vmatpush1.msra.mxu0 0.0
        %3663 = vmatprep.subr.mxu0 0.0
        %3664 = vmatpush1.msra.mxu0 0.0
        %3665 = vmatprep.subr.mxu0 0.0
        %3666 = vmatpush1.msra.mxu0 0.0
        %3667 = vmatprep.subr.mxu0 0.0
        %3668 = vmatpush1.msra.mxu0 0.0
        %3669 = vmatprep.subr.mxu0 0.0
        %3670 = vmatpush1.msra.mxu0 0.0
        %3671 = vmatprep.subr.mxu0 0.0
        %3672 = vmatpush1.msra.mxu0 0.0
        %3673 = vmatprep.subr.mxu0 0.0
        %3674 = vmatpush1.msra.mxu0 0.0
        %3675 = vmatprep.subr.mxu0 0.0
        %3676 = vmatpush1.msra.mxu0 0.0
        %3677 = vmatprep.subr.mxu0 0.0
        %3678 = vmatpush1.msra.mxu0 0.0
        %3679 = vmatprep.subr.mxu0 0.0
        %3680 = vmatpush1.msra.mxu0 0.0
        %3681 = vmatprep.subr.mxu0 0.0
        %3682 = vmatpush1.msra.mxu0 0.0
        %3683 = vmatprep.subr.mxu0 0.0
        %3684 = vmatpush1.msra.mxu0 0.0
        %3685 = vmatprep.subr.mxu0 0.0
        %3686 = vmatpush1.msra.mxu0 0.0
        %3687 = vmatprep.subr.mxu0 0.0
        %3688 = vmatpush1.msra.mxu0 0.0
        %3689 = vmatprep.subr.mxu0 0.0
        %3690 = vmatpush1.msra.mxu0 0.0
        %3691 = vmatprep.subr.mxu0 0.0
        %3692 = vmatpush1.msra.mxu0 0.0
        %3693 = vmatprep.subr.mxu0 0.0
        %3694 = vmatpush1.msra.mxu0 0.0
        %3695 = vmatprep.subr.mxu0 0.0
        %3696 = vmatpush1.msra.mxu0 0.0
        %3697 = vmatprep.subr.mxu0 0.0
        %3698 = vmatpush1.msra.mxu0 0.0
        %3699 = vmatprep.subr.mxu0 0.0
        %3700 = vmatpush1.msra.mxu0 0.0
        %3701 = vmatprep.subr.mxu0 0.0
        %3702 = vmatpush1.msra.mxu0 0.0
        %3703 = vmatprep.subr.mxu0 0.0
        %3704 = vmatpush1.msra.mxu0 0.0
        %3705 = vmatprep.subr.mxu0 0.0
        %3706 = vmatpush1.msra.mxu0 0.0
        %3707 = vmatprep.subr.mxu0 0.0
        %3708 = vmatpush1.msra.mxu0 0.0
        %3709 = vmatprep.subr.mxu0 0.0
        %3710 = vmatpush1.msra.mxu0 0.0
        %3711 = vmatprep.subr.mxu0 0.0
        %3712 = vmatpush1.msra.mxu0 0.0
        %3713 = vmatprep.subr.mxu0 0.0
        %3714 = vmatpush1.msra.mxu0 0.0
        %3715 = vmatprep.subr.mxu0 0.0
        %3716 = vmatpush1.msra.mxu0 0.0
        %3717 = vmatprep.subr.mxu0 0.0
        %3718 = vmatpush1.msra.mxu0 0.0
        %3719 = vmatprep.subr.mxu0 0.0
        %3720 = vmatpush1.msra.mxu0 0.0
        %3721 = vmatprep.mubr.f32.mxu0 0.0
        %3722 = vmatmul.mubr.f32.gmra.mrb[0].mxu0 %v3652
        %v3723 = vpop.f32.mrb[0].mxu0
        %v3724 = vadd.f32 0.0, %v3723
        %v3725 = vpop.f32.mrb[0].mxu0
        %3726 = vmatprep.mubr.f32.mxu0 0.0
        %3727 = vmatmul.mubr.f32.gmra.mrb[0].mxu0 %v3655
        %v3728 = vpop.f32.mrb[0].mxu0
        %v3729 = vadd.f32 0.0, %v3728
        %v3730 = vpop.f32.mrb[0].mxu0
        %3731 = vdwg.mxu0
        %v3732 = vld [vmem:[%s8] sm:$0xff]
        %v3733 = vld [vmem:[%s8 + $0x8] sm:$0xff]
        %v3734 = vld [vmem:[%s8 + $0x10] sm:$0xff]
        %v3735 = vld [vmem:[%s8 + $0x18] sm:$0xff]
        %s3736 = scalar_lea.vmem [#allocation6], 16
        %v3737 = vld [vmem:[%s3736] sm:$0xff]
        %v3738 = vld [vmem:[%s3736 + $0x8] sm:$0xff]
        %3739 = vmatprep.subr.mxu0 0.0
        %3740 = vmatpush1.msra.mxu0 %v3737
        %3741 = vmatprep.subr.mxu0 0.0
        %3742 = vmatpush1.msra.mxu0 %v3738
        %3743 = vmatprep.subr.mxu0 0.0
        %3744 = vmatpush1.msra.mxu0 0.0
        %3745 = vmatprep.subr.mxu0 0.0
        %3746 = vmatpush1.msra.mxu0 0.0
        %3747 = vmatprep.subr.mxu0 0.0
        %3748 = vmatpush1.msra.mxu0 0.0
        %3749 = vmatprep.subr.mxu0 0.0
        %3750 = vmatpush1.msra.mxu0 0.0
        %3751 = vmatprep.subr.mxu0 0.0
        %3752 = vmatpush1.msra.mxu0 0.0
        %3753 = vmatprep.subr.mxu0 0.0
        %3754 = vmatpush1.msra.mxu0 0.0
        %3755 = vmatprep.subr.mxu0 0.0
        %3756 = vmatpush1.msra.mxu0 0.0
        %3757 = vmatprep.subr.mxu0 0.0
        %3758 = vmatpush1.msra.mxu0 0.0
        %3759 = vmatprep.subr.mxu0 0.0
        %3760 = vmatpush1.msra.mxu0 0.0
        %3761 = vmatprep.subr.mxu0 0.0
        %3762 = vmatpush1.msra.mxu0 0.0
        %3763 = vmatprep.subr.mxu0 0.0
        %3764 = vmatpush1.msra.mxu0 0.0
        %3765 = vmatprep.subr.mxu0 0.0
        %3766 = vmatpush1.msra.mxu0 0.0
        %3767 = vmatprep.subr.mxu0 0.0
        %3768 = vmatpush1.msra.mxu0 0.0
        %3769 = vmatprep.subr.mxu0 0.0
        %3770 = vmatpush1.msra.mxu0 0.0
        %3771 = vmatprep.subr.mxu0 0.0
        %3772 = vmatpush1.msra.mxu0 0.0
        %3773 = vmatprep.subr.mxu0 0.0
        %3774 = vmatpush1.msra.mxu0 0.0
        %3775 = vmatprep.subr.mxu0 0.0
        %3776 = vmatpush1.msra.mxu0 0.0
        %3777 = vmatprep.subr.mxu0 0.0
        %3778 = vmatpush1.msra.mxu0 0.0
        %3779 = vmatprep.subr.mxu0 0.0
        %3780 = vmatpush1.msra.mxu0 0.0
        %3781 = vmatprep.subr.mxu0 0.0
        %3782 = vmatpush1.msra.mxu0 0.0
        %3783 = vmatprep.subr.mxu0 0.0
        %3784 = vmatpush1.msra.mxu0 0.0
        %3785 = vmatprep.subr.mxu0 0.0
        %3786 = vmatpush1.msra.mxu0 0.0
        %3787 = vmatprep.subr.mxu0 0.0
        %3788 = vmatpush1.msra.mxu0 0.0
        %3789 = vmatprep.subr.mxu0 0.0
        %3790 = vmatpush1.msra.mxu0 0.0
        %3791 = vmatprep.subr.mxu0 0.0
        %3792 = vmatpush1.msra.mxu0 0.0
        %3793 = vmatprep.subr.mxu0 0.0
        %3794 = vmatpush1.msra.mxu0 0.0
        %3795 = vmatprep.subr.mxu0 0.0
        %3796 = vmatpush1.msra.mxu0 0.0
        %3797 = vmatprep.subr.mxu0 0.0
        %3798 = vmatpush1.msra.mxu0 0.0
        %3799 = vmatprep.subr.mxu0 0.0
        %3800 = vmatpush1.msra.mxu0 0.0
        %3801 = vmatprep.subr.mxu0 0.0
        %3802 = vmatpush1.msra.mxu0 0.0
        %3803 = vmatprep.mubr.f32.mxu0 0.0
        %3804 = vmatmul.mubr.f32.gmra.mrb[0].mxu0 %v3652
        %v3805 = vpop.f32.mrb[0].mxu0
        %v3806 = vadd.f32 0.0, %v3805
        %v3807 = vpop.f32.mrb[0].mxu0
        %3808 = vmatprep.mubr.f32.mxu0 0.0
        %3809 = vmatmul.mubr.f32.gmra.mrb[0].mxu0 %v3655
        %v3810 = vpop.f32.mrb[0].mxu0
        %v3811 = vadd.f32 0.0, %v3810
        %v3812 = vpop.f32.mrb[0].mxu0
        %3813 = vdwg.mxu0
        %s3814 = scalar_lea.vmem %s8, 32
        %v3815 = vld [vmem:[%s3814] sm:$0xff]
        %v3816 = vld [vmem:[%s3814 + $0x8] sm:$0xff]
        %v3817 = vld [vmem:[%s3814 + $0x10] sm:$0xff]
        %v3818 = vld [vmem:[%s3814 + $0x18] sm:$0xff]
        %v3820 = vsel %vm3650, %v3815, 0
        %v3823 = vsel %vm3650, %v3816, 0
        %v3826 = vsel %vm3650, %v3817, 0
        %v3829 = vsel %vm3650, %v3818, 0
        %3831 = vmatprep.subr.mxu0 0.0
        %3832 = vmatpush1.msra.mxu0 %v3806
        %3833 = vmatprep.subr.mxu0 0.0
        %3834 = vmatpush1.msra.mxu0 %v3811
        %3835 = vmatprep.subr.mxu0 0.0
        %3836 = vmatpush1.msra.mxu0 0.0
        %3837 = vmatprep.subr.mxu0 0.0
        %3838 = vmatpush1.msra.mxu0 0.0
        %3839 = vmatprep.subr.mxu0 0.0
        %3840 = vmatpush1.msra.mxu0 0.0
        %3841 = vmatprep.subr.mxu0 0.0
        %3842 = vmatpush1.msra.mxu0 0.0
        %3843 = vmatprep.subr.mxu0 0.0
        %3844 = vmatpush1.msra.mxu0 0.0
        %3845 = vmatprep.subr.mxu0 0.0
        %3846 = vmatpush1.msra.mxu0 0.0
        %3847 = vmatprep.subr.mxu0 0.0
        %3848 = vmatpush1.msra.mxu0 0.0
        %3849 = vmatprep.subr.mxu0 0.0
        %3850 = vmatpush1.msra.mxu0 0.0
        %3851 = vmatprep.subr.mxu0 0.0
        %3852 = vmatpush1.msra.mxu0 0.0
        %3853 = vmatprep.subr.mxu0 0.0
        %3854 = vmatpush1.msra.mxu0 0.0
        %3855 = vmatprep.subr.mxu0 0.0
        %3856 = vmatpush1.msra.mxu0 0.0
        %3857 = vmatprep.subr.mxu0 0.0
        %3858 = vmatpush1.msra.mxu0 0.0
        %3859 = vmatprep.subr.mxu0 0.0
        %3860 = vmatpush1.msra.mxu0 0.0
        %3861 = vmatprep.subr.mxu0 0.0
        %3862 = vmatpush1.msra.mxu0 0.0
        %3863 = vmatprep.subr.mxu0 0.0
        %3864 = vmatpush1.msra.mxu0 0.0
        %3865 = vmatprep.subr.mxu0 0.0
        %3866 = vmatpush1.msra.mxu0 0.0
        %3867 = vmatprep.subr.mxu0 0.0
        %3868 = vmatpush1.msra.mxu0 0.0
        %3869 = vmatprep.subr.mxu0 0.0
        %3870 = vmatpush1.msra.mxu0 0.0
        %3871 = vmatprep.subr.mxu0 0.0
        %3872 = vmatpush1.msra.mxu0 0.0
        %3873 = vmatprep.subr.mxu0 0.0
        %3874 = vmatpush1.msra.mxu0 0.0
        %3875 = vmatprep.subr.mxu0 0.0
        %3876 = vmatpush1.msra.mxu0 0.0
        %3877 = vmatprep.subr.mxu0 0.0
        %3878 = vmatpush1.msra.mxu0 0.0
        %3879 = vmatprep.subr.mxu0 0.0
        %3880 = vmatpush1.msra.mxu0 0.0
        %3881 = vmatprep.subr.mxu0 0.0
        %3882 = vmatpush1.msra.mxu0 0.0
        %3883 = vmatprep.subr.mxu0 0.0
        %3884 = vmatpush1.msra.mxu0 0.0
        %3885 = vmatprep.subr.mxu0 0.0
        %3886 = vmatpush1.msra.mxu0 0.0
        %3887 = vmatprep.subr.mxu0 0.0
        %3888 = vmatpush1.msra.mxu0 0.0
        %3889 = vmatprep.subr.mxu0 0.0
        %3890 = vmatpush1.msra.mxu0 0.0
        %3891 = vmatprep.subr.mxu0 0.0
        %3892 = vmatpush1.msra.mxu0 0.0
        %3893 = vmatprep.subr.mxu0 0.0
        %3894 = vmatpush1.msra.mxu0 0.0
        %3895 = vmatprep.mubr.f32.mxu0 0.0
        %3896 = vmatmul.mubr.f32.gmra.mrb[0].mxu0 %v3820
        %v3897 = vpop.f32.mrb[0].mxu0
        %v3898 = vadd.f32 0.0, %v3897
        %v3899 = vpop.f32.mrb[0].mxu0
        %3900 = vmatprep.mubr.f32.mxu0 0.0
        %3901 = vmatmul.mubr.f32.gmra.mrb[0].mxu0 %v3823
        %v3902 = vpop.f32.mrb[0].mxu0
        %v3903 = vadd.f32 0.0, %v3902
        %v3904 = vpop.f32.mrb[0].mxu0
        %3905 = vmatprep.mubr.f32.mxu0 0.0
        %3906 = vmatmul.mubr.f32.gmra.mrb[0].mxu0 %v3826
        %v3907 = vpop.f32.mrb[0].mxu0
        %v3908 = vadd.f32 0.0, %v3907
        %v3909 = vpop.f32.mrb[0].mxu0
        %3910 = vmatprep.mubr.f32.mxu0 0.0
        %3911 = vmatmul.mubr.f32.gmra.mrb[0].mxu0 %v3829
        %v3912 = vpop.f32.mrb[0].mxu0
        %v3913 = vadd.f32 0.0, %v3912
        %v3914 = vpop.f32.mrb[0].mxu0
        %3915 = vdwg.mxu0
        %v3917 = vsel %vm3650, %v3732, 0
        %v3920 = vsel %vm3650, %v3733, 0
        %v3923 = vsel %vm3650, %v3734, 0
        %v3926 = vsel %vm3650, %v3735, 0
        %3928 = vmatprep.subr.mxu0 0.0
        %3929 = vmatpush1.msra.mxu0 %v3724
        %3930 = vmatprep.subr.mxu0 0.0
        %3931 = vmatpush1.msra.mxu0 %v3729
        %3932 = vmatprep.subr.mxu0 0.0
        %3933 = vmatpush1.msra.mxu0 0.0
        %3934 = vmatprep.subr.mxu0 0.0
        %3935 = vmatpush1.msra.mxu0 0.0
        %3936 = vmatprep.subr.mxu0 0.0
        %3937 = vmatpush1.msra.mxu0 0.0
        %3938 = vmatprep.subr.mxu0 0.0
        %3939 = vmatpush1.msra.mxu0 0.0
        %3940 = vmatprep.subr.mxu0 0.0
        %3941 = vmatpush1.msra.mxu0 0.0
        %3942 = vmatprep.subr.mxu0 0.0
        %3943 = vmatpush1.msra.mxu0 0.0
        %3944 = vmatprep.subr.mxu0 0.0
        %3945 = vmatpush1.msra.mxu0 0.0
        %3946 = vmatprep.subr.mxu0 0.0
        %3947 = vmatpush1.msra.mxu0 0.0
        %3948 = vmatprep.subr.mxu0 0.0
        %3949 = vmatpush1.msra.mxu0 0.0
        %3950 = vmatprep.subr.mxu0 0.0
        %3951 = vmatpush1.msra.mxu0 0.0
        %3952 = vmatprep.subr.mxu0 0.0
        %3953 = vmatpush1.msra.mxu0 0.0
        %3954 = vmatprep.subr.mxu0 0.0
        %3955 = vmatpush1.msra.mxu0 0.0
        %3956 = vmatprep.subr.mxu0 0.0
        %3957 = vmatpush1.msra.mxu0 0.0
        %3958 = vmatprep.subr.mxu0 0.0
        %3959 = vmatpush1.msra.mxu0 0.0
        %3960 = vmatprep.subr.mxu0 0.0
        %3961 = vmatpush1.msra.mxu0 0.0
        %3962 = vmatprep.subr.mxu0 0.0
        %3963 = vmatpush1.msra.mxu0 0.0
        %3964 = vmatprep.subr.mxu0 0.0
        %3965 = vmatpush1.msra.mxu0 0.0
        %3966 = vmatprep.subr.mxu0 0.0
        %3967 = vmatpush1.msra.mxu0 0.0
        %3968 = vmatprep.subr.mxu0 0.0
        %3969 = vmatpush1.msra.mxu0 0.0
        %3970 = vmatprep.subr.mxu0 0.0
        %3971 = vmatpush1.msra.mxu0 0.0
        %3972 = vmatprep.subr.mxu0 0.0
        %3973 = vmatpush1.msra.mxu0 0.0
        %3974 = vmatprep.subr.mxu0 0.0
        %3975 = vmatpush1.msra.mxu0 0.0
        %3976 = vmatprep.subr.mxu0 0.0
        %3977 = vmatpush1.msra.mxu0 0.0
        %3978 = vmatprep.subr.mxu0 0.0
        %3979 = vmatpush1.msra.mxu0 0.0
        %3980 = vmatprep.subr.mxu0 0.0
        %3981 = vmatpush1.msra.mxu0 0.0
        %3982 = vmatprep.subr.mxu0 0.0
        %3983 = vmatpush1.msra.mxu0 0.0
        %3984 = vmatprep.subr.mxu0 0.0
        %3985 = vmatpush1.msra.mxu0 0.0
        %3986 = vmatprep.subr.mxu0 0.0
        %3987 = vmatpush1.msra.mxu0 0.0
        %3988 = vmatprep.subr.mxu0 0.0
        %3989 = vmatpush1.msra.mxu0 0.0
        %3990 = vmatprep.subr.mxu0 0.0
        %3991 = vmatpush1.msra.mxu0 0.0
        %3992 = vmatprep.mubr.f32.mxu0 0.0
        %3993 = vmatmul.mubr.f32.gmra.mrb[0].mxu0 %v3917
        %v3994 = vpop.f32.mrb[0].mxu0
        %v3995 = vadd.f32 %v3898, %v3994
        %v3996 = vpop.f32.mrb[0].mxu0
        %3997 = vmatprep.mubr.f32.mxu0 0.0
        %3998 = vmatmul.mubr.f32.gmra.mrb[0].mxu0 %v3920
        %v3999 = vpop.f32.mrb[0].mxu0
        %v4000 = vadd.f32 %v3903, %v3999
        %v4001 = vpop.f32.mrb[0].mxu0
        %4002 = vmatprep.mubr.f32.mxu0 0.0
        %4003 = vmatmul.mubr.f32.gmra.mrb[0].mxu0 %v3923
        %v4004 = vpop.f32.mrb[0].mxu0
        %v4005 = vadd.f32 %v3908, %v4004
        %v4006 = vpop.f32.mrb[0].mxu0
        %4007 = vmatprep.mubr.f32.mxu0 0.0
        %4008 = vmatmul.mubr.f32.gmra.mrb[0].mxu0 %v3926
        %v4009 = vpop.f32.mrb[0].mxu0
        %v4010 = vadd.f32 %v3913, %v4009
        %v4011 = vpop.f32.mrb[0].mxu0
        %4012 = vdwg.mxu0
        %s4013 = scalar_lea.vmem [#allocation6], 32
        %v4014 = vld [vmem:[%s4013] sm:$0xff]
        %v4015 = vld [vmem:[%s4013 + $0x8] sm:$0xff]
        %4016 = vmatprep.subr.mxu0 0.0
        %4017 = vmatpush1.msra.mxu0 %v4014
        %4018 = vmatprep.subr.mxu0 0.0
        %4019 = vmatpush1.msra.mxu0 %v4015
        %4020 = vmatprep.subr.mxu0 0.0
        %4021 = vmatpush1.msra.mxu0 0.0
        %4022 = vmatprep.subr.mxu0 0.0
        %4023 = vmatpush1.msra.mxu0 0.0
        %4024 = vmatprep.subr.mxu0 0.0
        %4025 = vmatpush1.msra.mxu0 0.0
        %4026 = vmatprep.subr.mxu0 0.0
        %4027 = vmatpush1.msra.mxu0 0.0
        %4028 = vmatprep.subr.mxu0 0.0
        %4029 = vmatpush1.msra.mxu0 0.0
        %4030 = vmatprep.subr.mxu0 0.0
        %4031 = vmatpush1.msra.mxu0 0.0
        %4032 = vmatprep.subr.mxu0 0.0
        %4033 = vmatpush1.msra.mxu0 0.0
        %4034 = vmatprep.subr.mxu0 0.0
        %4035 = vmatpush1.msra.mxu0 0.0
        %4036 = vmatprep.subr.mxu0 0.0
        %4037 = vmatpush1.msra.mxu0 0.0
        %4038 = vmatprep.subr.mxu0 0.0
        %4039 = vmatpush1.msra.mxu0 0.0
        %4040 = vmatprep.subr.mxu0 0.0
        %4041 = vmatpush1.msra.mxu0 0.0
        %4042 = vmatprep.subr.mxu0 0.0
        %4043 = vmatpush1.msra.mxu0 0.0
        %4044 = vmatprep.subr.mxu0 0.0
        %4045 = vmatpush1.msra.mxu0 0.0
        %4046 = vmatprep.subr.mxu0 0.0
        %4047 = vmatpush1.msra.mxu0 0.0
        %4048 = vmatprep.subr.mxu0 0.0
        %4049 = vmatpush1.msra.mxu0 0.0
        %4050 = vmatprep.subr.mxu0 0.0
        %4051 = vmatpush1.msra.mxu0 0.0
        %4052 = vmatprep.subr.mxu0 0.0
        %4053 = vmatpush1.msra.mxu0 0.0
        %4054 = vmatprep.subr.mxu0 0.0
        %4055 = vmatpush1.msra.mxu0 0.0
        %4056 = vmatprep.subr.mxu0 0.0
        %4057 = vmatpush1.msra.mxu0 0.0
        %4058 = vmatprep.subr.mxu0 0.0
        %4059 = vmatpush1.msra.mxu0 0.0
        %4060 = vmatprep.subr.mxu0 0.0
        %4061 = vmatpush1.msra.mxu0 0.0
        %4062 = vmatprep.subr.mxu0 0.0
        %4063 = vmatpush1.msra.mxu0 0.0
        %4064 = vmatprep.subr.mxu0 0.0
        %4065 = vmatpush1.msra.mxu0 0.0
        %4066 = vmatprep.subr.mxu0 0.0
        %4067 = vmatpush1.msra.mxu0 0.0
        %4068 = vmatprep.subr.mxu0 0.0
        %4069 = vmatpush1.msra.mxu0 0.0
        %4070 = vmatprep.subr.mxu0 0.0
        %4071 = vmatpush1.msra.mxu0 0.0
        %4072 = vmatprep.subr.mxu0 0.0
        %4073 = vmatpush1.msra.mxu0 0.0
        %4074 = vmatprep.subr.mxu0 0.0
        %4075 = vmatpush1.msra.mxu0 0.0
        %4076 = vmatprep.subr.mxu0 0.0
        %4077 = vmatpush1.msra.mxu0 0.0
        %4078 = vmatprep.subr.mxu0 0.0
        %4079 = vmatpush1.msra.mxu0 0.0
        %4080 = vmatprep.mubr.f32.mxu0 0.0
        %4081 = vmatmul.mubr.f32.gmra.mrb[0].mxu0 %v3652
        %v4082 = vpop.f32.mrb[0].mxu0
        %v4083 = vadd.f32 0.0, %v4082
        %v4084 = vpop.f32.mrb[0].mxu0
        %4085 = vmatprep.mubr.f32.mxu0 0.0
        %4086 = vmatmul.mubr.f32.gmra.mrb[0].mxu0 %v3655
        %v4087 = vpop.f32.mrb[0].mxu0
        %v4088 = vadd.f32 0.0, %v4087
        %v4089 = vpop.f32.mrb[0].mxu0
        %4090 = vdwg.mxu0
        %s4091 = scalar_lea.vmem %s8, 64
        %v4092 = vld [vmem:[%s4091] sm:$0xff]
        %v4093 = vld [vmem:[%s4091 + $0x8] sm:$0xff]
        %v4094 = vld [vmem:[%s4091 + $0x10] sm:$0xff]
        %v4095 = vld [vmem:[%s4091 + $0x18] sm:$0xff]
        %v4097 = vsel %vm3650, %v4092, 0
        %v4100 = vsel %vm3650, %v4093, 0
        %v4103 = vsel %vm3650, %v4094, 0
        %v4106 = vsel %vm3650, %v4095, 0
        %4108 = vmatprep.subr.mxu0 0.0
        %4109 = vmatpush1.msra.mxu0 %v4083
        %4110 = vmatprep.subr.mxu0 0.0
        %4111 = vmatpush1.msra.mxu0 %v4088
        %4112 = vmatprep.subr.mxu0 0.0
        %4113 = vmatpush1.msra.mxu0 0.0
        %4114 = vmatprep.subr.mxu0 0.0
        %4115 = vmatpush1.msra.mxu0 0.0
        %4116 = vmatprep.subr.mxu0 0.0
        %4117 = vmatpush1.msra.mxu0 0.0
        %4118 = vmatprep.subr.mxu0 0.0
        %4119 = vmatpush1.msra.mxu0 0.0
        %4120 = vmatprep.subr.mxu0 0.0
        %4121 = vmatpush1.msra.mxu0 0.0
        %4122 = vmatprep.subr.mxu0 0.0
        %4123 = vmatpush1.msra.mxu0 0.0
        %4124 = vmatprep.subr.mxu0 0.0
        %4125 = vmatpush1.msra.mxu0 0.0
        %4126 = vmatprep.subr.mxu0 0.0
        %4127 = vmatpush1.msra.mxu0 0.0
        %4128 = vmatprep.subr.mxu0 0.0
        %4129 = vmatpush1.msra.mxu0 0.0
        %4130 = vmatprep.subr.mxu0 0.0
        %4131 = vmatpush1.msra.mxu0 0.0
        %4132 = vmatprep.subr.mxu0 0.0
        %4133 = vmatpush1.msra.mxu0 0.0
        %4134 = vmatprep.subr.mxu0 0.0
        %4135 = vmatpush1.msra.mxu0 0.0
        %4136 = vmatprep.subr.mxu0 0.0
        %4137 = vmatpush1.msra.mxu0 0.0
        %4138 = vmatprep.subr.mxu0 0.0
        %4139 = vmatpush1.msra.mxu0 0.0
        %4140 = vmatprep.subr.mxu0 0.0
        %4141 = vmatpush1.msra.mxu0 0.0
        %4142 = vmatprep.subr.mxu0 0.0
        %4143 = vmatpush1.msra.mxu0 0.0
        %4144 = vmatprep.subr.mxu0 0.0
        %4145 = vmatpush1.msra.mxu0 0.0
        %4146 = vmatprep.subr.mxu0 0.0
        %4147 = vmatpush1.msra.mxu0 0.0
        %4148 = vmatprep.subr.mxu0 0.0
        %4149 = vmatpush1.msra.mxu0 0.0
        %4150 = vmatprep.subr.mxu0 0.0
        %4151 = vmatpush1.msra.mxu0 0.0
        %4152 = vmatprep.subr.mxu0 0.0
        %4153 = vmatpush1.msra.mxu0 0.0
        %4154 = vmatprep.subr.mxu0 0.0
        %4155 = vmatpush1.msra.mxu0 0.0
        %4156 = vmatprep.subr.mxu0 0.0
        %4157 = vmatpush1.msra.mxu0 0.0
        %4158 = vmatprep.subr.mxu0 0.0
        %4159 = vmatpush1.msra.mxu0 0.0
        %4160 = vmatprep.subr.mxu0 0.0
        %4161 = vmatpush1.msra.mxu0 0.0
        %4162 = vmatprep.subr.mxu0 0.0
        %4163 = vmatpush1.msra.mxu0 0.0
        %4164 = vmatprep.subr.mxu0 0.0
        %4165 = vmatpush1.msra.mxu0 0.0
        %4166 = vmatprep.subr.mxu0 0.0
        %4167 = vmatpush1.msra.mxu0 0.0
        %4168 = vmatprep.subr.mxu0 0.0
        %4169 = vmatpush1.msra.mxu0 0.0
        %4170 = vmatprep.subr.mxu0 0.0
        %4171 = vmatpush1.msra.mxu0 0.0
        %4172 = vmatprep.mubr.f32.mxu0 0.0
        %4173 = vmatmul.mubr.f32.gmra.mrb[0].mxu0 %v4097
        %v4174 = vpop.f32.mrb[0].mxu0
        %v4175 = vadd.f32 0.0, %v4174
        %v4176 = vpop.f32.mrb[0].mxu0
        %4177 = vmatprep.mubr.f32.mxu0 0.0
        %4178 = vmatmul.mubr.f32.gmra.mrb[0].mxu0 %v4100
        %v4179 = vpop.f32.mrb[0].mxu0
        %v4180 = vadd.f32 0.0, %v4179
        %v4181 = vpop.f32.mrb[0].mxu0
        %4182 = vmatprep.mubr.f32.mxu0 0.0
        %4183 = vmatmul.mubr.f32.gmra.mrb[0].mxu0 %v4103
        %v4184 = vpop.f32.mrb[0].mxu0
        %v4185 = vadd.f32 0.0, %v4184
        %v4186 = vpop.f32.mrb[0].mxu0
        %4187 = vmatprep.mubr.f32.mxu0 0.0
        %4188 = vmatmul.mubr.f32.gmra.mrb[0].mxu0 %v4106
        %v4189 = vpop.f32.mrb[0].mxu0
        %v4190 = vadd.f32 0.0, %v4189
        %v4191 = vpop.f32.mrb[0].mxu0
        %4192 = vdwg.mxu0
        %v4193 = vadd.f32 %v3995, %v4175
        %v4194 = vadd.f32 %v4000, %v4180
        %v4195 = vadd.f32 %v4005, %v4185
        %v4196 = vadd.f32 %v4010, %v4190
        %s4197 = scalar_lea.vmem [#allocation6], 48
        %v4198 = vld [vmem:[%s4197] sm:$0xff]
        %v4199 = vld [vmem:[%s4197 + $0x8] sm:$0xff]
        %4200 = vmatprep.subr.mxu0 0.0
        %4201 = vmatpush1.msra.mxu0 %v4198
        %4202 = vmatprep.subr.mxu0 0.0
        %4203 = vmatpush1.msra.mxu0 %v4199
        %4204 = vmatprep.subr.mxu0 0.0
        %4205 = vmatpush1.msra.mxu0 0.0
        %4206 = vmatprep.subr.mxu0 0.0
        %4207 = vmatpush1.msra.mxu0 0.0
        %4208 = vmatprep.subr.mxu0 0.0
        %4209 = vmatpush1.msra.mxu0 0.0
        %4210 = vmatprep.subr.mxu0 0.0
        %4211 = vmatpush1.msra.mxu0 0.0
        %4212 = vmatprep.subr.mxu0 0.0
        %4213 = vmatpush1.msra.mxu0 0.0
        %4214 = vmatprep.subr.mxu0 0.0
        %4215 = vmatpush1.msra.mxu0 0.0
        %4216 = vmatprep.subr.mxu0 0.0
        %4217 = vmatpush1.msra.mxu0 0.0
        %4218 = vmatprep.subr.mxu0 0.0
        %4219 = vmatpush1.msra.mxu0 0.0
        %4220 = vmatprep.subr.mxu0 0.0
        %4221 = vmatpush1.msra.mxu0 0.0
        %4222 = vmatprep.subr.mxu0 0.0
        %4223 = vmatpush1.msra.mxu0 0.0
        %4224 = vmatprep.subr.mxu0 0.0
        %4225 = vmatpush1.msra.mxu0 0.0
        %4226 = vmatprep.subr.mxu0 0.0
        %4227 = vmatpush1.msra.mxu0 0.0
        %4228 = vmatprep.subr.mxu0 0.0
        %4229 = vmatpush1.msra.mxu0 0.0
        %4230 = vmatprep.subr.mxu0 0.0
        %4231 = vmatpush1.msra.mxu0 0.0
        %4232 = vmatprep.subr.mxu0 0.0
        %4233 = vmatpush1.msra.mxu0 0.0
        %4234 = vmatprep.subr.mxu0 0.0
        %4235 = vmatpush1.msra.mxu0 0.0
        %4236 = vmatprep.subr.mxu0 0.0
        %4237 = vmatpush1.msra.mxu0 0.0
        %4238 = vmatprep.subr.mxu0 0.0
        %4239 = vmatpush1.msra.mxu0 0.0
        %4240 = vmatprep.subr.mxu0 0.0
        %4241 = vmatpush1.msra.mxu0 0.0
        %4242 = vmatprep.subr.mxu0 0.0
        %4243 = vmatpush1.msra.mxu0 0.0
        %4244 = vmatprep.subr.mxu0 0.0
        %4245 = vmatpush1.msra.mxu0 0.0
        %4246 = vmatprep.subr.mxu0 0.0
        %4247 = vmatpush1.msra.mxu0 0.0
        %4248 = vmatprep.subr.mxu0 0.0
        %4249 = vmatpush1.msra.mxu0 0.0
        %4250 = vmatprep.subr.mxu0 0.0
        %4251 = vmatpush1.msra.mxu0 0.0
        %4252 = vmatprep.subr.mxu0 0.0
        %4253 = vmatpush1.msra.mxu0 0.0
        %4254 = vmatprep.subr.mxu0 0.0
        %4255 = vmatpush1.msra.mxu0 0.0
        %4256 = vmatprep.subr.mxu0 0.0
        %4257 = vmatpush1.msra.mxu0 0.0
        %4258 = vmatprep.subr.mxu0 0.0
        %4259 = vmatpush1.msra.mxu0 0.0
        %4260 = vmatprep.subr.mxu0 0.0
        %4261 = vmatpush1.msra.mxu0 0.0
        %4262 = vmatprep.subr.mxu0 0.0
        %4263 = vmatpush1.msra.mxu0 0.0
        %4264 = vmatprep.mubr.f32.mxu0 0.0
        %4265 = vmatmul.mubr.f32.gmra.mrb[0].mxu0 %v3652
        %v4266 = vpop.f32.mrb[0].mxu0
        %v4267 = vadd.f32 0.0, %v4266
        %v4268 = vpop.f32.mrb[0].mxu0
        %4269 = vmatprep.mubr.f32.mxu0 0.0
        %4270 = vmatmul.mubr.f32.gmra.mrb[0].mxu0 %v3655
        %v4271 = vpop.f32.mrb[0].mxu0
        %v4272 = vadd.f32 0.0, %v4271
        %v4273 = vpop.f32.mrb[0].mxu0
        %4274 = vdwg.mxu0
        %s4275 = scalar_lea.vmem %s8, 96
        %v4276 = vld [vmem:[%s4275] sm:$0xff]
        %v4277 = vld [vmem:[%s4275 + $0x8] sm:$0xff]
        %v4278 = vld [vmem:[%s4275 + $0x10] sm:$0xff]
        %v4279 = vld [vmem:[%s4275 + $0x18] sm:$0xff]
        %v4281 = vsel %vm3650, %v4276, 0
        %v4284 = vsel %vm3650, %v4277, 0
        %v4287 = vsel %vm3650, %v4278, 0
        %v4290 = vsel %vm3650, %v4279, 0
        %4292 = vmatprep.subr.mxu0 0.0
        %4293 = vmatpush1.msra.mxu0 %v4267
        %4294 = vmatprep.subr.mxu0 0.0
        %4295 = vmatpush1.msra.mxu0 %v4272
        %4296 = vmatprep.subr.mxu0 0.0
        %4297 = vmatpush1.msra.mxu0 0.0
        %4298 = vmatprep.subr.mxu0 0.0
        %4299 = vmatpush1.msra.mxu0 0.0
        %4300 = vmatprep.subr.mxu0 0.0
        %4301 = vmatpush1.msra.mxu0 0.0
        %4302 = vmatprep.subr.mxu0 0.0
        %4303 = vmatpush1.msra.mxu0 0.0
        %4304 = vmatprep.subr.mxu0 0.0
        %4305 = vmatpush1.msra.mxu0 0.0
        %4306 = vmatprep.subr.mxu0 0.0
        %4307 = vmatpush1.msra.mxu0 0.0
        %4308 = vmatprep.subr.mxu0 0.0
        %4309 = vmatpush1.msra.mxu0 0.0
        %4310 = vmatprep.subr.mxu0 0.0
        %4311 = vmatpush1.msra.mxu0 0.0
        %4312 = vmatprep.subr.mxu0 0.0
        %4313 = vmatpush1.msra.mxu0 0.0
        %4314 = vmatprep.subr.mxu0 0.0
        %4315 = vmatpush1.msra.mxu0 0.0
        %4316 = vmatprep.subr.mxu0 0.0
        %4317 = vmatpush1.msra.mxu0 0.0
        %4318 = vmatprep.subr.mxu0 0.0
        %4319 = vmatpush1.msra.mxu0 0.0
        %4320 = vmatprep.subr.mxu0 0.0
        %4321 = vmatpush1.msra.mxu0 0.0
        %4322 = vmatprep.subr.mxu0 0.0
        %4323 = vmatpush1.msra.mxu0 0.0
        %4324 = vmatprep.subr.mxu0 0.0
        %4325 = vmatpush1.msra.mxu0 0.0
        %4326 = vmatprep.subr.mxu0 0.0
        %4327 = vmatpush1.msra.mxu0 0.0
        %4328 = vmatprep.subr.mxu0 0.0
        %4329 = vmatpush1.msra.mxu0 0.0
        %4330 = vmatprep.subr.mxu0 0.0
        %4331 = vmatpush1.msra.mxu0 0.0
        %4332 = vmatprep.subr.mxu0 0.0
        %4333 = vmatpush1.msra.mxu0 0.0
        %4334 = vmatprep.subr.mxu0 0.0
        %4335 = vmatpush1.msra.mxu0 0.0
        %4336 = vmatprep.subr.mxu0 0.0
        %4337 = vmatpush1.msra.mxu0 0.0
        %4338 = vmatprep.subr.mxu0 0.0
        %4339 = vmatpush1.msra.mxu0 0.0
        %4340 = vmatprep.subr.mxu0 0.0
        %4341 = vmatpush1.msra.mxu0 0.0
        %4342 = vmatprep.subr.mxu0 0.0
        %4343 = vmatpush1.msra.mxu0 0.0
        %4344 = vmatprep.subr.mxu0 0.0
        %4345 = vmatpush1.msra.mxu0 0.0
        %4346 = vmatprep.subr.mxu0 0.0
        %4347 = vmatpush1.msra.mxu0 0.0
        %4348 = vmatprep.subr.mxu0 0.0
        %4349 = vmatpush1.msra.mxu0 0.0
        %4350 = vmatprep.subr.mxu0 0.0
        %4351 = vmatpush1.msra.mxu0 0.0
        %4352 = vmatprep.subr.mxu0 0.0
        %4353 = vmatpush1.msra.mxu0 0.0
        %4354 = vmatprep.subr.mxu0 0.0
        %4355 = vmatpush1.msra.mxu0 0.0
        %4356 = vmatprep.mubr.f32.mxu0 0.0
        %4357 = vmatmul.mubr.f32.gmra.mrb[0].mxu0 %v4281
        %v4358 = vpop.f32.mrb[0].mxu0
        %v4359 = vadd.f32 0.0, %v4358
        %v4360 = vpop.f32.mrb[0].mxu0
        %4361 = vmatprep.mubr.f32.mxu0 0.0
        %4362 = vmatmul.mubr.f32.gmra.mrb[0].mxu0 %v4284
        %v4363 = vpop.f32.mrb[0].mxu0
        %v4364 = vadd.f32 0.0, %v4363
        %v4365 = vpop.f32.mrb[0].mxu0
        %4366 = vmatprep.mubr.f32.mxu0 0.0
        %4367 = vmatmul.mubr.f32.gmra.mrb[0].mxu0 %v4287
        %v4368 = vpop.f32.mrb[0].mxu0
        %v4369 = vadd.f32 0.0, %v4368
        %v4370 = vpop.f32.mrb[0].mxu0
        %4371 = vmatprep.mubr.f32.mxu0 0.0
        %4372 = vmatmul.mubr.f32.gmra.mrb[0].mxu0 %v4290
        %v4373 = vpop.f32.mrb[0].mxu0
        %v4374 = vadd.f32 0.0, %v4373
        %v4375 = vpop.f32.mrb[0].mxu0
        %4376 = vdwg.mxu0
        %v4377 = vadd.f32 %v4193, %v4359
        %v4378 = vadd.f32 %v4194, %v4364
        %v4379 = vadd.f32 %v4195, %v4369
        %v4380 = vadd.f32 %v4196, %v4374
        %s4381 = scalar_lea.vmem [#allocation6], 64
        %v4382 = vld [vmem:[%s4381] sm:$0xff]
        %v4383 = vld [vmem:[%s4381 + $0x8] sm:$0xff]
        %4384 = vmatprep.subr.mxu0 0.0
        %4385 = vmatpush1.msra.mxu0 %v4382
        %4386 = vmatprep.subr.mxu0 0.0
        %4387 = vmatpush1.msra.mxu0 %v4383
        %4388 = vmatprep.subr.mxu0 0.0
        %4389 = vmatpush1.msra.mxu0 0.0
        %4390 = vmatprep.subr.mxu0 0.0
        %4391 = vmatpush1.msra.mxu0 0.0
        %4392 = vmatprep.subr.mxu0 0.0
        %4393 = vmatpush1.msra.mxu0 0.0
        %4394 = vmatprep.subr.mxu0 0.0
        %4395 = vmatpush1.msra.mxu0 0.0
        %4396 = vmatprep.subr.mxu0 0.0
        %4397 = vmatpush1.msra.mxu0 0.0
        %4398 = vmatprep.subr.mxu0 0.0
        %4399 = vmatpush1.msra.mxu0 0.0
        %4400 = vmatprep.subr.mxu0 0.0
        %4401 = vmatpush1.msra.mxu0 0.0
        %4402 = vmatprep.subr.mxu0 0.0
        %4403 = vmatpush1.msra.mxu0 0.0
        %4404 = vmatprep.subr.mxu0 0.0
        %4405 = vmatpush1.msra.mxu0 0.0
        %4406 = vmatprep.subr.mxu0 0.0
        %4407 = vmatpush1.msra.mxu0 0.0
        %4408 = vmatprep.subr.mxu0 0.0
        %4409 = vmatpush1.msra.mxu0 0.0
        %4410 = vmatprep.subr.mxu0 0.0
        %4411 = vmatpush1.msra.mxu0 0.0
        %4412 = vmatprep.subr.mxu0 0.0
        %4413 = vmatpush1.msra.mxu0 0.0
        %4414 = vmatprep.subr.mxu0 0.0
        %4415 = vmatpush1.msra.mxu0 0.0
        %4416 = vmatprep.subr.mxu0 0.0
        %4417 = vmatpush1.msra.mxu0 0.0
        %4418 = vmatprep.subr.mxu0 0.0
        %4419 = vmatpush1.msra.mxu0 0.0
        %4420 = vmatprep.subr.mxu0 0.0
        %4421 = vmatpush1.msra.mxu0 0.0
        %4422 = vmatprep.subr.mxu0 0.0
        %4423 = vmatpush1.msra.mxu0 0.0
        %4424 = vmatprep.subr.mxu0 0.0
        %4425 = vmatpush1.msra.mxu0 0.0
        %4426 = vmatprep.subr.mxu0 0.0
        %4427 = vmatpush1.msra.mxu0 0.0
        %4428 = vmatprep.subr.mxu0 0.0
        %4429 = vmatpush1.msra.mxu0 0.0
        %4430 = vmatprep.subr.mxu0 0.0
        %4431 = vmatpush1.msra.mxu0 0.0
        %4432 = vmatprep.subr.mxu0 0.0
        %4433 = vmatpush1.msra.mxu0 0.0
        %4434 = vmatprep.subr.mxu0 0.0
        %4435 = vmatpush1.msra.mxu0 0.0
        %4436 = vmatprep.subr.mxu0 0.0
        %4437 = vmatpush1.msra.mxu0 0.0
        %4438 = vmatprep.subr.mxu0 0.0
        %4439 = vmatpush1.msra.mxu0 0.0
        %4440 = vmatprep.subr.mxu0 0.0
        %4441 = vmatpush1.msra.mxu0 0.0
        %4442 = vmatprep.subr.mxu0 0.0
        %4443 = vmatpush1.msra.mxu0 0.0
        %4444 = vmatprep.subr.mxu0 0.0
        %4445 = vmatpush1.msra.mxu0 0.0
        %4446 = vmatprep.subr.mxu0 0.0
        %4447 = vmatpush1.msra.mxu0 0.0
        %4448 = vmatprep.mubr.f32.mxu0 0.0
        %4449 = vmatmul.mubr.f32.gmra.mrb[0].mxu0 %v3652
        %v4450 = vpop.f32.mrb[0].mxu0
        %v4451 = vadd.f32 0.0, %v4450
        %v4452 = vpop.f32.mrb[0].mxu0
        %4453 = vmatprep.mubr.f32.mxu0 0.0
        %4454 = vmatmul.mubr.f32.gmra.mrb[0].mxu0 %v3655
        %v4455 = vpop.f32.mrb[0].mxu0
        %v4456 = vadd.f32 0.0, %v4455
        %v4457 = vpop.f32.mrb[0].mxu0
        %4458 = vdwg.mxu0
        %s4459 = scalar_lea.vmem %s8, 128
        %v4460 = vld [vmem:[%s4459] sm:$0xff]
        %v4461 = vld [vmem:[%s4459 + $0x8] sm:$0xff]
        %v4462 = vld [vmem:[%s4459 + $0x10] sm:$0xff]
        %v4463 = vld [vmem:[%s4459 + $0x18] sm:$0xff]
        %v4465 = vsel %vm3650, %v4460, 0
        %v4468 = vsel %vm3650, %v4461, 0
        %v4471 = vsel %vm3650, %v4462, 0
        %v4474 = vsel %vm3650, %v4463, 0
        %4476 = vmatprep.subr.mxu0 0.0
        %4477 = vmatpush1.msra.mxu0 %v4451
        %4478 = vmatprep.subr.mxu0 0.0
        %4479 = vmatpush1.msra.mxu0 %v4456
        %4480 = vmatprep.subr.mxu0 0.0
        %4481 = vmatpush1.msra.mxu0 0.0
        %4482 = vmatprep.subr.mxu0 0.0
        %4483 = vmatpush1.msra.mxu0 0.0
        %4484 = vmatprep.subr.mxu0 0.0
        %4485 = vmatpush1.msra.mxu0 0.0
        %4486 = vmatprep.subr.mxu0 0.0
        %4487 = vmatpush1.msra.mxu0 0.0
        %4488 = vmatprep.subr.mxu0 0.0
        %4489 = vmatpush1.msra.mxu0 0.0
        %4490 = vmatprep.subr.mxu0 0.0
        %4491 = vmatpush1.msra.mxu0 0.0
        %4492 = vmatprep.subr.mxu0 0.0
        %4493 = vmatpush1.msra.mxu0 0.0
        %4494 = vmatprep.subr.mxu0 0.0
        %4495 = vmatpush1.msra.mxu0 0.0
        %4496 = vmatprep.subr.mxu0 0.0
        %4497 = vmatpush1.msra.mxu0 0.0
        %4498 = vmatprep.subr.mxu0 0.0
        %4499 = vmatpush1.msra.mxu0 0.0
        %4500 = vmatprep.subr.mxu0 0.0
        %4501 = vmatpush1.msra.mxu0 0.0
        %4502 = vmatprep.subr.mxu0 0.0
        %4503 = vmatpush1.msra.mxu0 0.0
        %4504 = vmatprep.subr.mxu0 0.0
        %4505 = vmatpush1.msra.mxu0 0.0
        %4506 = vmatprep.subr.mxu0 0.0
        %4507 = vmatpush1.msra.mxu0 0.0
        %4508 = vmatprep.subr.mxu0 0.0
        %4509 = vmatpush1.msra.mxu0 0.0
        %4510 = vmatprep.subr.mxu0 0.0
        %4511 = vmatpush1.msra.mxu0 0.0
        %4512 = vmatprep.subr.mxu0 0.0
        %4513 = vmatpush1.msra.mxu0 0.0
        %4514 = vmatprep.subr.mxu0 0.0
        %4515 = vmatpush1.msra.mxu0 0.0
        %4516 = vmatprep.subr.mxu0 0.0
        %4517 = vmatpush1.msra.mxu0 0.0
        %4518 = vmatprep.subr.mxu0 0.0
        %4519 = vmatpush1.msra.mxu0 0.0
        %4520 = vmatprep.subr.mxu0 0.0
        %4521 = vmatpush1.msra.mxu0 0.0
        %4522 = vmatprep.subr.mxu0 0.0
        %4523 = vmatpush1.msra.mxu0 0.0
        %4524 = vmatprep.subr.mxu0 0.0
        %4525 = vmatpush1.msra.mxu0 0.0
        %4526 = vmatprep.subr.mxu0 0.0
        %4527 = vmatpush1.msra.mxu0 0.0
        %4528 = vmatprep.subr.mxu0 0.0
        %4529 = vmatpush1.msra.mxu0 0.0
        %4530 = vmatprep.subr.mxu0 0.0
        %4531 = vmatpush1.msra.mxu0 0.0
        %4532 = vmatprep.subr.mxu0 0.0
        %4533 = vmatpush1.msra.mxu0 0.0
        %4534 = vmatprep.subr.mxu0 0.0
        %4535 = vmatpush1.msra.mxu0 0.0
        %4536 = vmatprep.subr.mxu0 0.0
        %4537 = vmatpush1.msra.mxu0 0.0
        %4538 = vmatprep.subr.mxu0 0.0
        %4539 = vmatpush1.msra.mxu0 0.0
        %4540 = vmatprep.mubr.f32.mxu0 0.0
        %4541 = vmatmul.mubr.f32.gmra.mrb[0].mxu0 %v4465
        %v4542 = vpop.f32.mrb[0].mxu0
        %v4543 = vadd.f32 0.0, %v4542
        %v4544 = vpop.f32.mrb[0].mxu0
        %4545 = vmatprep.mubr.f32.mxu0 0.0
        %4546 = vmatmul.mubr.f32.gmra.mrb[0].mxu0 %v4468
        %v4547 = vpop.f32.mrb[0].mxu0
        %v4548 = vadd.f32 0.0, %v4547
        %v4549 = vpop.f32.mrb[0].mxu0
        %4550 = vmatprep.mubr.f32.mxu0 0.0
        %4551 = vmatmul.mubr.f32.gmra.mrb[0].mxu0 %v4471
        %v4552 = vpop.f32.mrb[0].mxu0
        %v4553 = vadd.f32 0.0, %v4552
        %v4554 = vpop.f32.mrb[0].mxu0
        %4555 = vmatprep.mubr.f32.mxu0 0.0
        %4556 = vmatmul.mubr.f32.gmra.mrb[0].mxu0 %v4474
        %v4557 = vpop.f32.mrb[0].mxu0
        %v4558 = vadd.f32 0.0, %v4557
        %v4559 = vpop.f32.mrb[0].mxu0
        %4560 = vdwg.mxu0
        %v4561 = vadd.f32 %v4377, %v4543
        %v4562 = vadd.f32 %v4378, %v4548
        %v4563 = vadd.f32 %v4379, %v4553
        %v4564 = vadd.f32 %v4380, %v4558
        %s4565 = scalar_lea.vmem [#allocation6], 80
        %v4566 = vld [vmem:[%s4565] sm:$0xff]
        %v4567 = vld [vmem:[%s4565 + $0x8] sm:$0xff]
        %4568 = vmatprep.subr.mxu0 0.0
        %4569 = vmatpush1.msra.mxu0 %v4566
        %4570 = vmatprep.subr.mxu0 0.0
        %4571 = vmatpush1.msra.mxu0 %v4567
        %4572 = vmatprep.subr.mxu0 0.0
        %4573 = vmatpush1.msra.mxu0 0.0
        %4574 = vmatprep.subr.mxu0 0.0
        %4575 = vmatpush1.msra.mxu0 0.0
        %4576 = vmatprep.subr.mxu0 0.0
        %4577 = vmatpush1.msra.mxu0 0.0
        %4578 = vmatprep.subr.mxu0 0.0
        %4579 = vmatpush1.msra.mxu0 0.0
        %4580 = vmatprep.subr.mxu0 0.0
        %4581 = vmatpush1.msra.mxu0 0.0
        %4582 = vmatprep.subr.mxu0 0.0
        %4583 = vmatpush1.msra.mxu0 0.0
        %4584 = vmatprep.subr.mxu0 0.0
        %4585 = vmatpush1.msra.mxu0 0.0
        %4586 = vmatprep.subr.mxu0 0.0
        %4587 = vmatpush1.msra.mxu0 0.0
        %4588 = vmatprep.subr.mxu0 0.0
        %4589 = vmatpush1.msra.mxu0 0.0
        %4590 = vmatprep.subr.mxu0 0.0
        %4591 = vmatpush1.msra.mxu0 0.0
        %4592 = vmatprep.subr.mxu0 0.0
        %4593 = vmatpush1.msra.mxu0 0.0
        %4594 = vmatprep.subr.mxu0 0.0
        %4595 = vmatpush1.msra.mxu0 0.0
        %4596 = vmatprep.subr.mxu0 0.0
        %4597 = vmatpush1.msra.mxu0 0.0
        %4598 = vmatprep.subr.mxu0 0.0
        %4599 = vmatpush1.msra.mxu0 0.0
        %4600 = vmatprep.subr.mxu0 0.0
        %4601 = vmatpush1.msra.mxu0 0.0
        %4602 = vmatprep.subr.mxu0 0.0
        %4603 = vmatpush1.msra.mxu0 0.0
        %4604 = vmatprep.subr.mxu0 0.0
        %4605 = vmatpush1.msra.mxu0 0.0
        %4606 = vmatprep.subr.mxu0 0.0
        %4607 = vmatpush1.msra.mxu0 0.0
        %4608 = vmatprep.subr.mxu0 0.0
        %4609 = vmatpush1.msra.mxu0 0.0
        %4610 = vmatprep.subr.mxu0 0.0
        %4611 = vmatpush1.msra.mxu0 0.0
        %4612 = vmatprep.subr.mxu0 0.0
        %4613 = vmatpush1.msra.mxu0 0.0
        %4614 = vmatprep.subr.mxu0 0.0
        %4615 = vmatpush1.msra.mxu0 0.0
        %4616 = vmatprep.subr.mxu0 0.0
        %4617 = vmatpush1.msra.mxu0 0.0
        %4618 = vmatprep.subr.mxu0 0.0
        %4619 = vmatpush1.msra.mxu0 0.0
        %4620 = vmatprep.subr.mxu0 0.0
        %4621 = vmatpush1.msra.mxu0 0.0
        %4622 = vmatprep.subr.mxu0 0.0
        %4623 = vmatpush1.msra.mxu0 0.0
        %4624 = vmatprep.subr.mxu0 0.0
        %4625 = vmatpush1.msra.mxu0 0.0
        %4626 = vmatprep.subr.mxu0 0.0
        %4627 = vmatpush1.msra.mxu0 0.0
        %4628 = vmatprep.subr.mxu0 0.0
        %4629 = vmatpush1.msra.mxu0 0.0
        %4630 = vmatprep.subr.mxu0 0.0
        %4631 = vmatpush1.msra.mxu0 0.0
        %4632 = vmatprep.mubr.f32.mxu0 0.0
        %4633 = vmatmul.mubr.f32.gmra.mrb[0].mxu0 %v3652
        %v4634 = vpop.f32.mrb[0].mxu0
        %v4635 = vadd.f32 0.0, %v4634
        %v4636 = vpop.f32.mrb[0].mxu0
        %4637 = vmatprep.mubr.f32.mxu0 0.0
        %4638 = vmatmul.mubr.f32.gmra.mrb[0].mxu0 %v3655
        %v4639 = vpop.f32.mrb[0].mxu0
        %v4640 = vadd.f32 0.0, %v4639
        %v4641 = vpop.f32.mrb[0].mxu0
        %4642 = vdwg.mxu0
        %s4643 = scalar_lea.vmem %s8, 160
        %v4644 = vld [vmem:[%s4643] sm:$0xff]
        %v4645 = vld [vmem:[%s4643 + $0x8] sm:$0xff]
        %v4646 = vld [vmem:[%s4643 + $0x10] sm:$0xff]
        %v4647 = vld [vmem:[%s4643 + $0x18] sm:$0xff]
        %v4649 = vsel %vm3650, %v4644, 0
        %v4652 = vsel %vm3650, %v4645, 0
        %v4655 = vsel %vm3650, %v4646, 0
        %v4658 = vsel %vm3650, %v4647, 0
        %4660 = vmatprep.subr.mxu0 0.0
        %4661 = vmatpush1.msra.mxu0 %v4635
        %4662 = vmatprep.subr.mxu0 0.0
        %4663 = vmatpush1.msra.mxu0 %v4640
        %4664 = vmatprep.subr.mxu0 0.0
        %4665 = vmatpush1.msra.mxu0 0.0
        %4666 = vmatprep.subr.mxu0 0.0
        %4667 = vmatpush1.msra.mxu0 0.0
        %4668 = vmatprep.subr.mxu0 0.0
        %4669 = vmatpush1.msra.mxu0 0.0
        %4670 = vmatprep.subr.mxu0 0.0
        %4671 = vmatpush1.msra.mxu0 0.0
        %4672 = vmatprep.subr.mxu0 0.0
        %4673 = vmatpush1.msra.mxu0 0.0
        %4674 = vmatprep.subr.mxu0 0.0
        %4675 = vmatpush1.msra.mxu0 0.0
        %4676 = vmatprep.subr.mxu0 0.0
        %4677 = vmatpush1.msra.mxu0 0.0
        %4678 = vmatprep.subr.mxu0 0.0
        %4679 = vmatpush1.msra.mxu0 0.0
        %4680 = vmatprep.subr.mxu0 0.0
        %4681 = vmatpush1.msra.mxu0 0.0
        %4682 = vmatprep.subr.mxu0 0.0
        %4683 = vmatpush1.msra.mxu0 0.0
        %4684 = vmatprep.subr.mxu0 0.0
        %4685 = vmatpush1.msra.mxu0 0.0
        %4686 = vmatprep.subr.mxu0 0.0
        %4687 = vmatpush1.msra.mxu0 0.0
        %4688 = vmatprep.subr.mxu0 0.0
        %4689 = vmatpush1.msra.mxu0 0.0
        %4690 = vmatprep.subr.mxu0 0.0
        %4691 = vmatpush1.msra.mxu0 0.0
        %4692 = vmatprep.subr.mxu0 0.0
        %4693 = vmatpush1.msra.mxu0 0.0
        %4694 = vmatprep.subr.mxu0 0.0
        %4695 = vmatpush1.msra.mxu0 0.0
        %4696 = vmatprep.subr.mxu0 0.0
        %4697 = vmatpush1.msra.mxu0 0.0
        %4698 = vmatprep.subr.mxu0 0.0
        %4699 = vmatpush1.msra.mxu0 0.0
        %4700 = vmatprep.subr.mxu0 0.0
        %4701 = vmatpush1.msra.mxu0 0.0
        %4702 = vmatprep.subr.mxu0 0.0
        %4703 = vmatpush1.msra.mxu0 0.0
        %4704 = vmatprep.subr.mxu0 0.0
        %4705 = vmatpush1.msra.mxu0 0.0
        %4706 = vmatprep.subr.mxu0 0.0
        %4707 = vmatpush1.msra.mxu0 0.0
        %4708 = vmatprep.subr.mxu0 0.0
        %4709 = vmatpush1.msra.mxu0 0.0
        %4710 = vmatprep.subr.mxu0 0.0
        %4711 = vmatpush1.msra.mxu0 0.0
        %4712 = vmatprep.subr.mxu0 0.0
        %4713 = vmatpush1.msra.mxu0 0.0
        %4714 = vmatprep.subr.mxu0 0.0
        %4715 = vmatpush1.msra.mxu0 0.0
        %4716 = vmatprep.subr.mxu0 0.0
        %4717 = vmatpush1.msra.mxu0 0.0
        %4718 = vmatprep.subr.mxu0 0.0
        %4719 = vmatpush1.msra.mxu0 0.0
        %4720 = vmatprep.subr.mxu0 0.0
        %4721 = vmatpush1.msra.mxu0 0.0
        %4722 = vmatprep.subr.mxu0 0.0
        %4723 = vmatpush1.msra.mxu0 0.0
        %4724 = vmatprep.mubr.f32.mxu0 0.0
        %4725 = vmatmul.mubr.f32.gmra.mrb[0].mxu0 %v4649
        %v4726 = vpop.f32.mrb[0].mxu0
        %v4727 = vadd.f32 0.0, %v4726
        %v4728 = vpop.f32.mrb[0].mxu0
        %4729 = vmatprep.mubr.f32.mxu0 0.0
        %4730 = vmatmul.mubr.f32.gmra.mrb[0].mxu0 %v4652
        %v4731 = vpop.f32.mrb[0].mxu0
        %v4732 = vadd.f32 0.0, %v4731
        %v4733 = vpop.f32.mrb[0].mxu0
        %4734 = vmatprep.mubr.f32.mxu0 0.0
        %4735 = vmatmul.mubr.f32.gmra.mrb[0].mxu0 %v4655
        %v4736 = vpop.f32.mrb[0].mxu0
        %v4737 = vadd.f32 0.0, %v4736
        %v4738 = vpop.f32.mrb[0].mxu0
        %4739 = vmatprep.mubr.f32.mxu0 0.0
        %4740 = vmatmul.mubr.f32.gmra.mrb[0].mxu0 %v4658
        %v4741 = vpop.f32.mrb[0].mxu0
        %v4742 = vadd.f32 0.0, %v4741
        %v4743 = vpop.f32.mrb[0].mxu0
        %4744 = vdwg.mxu0
        %v4745 = vadd.f32 %v4561, %v4727
        %v4746 = vadd.f32 %v4562, %v4732
        %v4747 = vadd.f32 %v4563, %v4737
        %v4748 = vadd.f32 %v4564, %v4742
        %s4749 = scalar_lea.vmem [#allocation6], 96
        %v4750 = vld [vmem:[%s4749] sm:$0xff]
        %v4751 = vld [vmem:[%s4749 + $0x8] sm:$0xff]
        %4752 = vmatprep.subr.mxu0 0.0
        %4753 = vmatpush1.msra.mxu0 %v4750
        %4754 = vmatprep.subr.mxu0 0.0
        %4755 = vmatpush1.msra.mxu0 %v4751
        %4756 = vmatprep.subr.mxu0 0.0
        %4757 = vmatpush1.msra.mxu0 0.0
        %4758 = vmatprep.subr.mxu0 0.0
        %4759 = vmatpush1.msra.mxu0 0.0
        %4760 = vmatprep.subr.mxu0 0.0
        %4761 = vmatpush1.msra.mxu0 0.0
        %4762 = vmatprep.subr.mxu0 0.0
        %4763 = vmatpush1.msra.mxu0 0.0
        %4764 = vmatprep.subr.mxu0 0.0
        %4765 = vmatpush1.msra.mxu0 0.0
        %4766 = vmatprep.subr.mxu0 0.0
        %4767 = vmatpush1.msra.mxu0 0.0
        %4768 = vmatprep.subr.mxu0 0.0
        %4769 = vmatpush1.msra.mxu0 0.0
        %4770 = vmatprep.subr.mxu0 0.0
        %4771 = vmatpush1.msra.mxu0 0.0
        %4772 = vmatprep.subr.mxu0 0.0
        %4773 = vmatpush1.msra.mxu0 0.0
        %4774 = vmatprep.subr.mxu0 0.0
        %4775 = vmatpush1.msra.mxu0 0.0
        %4776 = vmatprep.subr.mxu0 0.0
        %4777 = vmatpush1.msra.mxu0 0.0
        %4778 = vmatprep.subr.mxu0 0.0
        %4779 = vmatpush1.msra.mxu0 0.0
        %4780 = vmatprep.subr.mxu0 0.0
        %4781 = vmatpush1.msra.mxu0 0.0
        %4782 = vmatprep.subr.mxu0 0.0
        %4783 = vmatpush1.msra.mxu0 0.0
        %4784 = vmatprep.subr.mxu0 0.0
        %4785 = vmatpush1.msra.mxu0 0.0
        %4786 = vmatprep.subr.mxu0 0.0
        %4787 = vmatpush1.msra.mxu0 0.0
        %4788 = vmatprep.subr.mxu0 0.0
        %4789 = vmatpush1.msra.mxu0 0.0
        %4790 = vmatprep.subr.mxu0 0.0
        %4791 = vmatpush1.msra.mxu0 0.0
        %4792 = vmatprep.subr.mxu0 0.0
        %4793 = vmatpush1.msra.mxu0 0.0
        %4794 = vmatprep.subr.mxu0 0.0
        %4795 = vmatpush1.msra.mxu0 0.0
        %4796 = vmatprep.subr.mxu0 0.0
        %4797 = vmatpush1.msra.mxu0 0.0
        %4798 = vmatprep.subr.mxu0 0.0
        %4799 = vmatpush1.msra.mxu0 0.0
        %4800 = vmatprep.subr.mxu0 0.0
        %4801 = vmatpush1.msra.mxu0 0.0
        %4802 = vmatprep.subr.mxu0 0.0
        %4803 = vmatpush1.msra.mxu0 0.0
        %4804 = vmatprep.subr.mxu0 0.0
        %4805 = vmatpush1.msra.mxu0 0.0
        %4806 = vmatprep.subr.mxu0 0.0
        %4807 = vmatpush1.msra.mxu0 0.0
        %4808 = vmatprep.subr.mxu0 0.0
        %4809 = vmatpush1.msra.mxu0 0.0
        %4810 = vmatprep.subr.mxu0 0.0
        %4811 = vmatpush1.msra.mxu0 0.0
        %4812 = vmatprep.subr.mxu0 0.0
        %4813 = vmatpush1.msra.mxu0 0.0
        %4814 = vmatprep.subr.mxu0 0.0
        %4815 = vmatpush1.msra.mxu0 0.0
        %4816 = vmatprep.mubr.f32.mxu0 0.0
        %4817 = vmatmul.mubr.f32.gmra.mrb[0].mxu0 %v3652
        %v4818 = vpop.f32.mrb[0].mxu0
        %v4819 = vadd.f32 0.0, %v4818
        %v4820 = vpop.f32.mrb[0].mxu0
        %4821 = vmatprep.mubr.f32.mxu0 0.0
        %4822 = vmatmul.mubr.f32.gmra.mrb[0].mxu0 %v3655
        %v4823 = vpop.f32.mrb[0].mxu0
        %v4824 = vadd.f32 0.0, %v4823
        %v4825 = vpop.f32.mrb[0].mxu0
        %4826 = vdwg.mxu0
        %s4827 = scalar_lea.vmem %s8, 192
        %v4828 = vld [vmem:[%s4827] sm:$0xff]
        %v4829 = vld [vmem:[%s4827 + $0x8] sm:$0xff]
        %v4830 = vld [vmem:[%s4827 + $0x10] sm:$0xff]
        %v4831 = vld [vmem:[%s4827 + $0x18] sm:$0xff]
        %v4833 = vsel %vm3650, %v4828, 0
        %v4836 = vsel %vm3650, %v4829, 0
        %v4839 = vsel %vm3650, %v4830, 0
        %v4842 = vsel %vm3650, %v4831, 0
        %4844 = vmatprep.subr.mxu0 0.0
        %4845 = vmatpush1.msra.mxu0 %v4819
        %4846 = vmatprep.subr.mxu0 0.0
        %4847 = vmatpush1.msra.mxu0 %v4824
        %4848 = vmatprep.subr.mxu0 0.0
        %4849 = vmatpush1.msra.mxu0 0.0
        %4850 = vmatprep.subr.mxu0 0.0
        %4851 = vmatpush1.msra.mxu0 0.0
        %4852 = vmatprep.subr.mxu0 0.0
        %4853 = vmatpush1.msra.mxu0 0.0
        %4854 = vmatprep.subr.mxu0 0.0
        %4855 = vmatpush1.msra.mxu0 0.0
        %4856 = vmatprep.subr.mxu0 0.0
        %4857 = vmatpush1.msra.mxu0 0.0
        %4858 = vmatprep.subr.mxu0 0.0
        %4859 = vmatpush1.msra.mxu0 0.0
        %4860 = vmatprep.subr.mxu0 0.0
        %4861 = vmatpush1.msra.mxu0 0.0
        %4862 = vmatprep.subr.mxu0 0.0
        %4863 = vmatpush1.msra.mxu0 0.0
        %4864 = vmatprep.subr.mxu0 0.0
        %4865 = vmatpush1.msra.mxu0 0.0
        %4866 = vmatprep.subr.mxu0 0.0
        %4867 = vmatpush1.msra.mxu0 0.0
        %4868 = vmatprep.subr.mxu0 0.0
        %4869 = vmatpush1.msra.mxu0 0.0
        %4870 = vmatprep.subr.mxu0 0.0
        %4871 = vmatpush1.msra.mxu0 0.0
        %4872 = vmatprep.subr.mxu0 0.0
        %4873 = vmatpush1.msra.mxu0 0.0
        %4874 = vmatprep.subr.mxu0 0.0
        %4875 = vmatpush1.msra.mxu0 0.0
        %4876 = vmatprep.subr.mxu0 0.0
        %4877 = vmatpush1.msra.mxu0 0.0
        %4878 = vmatprep.subr.mxu0 0.0
        %4879 = vmatpush1.msra.mxu0 0.0
        %4880 = vmatprep.subr.mxu0 0.0
        %4881 = vmatpush1.msra.mxu0 0.0
        %4882 = vmatprep.subr.mxu0 0.0
        %4883 = vmatpush1.msra.mxu0 0.0
        %4884 = vmatprep.subr.mxu0 0.0
        %4885 = vmatpush1.msra.mxu0 0.0
        %4886 = vmatprep.subr.mxu0 0.0
        %4887 = vmatpush1.msra.mxu0 0.0
        %4888 = vmatprep.subr.mxu0 0.0
        %4889 = vmatpush1.msra.mxu0 0.0
        %4890 = vmatprep.subr.mxu0 0.0
        %4891 = vmatpush1.msra.mxu0 0.0
        %4892 = vmatprep.subr.mxu0 0.0
        %4893 = vmatpush1.msra.mxu0 0.0
        %4894 = vmatprep.subr.mxu0 0.0
        %4895 = vmatpush1.msra.mxu0 0.0
        %4896 = vmatprep.subr.mxu0 0.0
        %4897 = vmatpush1.msra.mxu0 0.0
        %4898 = vmatprep.subr.mxu0 0.0
        %4899 = vmatpush1.msra.mxu0 0.0
        %4900 = vmatprep.subr.mxu0 0.0
        %4901 = vmatpush1.msra.mxu0 0.0
        %4902 = vmatprep.subr.mxu0 0.0
        %4903 = vmatpush1.msra.mxu0 0.0
        %4904 = vmatprep.subr.mxu0 0.0
        %4905 = vmatpush1.msra.mxu0 0.0
        %4906 = vmatprep.subr.mxu0 0.0
        %4907 = vmatpush1.msra.mxu0 0.0
        %4908 = vmatprep.mubr.f32.mxu0 0.0
        %4909 = vmatmul.mubr.f32.gmra.mrb[0].mxu0 %v4833
        %v4910 = vpop.f32.mrb[0].mxu0
        %v4911 = vadd.f32 0.0, %v4910
        %v4912 = vpop.f32.mrb[0].mxu0
        %4913 = vmatprep.mubr.f32.mxu0 0.0
        %4914 = vmatmul.mubr.f32.gmra.mrb[0].mxu0 %v4836
        %v4915 = vpop.f32.mrb[0].mxu0
        %v4916 = vadd.f32 0.0, %v4915
        %v4917 = vpop.f32.mrb[0].mxu0
        %4918 = vmatprep.mubr.f32.mxu0 0.0
        %4919 = vmatmul.mubr.f32.gmra.mrb[0].mxu0 %v4839
        %v4920 = vpop.f32.mrb[0].mxu0
        %v4921 = vadd.f32 0.0, %v4920
        %v4922 = vpop.f32.mrb[0].mxu0
        %4923 = vmatprep.mubr.f32.mxu0 0.0
        %4924 = vmatmul.mubr.f32.gmra.mrb[0].mxu0 %v4842
        %v4925 = vpop.f32.mrb[0].mxu0
        %v4926 = vadd.f32 0.0, %v4925
        %v4927 = vpop.f32.mrb[0].mxu0
        %4928 = vdwg.mxu0
        %v4929 = vadd.f32 %v4745, %v4911
        %v4930 = vadd.f32 %v4746, %v4916
        %v4931 = vadd.f32 %v4747, %v4921
        %v4932 = vadd.f32 %v4748, %v4926
        %s4933 = scalar_lea.vmem [#allocation6], 112
        %v4934 = vld [vmem:[%s4933] sm:$0xff]
        %v4935 = vld [vmem:[%s4933 + $0x8] sm:$0xff]
        %4936 = vmatprep.subr.mxu0 0.0
        %4937 = vmatpush1.msra.mxu0 %v4934
        %4938 = vmatprep.subr.mxu0 0.0
        %4939 = vmatpush1.msra.mxu0 %v4935
        %4940 = vmatprep.subr.mxu0 0.0
        %4941 = vmatpush1.msra.mxu0 0.0
        %4942 = vmatprep.subr.mxu0 0.0
        %4943 = vmatpush1.msra.mxu0 0.0
        %4944 = vmatprep.subr.mxu0 0.0
        %4945 = vmatpush1.msra.mxu0 0.0
        %4946 = vmatprep.subr.mxu0 0.0
        %4947 = vmatpush1.msra.mxu0 0.0
        %4948 = vmatprep.subr.mxu0 0.0
        %4949 = vmatpush1.msra.mxu0 0.0
        %4950 = vmatprep.subr.mxu0 0.0
        %4951 = vmatpush1.msra.mxu0 0.0
        %4952 = vmatprep.subr.mxu0 0.0
        %4953 = vmatpush1.msra.mxu0 0.0
        %4954 = vmatprep.subr.mxu0 0.0
        %4955 = vmatpush1.msra.mxu0 0.0
        %4956 = vmatprep.subr.mxu0 0.0
        %4957 = vmatpush1.msra.mxu0 0.0
        %4958 = vmatprep.subr.mxu0 0.0
        %4959 = vmatpush1.msra.mxu0 0.0
        %4960 = vmatprep.subr.mxu0 0.0
        %4961 = vmatpush1.msra.mxu0 0.0
        %4962 = vmatprep.subr.mxu0 0.0
        %4963 = vmatpush1.msra.mxu0 0.0
        %4964 = vmatprep.subr.mxu0 0.0
        %4965 = vmatpush1.msra.mxu0 0.0
        %4966 = vmatprep.subr.mxu0 0.0
        %4967 = vmatpush1.msra.mxu0 0.0
        %4968 = vmatprep.subr.mxu0 0.0
        %4969 = vmatpush1.msra.mxu0 0.0
        %4970 = vmatprep.subr.mxu0 0.0
        %4971 = vmatpush1.msra.mxu0 0.0
        %4972 = vmatprep.subr.mxu0 0.0
        %4973 = vmatpush1.msra.mxu0 0.0
        %4974 = vmatprep.subr.mxu0 0.0
        %4975 = vmatpush1.msra.mxu0 0.0
        %4976 = vmatprep.subr.mxu0 0.0
        %4977 = vmatpush1.msra.mxu0 0.0
        %4978 = vmatprep.subr.mxu0 0.0
        %4979 = vmatpush1.msra.mxu0 0.0
        %4980 = vmatprep.subr.mxu0 0.0
        %4981 = vmatpush1.msra.mxu0 0.0
        %4982 = vmatprep.subr.mxu0 0.0
        %4983 = vmatpush1.msra.mxu0 0.0
        %4984 = vmatprep.subr.mxu0 0.0
        %4985 = vmatpush1.msra.mxu0 0.0
        %4986 = vmatprep.subr.mxu0 0.0
        %4987 = vmatpush1.msra.mxu0 0.0
        %4988 = vmatprep.subr.mxu0 0.0
        %4989 = vmatpush1.msra.mxu0 0.0
        %4990 = vmatprep.subr.mxu0 0.0
        %4991 = vmatpush1.msra.mxu0 0.0
        %4992 = vmatprep.subr.mxu0 0.0
        %4993 = vmatpush1.msra.mxu0 0.0
        %4994 = vmatprep.subr.mxu0 0.0
        %4995 = vmatpush1.msra.mxu0 0.0
        %4996 = vmatprep.subr.mxu0 0.0
        %4997 = vmatpush1.msra.mxu0 0.0
        %4998 = vmatprep.subr.mxu0 0.0
        %4999 = vmatpush1.msra.mxu0 0.0
        %5000 = vmatprep.mubr.f32.mxu0 0.0
        %5001 = vmatmul.mubr.f32.gmra.mrb[0].mxu0 %v3652
        %v5002 = vpop.f32.mrb[0].mxu0
        %v5003 = vadd.f32 0.0, %v5002
        %v5004 = vpop.f32.mrb[0].mxu0
        %5005 = vmatprep.mubr.f32.mxu0 0.0
        %5006 = vmatmul.mubr.f32.gmra.mrb[0].mxu0 %v3655
        %v5007 = vpop.f32.mrb[0].mxu0
        %v5008 = vadd.f32 0.0, %v5007
        %v5009 = vpop.f32.mrb[0].mxu0
        %5010 = vdwg.mxu0
        %s5011 = scalar_lea.vmem %s8, 224
        %v5012 = vld [vmem:[%s5011] sm:$0xff]
        %v5013 = vld [vmem:[%s5011 + $0x8] sm:$0xff]
        %v5014 = vld [vmem:[%s5011 + $0x10] sm:$0xff]
        %v5015 = vld [vmem:[%s5011 + $0x18] sm:$0xff]
        %v5017 = vsel %vm3650, %v5012, 0
        %v5020 = vsel %vm3650, %v5013, 0
        %v5023 = vsel %vm3650, %v5014, 0
        %v5026 = vsel %vm3650, %v5015, 0
        %5028 = vmatprep.subr.mxu0 0.0
        %5029 = vmatpush1.msra.mxu0 %v5003
        %5030 = vmatprep.subr.mxu0 0.0
        %5031 = vmatpush1.msra.mxu0 %v5008
        %5032 = vmatprep.subr.mxu0 0.0
        %5033 = vmatpush1.msra.mxu0 0.0
        %5034 = vmatprep.subr.mxu0 0.0
        %5035 = vmatpush1.msra.mxu0 0.0
        %5036 = vmatprep.subr.mxu0 0.0
        %5037 = vmatpush1.msra.mxu0 0.0
        %5038 = vmatprep.subr.mxu0 0.0
        %5039 = vmatpush1.msra.mxu0 0.0
        %5040 = vmatprep.subr.mxu0 0.0
        %5041 = vmatpush1.msra.mxu0 0.0
        %5042 = vmatprep.subr.mxu0 0.0
        %5043 = vmatpush1.msra.mxu0 0.0
        %5044 = vmatprep.subr.mxu0 0.0
        %5045 = vmatpush1.msra.mxu0 0.0
        %5046 = vmatprep.subr.mxu0 0.0
        %5047 = vmatpush1.msra.mxu0 0.0
        %5048 = vmatprep.subr.mxu0 0.0
        %5049 = vmatpush1.msra.mxu0 0.0
        %5050 = vmatprep.subr.mxu0 0.0
        %5051 = vmatpush1.msra.mxu0 0.0
        %5052 = vmatprep.subr.mxu0 0.0
        %5053 = vmatpush1.msra.mxu0 0.0
        %5054 = vmatprep.subr.mxu0 0.0
        %5055 = vmatpush1.msra.mxu0 0.0
        %5056 = vmatprep.subr.mxu0 0.0
        %5057 = vmatpush1.msra.mxu0 0.0
        %5058 = vmatprep.subr.mxu0 0.0
        %5059 = vmatpush1.msra.mxu0 0.0
        %5060 = vmatprep.subr.mxu0 0.0
        %5061 = vmatpush1.msra.mxu0 0.0
        %5062 = vmatprep.subr.mxu0 0.0
        %5063 = vmatpush1.msra.mxu0 0.0
        %5064 = vmatprep.subr.mxu0 0.0
        %5065 = vmatpush1.msra.mxu0 0.0
        %5066 = vmatprep.subr.mxu0 0.0
        %5067 = vmatpush1.msra.mxu0 0.0
        %5068 = vmatprep.subr.mxu0 0.0
        %5069 = vmatpush1.msra.mxu0 0.0
        %5070 = vmatprep.subr.mxu0 0.0
        %5071 = vmatpush1.msra.mxu0 0.0
        %5072 = vmatprep.subr.mxu0 0.0
        %5073 = vmatpush1.msra.mxu0 0.0
        %5074 = vmatprep.subr.mxu0 0.0
        %5075 = vmatpush1.msra.mxu0 0.0
        %5076 = vmatprep.subr.mxu0 0.0
        %5077 = vmatpush1.msra.mxu0 0.0
        %5078 = vmatprep.subr.mxu0 0.0
        %5079 = vmatpush1.msra.mxu0 0.0
        %5080 = vmatprep.subr.mxu0 0.0
        %5081 = vmatpush1.msra.mxu0 0.0
        %5082 = vmatprep.subr.mxu0 0.0
        %5083 = vmatpush1.msra.mxu0 0.0
        %5084 = vmatprep.subr.mxu0 0.0
        %5085 = vmatpush1.msra.mxu0 0.0
        %5086 = vmatprep.subr.mxu0 0.0
        %5087 = vmatpush1.msra.mxu0 0.0
        %5088 = vmatprep.subr.mxu0 0.0
        %5089 = vmatpush1.msra.mxu0 0.0
        %5090 = vmatprep.subr.mxu0 0.0
        %5091 = vmatpush1.msra.mxu0 0.0
        %5092 = vmatprep.mubr.f32.mxu0 0.0
        %5093 = vmatmul.mubr.f32.gmra.mrb[0].mxu0 %v5017
        %v5094 = vpop.f32.mrb[0].mxu0
        %v5095 = vadd.f32 0.0, %v5094
        %v5096 = vpop.f32.mrb[0].mxu0
        %5097 = vmatprep.mubr.f32.mxu0 0.0
        %5098 = vmatmul.mubr.f32.gmra.mrb[0].mxu0 %v5020
        %v5099 = vpop.f32.mrb[0].mxu0
        %v5100 = vadd.f32 0.0, %v5099
        %v5101 = vpop.f32.mrb[0].mxu0
        %5102 = vmatprep.mubr.f32.mxu0 0.0
        %5103 = vmatmul.mubr.f32.gmra.mrb[0].mxu0 %v5023
        %v5104 = vpop.f32.mrb[0].mxu0
        %v5105 = vadd.f32 0.0, %v5104
        %v5106 = vpop.f32.mrb[0].mxu0
        %5107 = vmatprep.mubr.f32.mxu0 0.0
        %5108 = vmatmul.mubr.f32.gmra.mrb[0].mxu0 %v5026
        %v5109 = vpop.f32.mrb[0].mxu0
        %v5110 = vadd.f32 0.0, %v5109
        %v5111 = vpop.f32.mrb[0].mxu0
        %5112 = vdwg.mxu0
        %v5113 = vadd.f32 %v4929, %v5095
        %v5114 = vadd.f32 %v4930, %v5100
        %v5115 = vadd.f32 %v4931, %v5105
        %v5116 = vadd.f32 %v4932, %v5110
        %s5117 = scalar_lea.vmem [#allocation6], 128
        %v5118 = vld [vmem:[%s5117] sm:$0xff]
        %v5119 = vld [vmem:[%s5117 + $0x8] sm:$0xff]
        %5120 = vmatprep.subr.mxu0 0.0
        %5121 = vmatpush1.msra.mxu0 %v5118
        %5122 = vmatprep.subr.mxu0 0.0
        %5123 = vmatpush1.msra.mxu0 %v5119
        %5124 = vmatprep.subr.mxu0 0.0
        %5125 = vmatpush1.msra.mxu0 0.0
        %5126 = vmatprep.subr.mxu0 0.0
        %5127 = vmatpush1.msra.mxu0 0.0
        %5128 = vmatprep.subr.mxu0 0.0
        %5129 = vmatpush1.msra.mxu0 0.0
        %5130 = vmatprep.subr.mxu0 0.0
        %5131 = vmatpush1.msra.mxu0 0.0
        %5132 = vmatprep.subr.mxu0 0.0
        %5133 = vmatpush1.msra.mxu0 0.0
        %5134 = vmatprep.subr.mxu0 0.0
        %5135 = vmatpush1.msra.mxu0 0.0
        %5136 = vmatprep.subr.mxu0 0.0
        %5137 = vmatpush1.msra.mxu0 0.0
        %5138 = vmatprep.subr.mxu0 0.0
        %5139 = vmatpush1.msra.mxu0 0.0
        %5140 = vmatprep.subr.mxu0 0.0
        %5141 = vmatpush1.msra.mxu0 0.0
        %5142 = vmatprep.subr.mxu0 0.0
        %5143 = vmatpush1.msra.mxu0 0.0
        %5144 = vmatprep.subr.mxu0 0.0
        %5145 = vmatpush1.msra.mxu0 0.0
        %5146 = vmatprep.subr.mxu0 0.0
        %5147 = vmatpush1.msra.mxu0 0.0
        %5148 = vmatprep.subr.mxu0 0.0
        %5149 = vmatpush1.msra.mxu0 0.0
        %5150 = vmatprep.subr.mxu0 0.0
        %5151 = vmatpush1.msra.mxu0 0.0
        %5152 = vmatprep.subr.mxu0 0.0
        %5153 = vmatpush1.msra.mxu0 0.0
        %5154 = vmatprep.subr.mxu0 0.0
        %5155 = vmatpush1.msra.mxu0 0.0
        %5156 = vmatprep.subr.mxu0 0.0
        %5157 = vmatpush1.msra.mxu0 0.0
        %5158 = vmatprep.subr.mxu0 0.0
        %5159 = vmatpush1.msra.mxu0 0.0
        %5160 = vmatprep.subr.mxu0 0.0
        %5161 = vmatpush1.msra.mxu0 0.0
        %5162 = vmatprep.subr.mxu0 0.0
        %5163 = vmatpush1.msra.mxu0 0.0
        %5164 = vmatprep.subr.mxu0 0.0
        %5165 = vmatpush1.msra.mxu0 0.0
        %5166 = vmatprep.subr.mxu0 0.0
        %5167 = vmatpush1.msra.mxu0 0.0
        %5168 = vmatprep.subr.mxu0 0.0
        %5169 = vmatpush1.msra.mxu0 0.0
        %5170 = vmatprep.subr.mxu0 0.0
        %5171 = vmatpush1.msra.mxu0 0.0
        %5172 = vmatprep.subr.mxu0 0.0
        %5173 = vmatpush1.msra.mxu0 0.0
        %5174 = vmatprep.subr.mxu0 0.0
        %5175 = vmatpush1.msra.mxu0 0.0
        %5176 = vmatprep.subr.mxu0 0.0
        %5177 = vmatpush1.msra.mxu0 0.0
        %5178 = vmatprep.subr.mxu0 0.0
        %5179 = vmatpush1.msra.mxu0 0.0
        %5180 = vmatprep.subr.mxu0 0.0
        %5181 = vmatpush1.msra.mxu0 0.0
        %5182 = vmatprep.subr.mxu0 0.0
        %5183 = vmatpush1.msra.mxu0 0.0
        %5184 = vmatprep.mubr.f32.mxu0 0.0
        %5185 = vmatmul.mubr.f32.gmra.mrb[0].mxu0 %v3652
        %v5186 = vpop.f32.mrb[0].mxu0
        %v5187 = vadd.f32 0.0, %v5186
        %v5188 = vpop.f32.mrb[0].mxu0
        %5189 = vmatprep.mubr.f32.mxu0 0.0
        %5190 = vmatmul.mubr.f32.gmra.mrb[0].mxu0 %v3655
        %v5191 = vpop.f32.mrb[0].mxu0
        %v5192 = vadd.f32 0.0, %v5191
        %v5193 = vpop.f32.mrb[0].mxu0
        %5194 = vdwg.mxu0
        %s5195 = scalar_lea.vmem %s8, 256
        %v5196 = vld [vmem:[%s5195] sm:$0xff]
        %v5197 = vld [vmem:[%s5195 + $0x8] sm:$0xff]
        %v5198 = vld [vmem:[%s5195 + $0x10] sm:$0xff]
        %v5199 = vld [vmem:[%s5195 + $0x18] sm:$0xff]
        %v5201 = vsel %vm3650, %v5196, 0
        %v5204 = vsel %vm3650, %v5197, 0
        %v5207 = vsel %vm3650, %v5198, 0
        %v5210 = vsel %vm3650, %v5199, 0
        %5212 = vmatprep.subr.mxu0 0.0
        %5213 = vmatpush1.msra.mxu0 %v5187
        %5214 = vmatprep.subr.mxu0 0.0
        %5215 = vmatpush1.msra.mxu0 %v5192
        %5216 = vmatprep.subr.mxu0 0.0
        %5217 = vmatpush1.msra.mxu0 0.0
        %5218 = vmatprep.subr.mxu0 0.0
        %5219 = vmatpush1.msra.mxu0 0.0
        %5220 = vmatprep.subr.mxu0 0.0
        %5221 = vmatpush1.msra.mxu0 0.0
        %5222 = vmatprep.subr.mxu0 0.0
        %5223 = vmatpush1.msra.mxu0 0.0
        %5224 = vmatprep.subr.mxu0 0.0
        %5225 = vmatpush1.msra.mxu0 0.0
        %5226 = vmatprep.subr.mxu0 0.0
        %5227 = vmatpush1.msra.mxu0 0.0
        %5228 = vmatprep.subr.mxu0 0.0
        %5229 = vmatpush1.msra.mxu0 0.0
        %5230 = vmatprep.subr.mxu0 0.0
        %5231 = vmatpush1.msra.mxu0 0.0
        %5232 = vmatprep.subr.mxu0 0.0
        %5233 = vmatpush1.msra.mxu0 0.0
        %5234 = vmatprep.subr.mxu0 0.0
        %5235 = vmatpush1.msra.mxu0 0.0
        %5236 = vmatprep.subr.mxu0 0.0
        %5237 = vmatpush1.msra.mxu0 0.0
        %5238 = vmatprep.subr.mxu0 0.0
        %5239 = vmatpush1.msra.mxu0 0.0
        %5240 = vmatprep.subr.mxu0 0.0
        %5241 = vmatpush1.msra.mxu0 0.0
        %5242 = vmatprep.subr.mxu0 0.0
        %5243 = vmatpush1.msra.mxu0 0.0
        %5244 = vmatprep.subr.mxu0 0.0
        %5245 = vmatpush1.msra.mxu0 0.0
        %5246 = vmatprep.subr.mxu0 0.0
        %5247 = vmatpush1.msra.mxu0 0.0
        %5248 = vmatprep.subr.mxu0 0.0
        %5249 = vmatpush1.msra.mxu0 0.0
        %5250 = vmatprep.subr.mxu0 0.0
        %5251 = vmatpush1.msra.mxu0 0.0
        %5252 = vmatprep.subr.mxu0 0.0
        %5253 = vmatpush1.msra.mxu0 0.0
        %5254 = vmatprep.subr.mxu0 0.0
        %5255 = vmatpush1.msra.mxu0 0.0
        %5256 = vmatprep.subr.mxu0 0.0
        %5257 = vmatpush1.msra.mxu0 0.0
        %5258 = vmatprep.subr.mxu0 0.0
        %5259 = vmatpush1.msra.mxu0 0.0
        %5260 = vmatprep.subr.mxu0 0.0
        %5261 = vmatpush1.msra.mxu0 0.0
        %5262 = vmatprep.subr.mxu0 0.0
        %5263 = vmatpush1.msra.mxu0 0.0
        %5264 = vmatprep.subr.mxu0 0.0
        %5265 = vmatpush1.msra.mxu0 0.0
        %5266 = vmatprep.subr.mxu0 0.0
        %5267 = vmatpush1.msra.mxu0 0.0
        %5268 = vmatprep.subr.mxu0 0.0
        %5269 = vmatpush1.msra.mxu0 0.0
        %5270 = vmatprep.subr.mxu0 0.0
        %5271 = vmatpush1.msra.mxu0 0.0
        %5272 = vmatprep.subr.mxu0 0.0
        %5273 = vmatpush1.msra.mxu0 0.0
        %5274 = vmatprep.subr.mxu0 0.0
        %5275 = vmatpush1.msra.mxu0 0.0
        %5276 = vmatprep.mubr.f32.mxu0 0.0
        %5277 = vmatmul.mubr.f32.gmra.mrb[0].mxu0 %v5201
        %v5278 = vpop.f32.mrb[0].mxu0
        %v5279 = vadd.f32 0.0, %v5278
        %v5280 = vpop.f32.mrb[0].mxu0
        %5281 = vmatprep.mubr.f32.mxu0 0.0
        %5282 = vmatmul.mubr.f32.gmra.mrb[0].mxu0 %v5204
        %v5283 = vpop.f32.mrb[0].mxu0
        %v5284 = vadd.f32 0.0, %v5283
        %v5285 = vpop.f32.mrb[0].mxu0
        %5286 = vmatprep.mubr.f32.mxu0 0.0
        %5287 = vmatmul.mubr.f32.gmra.mrb[0].mxu0 %v5207
        %v5288 = vpop.f32.mrb[0].mxu0
        %v5289 = vadd.f32 0.0, %v5288
        %v5290 = vpop.f32.mrb[0].mxu0
        %5291 = vmatprep.mubr.f32.mxu0 0.0
        %5292 = vmatmul.mubr.f32.gmra.mrb[0].mxu0 %v5210
        %v5293 = vpop.f32.mrb[0].mxu0
        %v5294 = vadd.f32 0.0, %v5293
        %v5295 = vpop.f32.mrb[0].mxu0
        %5296 = vdwg.mxu0
        %v5297 = vadd.f32 %v5113, %v5279
        %v5298 = vadd.f32 %v5114, %v5284
        %v5299 = vadd.f32 %v5115, %v5289
        %v5300 = vadd.f32 %v5116, %v5294
        %v5301 = vld [vmem:[%s9] sm:$0xff]
        %v5302 = vld [vmem:[%s9 + $0x8] sm:$0xff]
        %v5303 = vld [vmem:[%s9 + $0x10] sm:$0xff]
        %v5304 = vld [vmem:[%s9 + $0x18] sm:$0xff]
        %5306 = vset.pattern.permute.xlu0 0
        %5307 = vperm.xlu0 %5306, %v5301
        %v5308 = vpop.permute.xlu0 %5307
        %5311 = vset.pattern.permute.xlu0 0
        %5312 = vperm.xlu0 %5311, %v5302
        %v5313 = vpop.permute.xlu0 %5312
        %5316 = vset.pattern.permute.xlu0 0
        %5317 = vperm.xlu0 %5316, %v5303
        %v5318 = vpop.permute.xlu0 %5317
        %5321 = vset.pattern.permute.xlu0 0
        %5322 = vperm.xlu0 %5321, %v5304
        %v5323 = vpop.permute.xlu0 %5322
        %v5325 = vadd.f32 %v5297, %v5308
        %v5326 = vadd.f32 %v5298, %v5313
        %v5327 = vadd.f32 %v5299, %v5318
        %v5328 = vadd.f32 %v5300, %v5323
        %v5329 = vmax.f32 %v5325, 0.0
        %v5330 = vmax.f32 %v5326, 0.0
        %v5331 = vmax.f32 %v5327, 0.0
        %v5332 = vmax.f32 %v5328, 0.0
        %v5333 = vld [vmem:[%s10] sm:$0x1f]
        %v5334 = vld [vmem:[%s11] sm:$0x1f]
        %5336 = vset.pattern.permute.xlu0 0
        %5337 = vperm.xlu0 %5336, %v5334
        %v5338 = vpop.permute.xlu0 %5337
        %vm5340 = vcmask 261120
        %v5342 = vsel %vm5340, %v5333, 0
        %5344 = vmatprep.subr.mxu0 0.0
        %5345 = vmatpush1.msra.mxu0 %v5329
        %5346 = vmatprep.subr.mxu0 0.0
        %5347 = vmatpush1.msra.mxu0 %v5330
        %5348 = vmatprep.subr.mxu0 0.0
        %5349 = vmatpush1.msra.mxu0 %v5331
        %5350 = vmatprep.subr.mxu0 0.0
        %5351 = vmatpush1.msra.mxu0 %v5332
        %5352 = vmatprep.subr.mxu0 0.0
        %5353 = vmatpush1.msra.mxu0 0.0
        %5354 = vmatprep.subr.mxu0 0.0
        %5355 = vmatpush1.msra.mxu0 0.0
        %5356 = vmatprep.subr.mxu0 0.0
        %5357 = vmatpush1.msra.mxu0 0.0
        %5358 = vmatprep.subr.mxu0 0.0
        %5359 = vmatpush1.msra.mxu0 0.0
        %5360 = vmatprep.subr.mxu0 0.0
        %5361 = vmatpush1.msra.mxu0 0.0
        %5362 = vmatprep.subr.mxu0 0.0
        %5363 = vmatpush1.msra.mxu0 0.0
        %5364 = vmatprep.subr.mxu0 0.0
        %5365 = vmatpush1.msra.mxu0 0.0
        %5366 = vmatprep.subr.mxu0 0.0
        %5367 = vmatpush1.msra.mxu0 0.0
        %5368 = vmatprep.subr.mxu0 0.0
        %5369 = vmatpush1.msra.mxu0 0.0
        %5370 = vmatprep.subr.mxu0 0.0
        %5371 = vmatpush1.msra.mxu0 0.0
        %5372 = vmatprep.subr.mxu0 0.0
        %5373 = vmatpush1.msra.mxu0 0.0
        %5374 = vmatprep.subr.mxu0 0.0
        %5375 = vmatpush1.msra.mxu0 0.0
        %5376 = vmatprep.subr.mxu0 0.0
        %5377 = vmatpush1.msra.mxu0 0.0
        %5378 = vmatprep.subr.mxu0 0.0
        %5379 = vmatpush1.msra.mxu0 0.0
        %5380 = vmatprep.subr.mxu0 0.0
        %5381 = vmatpush1.msra.mxu0 0.0
        %5382 = vmatprep.subr.mxu0 0.0
        %5383 = vmatpush1.msra.mxu0 0.0
        %5384 = vmatprep.subr.mxu0 0.0
        %5385 = vmatpush1.msra.mxu0 0.0
        %5386 = vmatprep.subr.mxu0 0.0
        %5387 = vmatpush1.msra.mxu0 0.0
        %5388 = vmatprep.subr.mxu0 0.0
        %5389 = vmatpush1.msra.mxu0 0.0
        %5390 = vmatprep.subr.mxu0 0.0
        %5391 = vmatpush1.msra.mxu0 0.0
        %5392 = vmatprep.subr.mxu0 0.0
        %5393 = vmatpush1.msra.mxu0 0.0
        %5394 = vmatprep.subr.mxu0 0.0
        %5395 = vmatpush1.msra.mxu0 0.0
        %5396 = vmatprep.subr.mxu0 0.0
        %5397 = vmatpush1.msra.mxu0 0.0
        %5398 = vmatprep.subr.mxu0 0.0
        %5399 = vmatpush1.msra.mxu0 0.0
        %5400 = vmatprep.subr.mxu0 0.0
        %5401 = vmatpush1.msra.mxu0 0.0
        %5402 = vmatprep.subr.mxu0 0.0
        %5403 = vmatpush1.msra.mxu0 0.0
        %5404 = vmatprep.subr.mxu0 0.0
        %5405 = vmatpush1.msra.mxu0 0.0
        %5406 = vmatprep.subr.mxu0 0.0
        %5407 = vmatpush1.msra.mxu0 0.0
        %5408 = vmatprep.mubr.f32.mxu0 0.0
        %5409 = vmatmul.mubr.f32.gmra.mrb[0].mxu0 %v5342
        %v5410 = vpop.f32.mrb[0].mxu0
        %v5411 = vadd.f32 %v5338, %v5410
        %v5412 = vpop.f32.mrb[0].mxu0
        %5413 = vdwg.mxu0
        %v5414 = vld [vmem:[#allocation7] sm:$0xff]
        %v5415 = vld [vmem:[#allocation7 + $0x8] sm:$0xff]
        %v5416 = vld [vmem:[#allocation7 + $0x10] sm:$0xff]
        %v5417 = vld [vmem:[#allocation7 + $0x18] sm:$0xff]
        %v5419 = vsel %vm3650, %v5411, 0
        %5421 = vmatprep.subr.mxu0 %v5415
        %5422 = vmatpush1.msra.mxu0 %v5414
        %5423 = vmatprep.subr.mxu0 %v5417
        %5424 = vmatpush1.msra.mxu0 %v5416
        %5425 = vmatprep.subr.mxu0 0.0
        %5426 = vmatpush1.msra.mxu0 0.0
        %5427 = vmatprep.subr.mxu0 0.0
        %5428 = vmatpush1.msra.mxu0 0.0
        %5429 = vmatprep.subr.mxu0 0.0
        %5430 = vmatpush1.msra.mxu0 0.0
        %5431 = vmatprep.subr.mxu0 0.0
        %5432 = vmatpush1.msra.mxu0 0.0
        %5433 = vmatprep.subr.mxu0 0.0
        %5434 = vmatpush1.msra.mxu0 0.0
        %5435 = vmatprep.subr.mxu0 0.0
        %5436 = vmatpush1.msra.mxu0 0.0
        %5437 = vmatprep.subr.mxu0 0.0
        %5438 = vmatpush1.msra.mxu0 0.0
        %5439 = vmatprep.subr.mxu0 0.0
        %5440 = vmatpush1.msra.mxu0 0.0
        %5441 = vmatprep.subr.mxu0 0.0
        %5442 = vmatpush1.msra.mxu0 0.0
        %5443 = vmatprep.subr.mxu0 0.0
        %5444 = vmatpush1.msra.mxu0 0.0
        %5445 = vmatprep.subr.mxu0 0.0
        %5446 = vmatpush1.msra.mxu0 0.0
        %5447 = vmatprep.subr.mxu0 0.0
        %5448 = vmatpush1.msra.mxu0 0.0
        %5449 = vmatprep.subr.mxu0 0.0
        %5450 = vmatpush1.msra.mxu0 0.0
        %5451 = vmatprep.subr.mxu0 0.0
        %5452 = vmatpush1.msra.mxu0 0.0
        %5453 = vmatprep.subr.mxu0 0.0
        %5454 = vmatpush1.msra.mxu0 0.0
        %5455 = vmatprep.subr.mxu0 0.0
        %5456 = vmatpush1.msra.mxu0 0.0
        %5457 = vmatprep.subr.mxu0 0.0
        %5458 = vmatpush1.msra.mxu0 0.0
        %5459 = vmatprep.subr.mxu0 0.0
        %5460 = vmatpush1.msra.mxu0 0.0
        %5461 = vmatprep.subr.mxu0 0.0
        %5462 = vmatpush1.msra.mxu0 0.0
        %5463 = vmatprep.subr.mxu0 0.0
        %5464 = vmatpush1.msra.mxu0 0.0
        %5465 = vmatprep.subr.mxu0 0.0
        %5466 = vmatpush1.msra.mxu0 0.0
        %5467 = vmatprep.subr.mxu0 0.0
        %5468 = vmatpush1.msra.mxu0 0.0
        %5469 = vmatprep.subr.mxu0 0.0
        %5470 = vmatpush1.msra.mxu0 0.0
        %5471 = vmatprep.subr.mxu0 0.0
        %5472 = vmatpush1.msra.mxu0 0.0
        %5473 = vmatprep.subr.mxu0 0.0
        %5474 = vmatpush1.msra.mxu0 0.0
        %5475 = vmatprep.subr.mxu0 0.0
        %5476 = vmatpush1.msra.mxu0 0.0
        %5477 = vmatprep.subr.mxu0 0.0
        %5478 = vmatpush1.msra.mxu0 0.0
        %5479 = vmatprep.subr.mxu0 0.0
        %5480 = vmatpush1.msra.mxu0 0.0
        %5481 = vmatprep.subr.mxu0 0.0
        %5482 = vmatpush1.msra.mxu0 0.0
        %5483 = vmatprep.subr.mxu0 0.0
        %5484 = vmatpush1.msra.mxu0 0.0
        %5485 = vmatprep.mubr.f32.mxu0 0.0
        %5486 = vmatmul.mubr.f32.gmra.mrb[0].mxu0 %v5419
        %v5487 = vpop.f32.mrb[0].mxu0
        %v5488 = vadd.f32 0.0, %v5487
        %v5489 = vpop.f32.mrb[0].mxu0
        %v5490 = vadd.f32 0.0, %v5489
        %5491 = vdwg.mxu0
        %5492 = vst [vmem:[%s499] sm:$0x1f] %v5488
        %5493 = vst [vmem:[%s499 + $0x8] sm:$0x1f] %v5490
        %p5494 = scmp.lt.s32.totalorder %s27, 1
        %s5495 = scalar_select %p5494, %s27, 1
        %s5496 = smul.addr %s5495, 2
        %s5497 = smul.addr %s5496, 8
        %s5498 = scalar_lea.vmem %s13, %s5497
        // Predicated region
        $region89: #{seg_model_forward.1} parent=71 // pred_check
          %p5499 = pneg %p323
        $region90: #{seg_model_forward.1} parent=71 // pred_check_branch
          %5501 = sbr.rel (%p5499) target = $region92
        $region91: #{seg_model_forward.1} parent=71 // pred_region
          _
        $region92: #{seg_model_forward.1} parent=71 // pred_fallthru
          _
      $region72: #{seg_model_forward.1} parent=5 // pred_fallthru
        _
      %p5502 = scmp.le.s32.totalorder 2, %s22
      // Predicated region
      $region93: #{seg_model_forward.1} parent=5 // pred_check
        %p5503 = pneg %p5502
      $region94: #{seg_model_forward.1} parent=5 // pred_check_branch
        %5505 = sbr.rel (%p5503) target = $region96
      $region95: #{seg_model_forward.1} parent=5 // pred_region
        %s5506 = ssub.s32 %s22, 2
        // Predicated region
        $region97: #{seg_model_forward.1} parent=95 // pred_check
          %p5507 = pneg %p329
        $region98: #{seg_model_forward.1} parent=95 // pred_check_branch
          %5509 = sbr.rel (%p5507) target = $region100
        $region99: #{seg_model_forward.1} parent=95 // pred_region
          %p5510 = scmp.lt.s32.totalorder %s28, 1
          %s5511 = scalar_select %p5510, %s28, 1
          %s5512 = smul.addr %s5511, 2
          %s5513 = smul.addr %s5512, 8
          %s5514 = scalar_lea.vmem %s13, %s5513
        $region100: #{seg_model_forward.1} parent=95 // pred_fallthru
          _
      $region96: #{seg_model_forward.1} parent=5 // pred_fallthru
        _
    $region6: #{seg_model_forward.1} parent=1 // loop_footer
      %s26 = sadd.s32 1, %s22
    $region7: #{seg_model_forward.1} parent=1 // loop_footer_branch
      %21 = sbr.rel target = $region3
    $region8: #{seg_model_forward.1} parent=1 // loop_exit
      _
    %5515 = vsyncpa [#allocation3], 1
    %s5516 = scalar_lea.sflag [#allocation3], 1
    %5517 = vsyncpa %s5516, 1
    %5518 = vsyncpa [#allocation5], 1
    %5519 = vsyncpa [#allocation8], 1

</llo_original>
